<compile_context>
chip_gen: v7x
topology: tpu7x:2x2x1
jax: 0.10.0
libtpu: 0.0.40
codegen_flags: <defaults>
</compile_context>

<pallas_src>
import jax
import jax.numpy as jnp
from jax.experimental import pallas as pl
from jax.experimental.pallas import tpu as pltpu

LAYER_DIMS = [(1024, 512), (512, 256), (256, 128), (128, 64), (64, 32), (32, 16)]
N_CLASSES = 3
LANE = 128          # minimum lane-dense width


# ----------------------------------------------------------------------------
# Fused Pallas kernel: per graph, 6x ( A_hat @ (H @ W) + b, ReLU ) -> sum-pool
# -> Linear.  One grid step == one graph; weights are VMEM-resident.
# ----------------------------------------------------------------------------
def fused_gcn_kernel(adj_ref, x_ref,
                     w1_ref, b1_ref, w2_ref, b2_ref, w3_ref, b3_ref,
                     w4_ref, b4_ref, w5_ref, b5_ref, w6_ref, b6_ref,
                     wc_ref, bc_ref, o_ref):
    adj = adj_ref[0]                              # (N, N)     bf16
    h = x_ref[0].astype(jnp.bfloat16)             # (N, 1024)  f32 -> bf16 in-kernel
    layers = ((w1_ref, b1_ref), (w2_ref, b2_ref), (w3_ref, b3_ref),
              (w4_ref, b4_ref), (w5_ref, b5_ref), (w6_ref, b6_ref))
    n_layers = len(layers)
    last_f32 = None
    for li, (w_ref, b_ref) in enumerate(layers):  # unrolled at trace time
        # Two MXU matmuls, f32 accumulation.
        xw = jnp.dot(h, w_ref[...], preferred_element_type=jnp.float32)
        hf = jnp.dot(adj, xw.astype(jnp.bfloat16),
                     preferred_element_type=jnp.float32)
        hf = hf + b_ref[...]                      # f32 bias (1, out_pad)
        if li < n_layers - 1:
            # TODO(synk): inner `model` structure is unspecified in the PyTorch
            # reference; ReLU is applied after conv1..conv5 only (not conv6).
            hf = jnp.maximum(hf, 0.0)
            h = hf.astype(jnp.bfloat16)           # bf16 feed to next MXU matmul
        else:
            last_f32 = hf                         # keep f32 accumulator for pool
    # global_mean_pool: 1/N is folded into wc, so a plain f32 sum suffices.
    pooled = jnp.sum(last_f32, axis=0, keepdims=True)            # (1, 128) f32
    logits = jnp.dot(pooled.astype(jnp.bfloat16), wc_ref[...],
                     preferred_element_type=jnp.float32)
    o_ref[0] = (logits + bc_ref[...]).astype(o_ref.dtype)        # (1, 128)


# ----------------------------------------------------------------------------
# Wrapper around the single pallas_call (grid over the graph batch)
# ----------------------------------------------------------------------------
def _resident_spec(shape):
    # Constant block index across the graph grid -> DMA'd once, VMEM-resident.
    return pl.BlockSpec(shape, lambda g: tuple(0 for _ in shape))


def _per_graph_spec(shape):
    # Leading (graph) axis follows the grid; remaining dims full-extent.
    return pl.BlockSpec((1,) + tuple(shape[1:]),
                        lambda g: (g,) + (0,) * (len(shape) - 1))


def gcn_forward_fused(adj_bf16, x, conv_params, cls_params):
    """Batched single-kernel forward.

    adj_bf16: (B, N, N) bf16   precomputed D^{-1/2}(A+I)D^{-1/2} per graph
    x:        (B, N, 1024) f32 node features (cast to bf16 inside the kernel)
    conv_params / cls_params:  from prepare_params() (lane-dense, bf16 W, f32 b)
    """
    B = adj_bf16.shape[0]
    args = [adj_bf16, x]
    in_specs = [_per_graph_spec(adj_bf16.shape), _per_graph_spec(x.shape)]
    for (w, b) in conv_params:
        args += [w, b]
        in_specs += [_resident_spec(w.shape), _resident_spec(b.shape)]
    wc, bc = cls_params
    args += [wc, bc]
    in_specs += [_resident_spec(wc.shape), _resident_spec(bc.shape)]

    out_pad = wc.shape[1]                          # 128 (lane-dense)
    out = pl.pallas_call(
        fused_gcn_kernel,
        out_shape=jax.ShapeDtypeStruct((B, 1, out_pad), jnp.float32),
        grid_spec=pltpu.PrefetchScalarGridSpec(
            num_scalar_prefetch=0,
            grid=(B,),
            in_specs=in_specs,
            out_specs=pl.BlockSpec((1, 1, out_pad), lambda g: (g, 0, 0)),
        ),
        compiler_params=pltpu.CompilerParams(
            dimension_semantics=("parallel",),     # v7x: 2 TCs split the batch
            vmem_limit_bytes=16 << 20,             # real footprint ~3-4 MiB
        ),
    )(*args)
    return out[:, 0, :N_CLASSES]                   # strip lane padding -> (B, 3)


# ----------------------------------------------------------------------------
# Parameter init + host-side preprocessing (hoisted out of the forward)
# ----------------------------------------------------------------------------
def init_params(key):
    params = {"conv": [], "cls": None}
    for (din, dout) in LAYER_DIMS:
        key, kw = jax.random.split(key)
        scale = jnp.sqrt(6.0 / (din + dout))       # glorot-style init
        w = jax.random.uniform(kw, (din, dout), jnp.float32, -scale, scale)
        b = jnp.zeros((dout,), jnp.float32)
        params["conv"].append((w, b))
    key, kw = jax.random.split(key)
    scale = jnp.sqrt(6.0 / (16 + N_CLASSES))
    wc = jax.random.uniform(kw, (16, N_CLASSES), jnp.float32, -scale, scale)
    bc = jnp.zeros((N_CLASSES,), jnp.float32)
    params["cls"] = (wc, bc)
    return params


def _pad2d(a, rows, cols):
    r, c = a.shape
    return jnp.pad(a, ((0, rows - r), (0, cols - c)))


def prepare_params(params, n_nodes):
    """Lane-dense padding (dims < 128 -> 128), bf16 weights, f32 biases, and
    the mean-pool 1/N folded into the classifier weight."""
    conv = []
    for (w, b) in params["conv"]:
        din, dout = w.shape
        dpi, dpo = max(din, LANE), max(dout, LANE)
        wp = _pad2d(w, dpi, dpo).astype(jnp.bfloat16)
        bp = _pad2d(b.reshape(1, dout), 1, dpo).astype(jnp.float32)
        conv.append((wp, bp))
    wc, bc = params["cls"]
    din, dout = wc.shape
    dpi, dpo = max(din, LANE), max(dout, LANE)
    wcp = _pad2d(wc / float(n_nodes), dpi, dpo).astype(jnp.bfloat16)
    bcp = _pad2d(bc.reshape(1, dout), 1, dpo).astype(jnp.float32)
    return conv, (wcp, bcp)


def build_normalized_adj(edge_index, n):
    """Dense D^{-1/2}(A+I)D^{-1/2} from edge_index [2, E] (unit weights).
    Duplicate edges sum, matching PyG's gcn_norm."""
    src, dst = edge_index[0], edge_index[1]
    adj = jnp.zeros((n, n), jnp.float32).at[dst, src].add(1.0)
    adj = adj + jnp.eye(n, dtype=jnp.float32)      # add self loops
    deg = adj.sum(axis=1)
    dinv = 1.0 / jnp.sqrt(deg)                     # deg >= 1 thanks to self loops
    return adj * dinv[:, None] * dinv[None, :]


# ----------------------------------------------------------------------------
if __name__ == "__main__":
    key = jax.random.PRNGKey(0)
    kx, kp = jax.random.split(key)

    B = 4                                          # graphs per batch (grid axis)
    N = 64                                         # nodes per graph
    x = jax.random.normal(kx, (B, N, 1024), jnp.float32)

    # Deterministic per-graph edge lists: undirected ring + graph-dependent
    # skip edges, both directions listed explicitly.
    idx = jnp.arange(N)
    adjs = []
    for b in range(B):
        nxt = (idx + 1) % N
        skp = (idx + 2 + b) % N
        src = jnp.concatenate([idx, nxt, idx, skp])
        dst = jnp.concatenate([nxt, idx, skp, idx])
        edge_index = jnp.stack([src, dst], axis=0).astype(jnp.int32)   # [2, 4N]
        adjs.append(build_normalized_adj(edge_index, N))
    adj_bf16 = jnp.stack(adjs).astype(jnp.bfloat16)                    # (B, N, N)

    params = init_params(kp)

    # Hoisted, once-per-graph / once-per-parameter-set preprocessing.
    # TODO(synk): PyTorch `batch` vector (ragged graphs) is modeled as one
    # fixed-size graph per grid step; global_mean_pool reduces each graph's
    # N nodes, matching batch semantics for equal-sized graphs.
    conv_p, cls_p = prepare_params(params, N)

    fwd = jax.jit(gcn_forward_fused)
    out = fwd(adj_bf16, x, conv_p, cls_p)          # (B, 3)
    jax.block_until_ready(out)

    assert out.shape == (B, N_CLASSES)
    assert bool(jnp.all(jnp.isfinite(out)))
    print("KERNEL_OK")
</pallas_src>

<mosaic_0001>
module attributes {stable_mosaic.version = 11 : i64} {
  func.func @fused_gcn_kernel(%arg0: i32, %arg1: memref<1x64x64xbf16, #tpu.memory_space<vmem>>, %arg2: memref<1x64x1024xf32, #tpu.memory_space<vmem>>, %arg3: memref<1024x512xbf16, #tpu.memory_space<vmem>>, %arg4: memref<1x512xf32, #tpu.memory_space<vmem>>, %arg5: memref<512x256xbf16, #tpu.memory_space<vmem>>, %arg6: memref<1x256xf32, #tpu.memory_space<vmem>>, %arg7: memref<256x128xbf16, #tpu.memory_space<vmem>>, %arg8: memref<1x128xf32, #tpu.memory_space<vmem>>, %arg9: memref<128x128xbf16, #tpu.memory_space<vmem>>, %arg10: memref<1x128xf32, #tpu.memory_space<vmem>>, %arg11: memref<128x128xbf16, #tpu.memory_space<vmem>>, %arg12: memref<1x128xf32, #tpu.memory_space<vmem>>, %arg13: memref<128x128xbf16, #tpu.memory_space<vmem>>, %arg14: memref<1x128xf32, #tpu.memory_space<vmem>>, %arg15: memref<128x128xbf16, #tpu.memory_space<vmem>>, %arg16: memref<1x128xf32, #tpu.memory_space<vmem>>, %arg17: memref<1x1x128xf32, #tpu.memory_space<vmem>>) attributes {dimension_semantics = [#tpu.dimension_semantics<parallel>], iteration_bounds = array<i64: 4>, scalar_prefetch = 0 : i64, scratch_operands = 0 : i64, tpu.core_type = #tpu.core_type<tc>, window_params = [{transform_indices = @transform_0, window_bounds = array<i64: 1, 64, 64>}, {transform_indices = @transform_1, window_bounds = array<i64: 1, 64, 1024>}, {pipeline_mode = #tpu.pipeline_mode<synchronous>, transform_indices = @transform_2, window_bounds = array<i64: 1024, 512>}, {pipeline_mode = #tpu.pipeline_mode<synchronous>, transform_indices = @transform_3, window_bounds = array<i64: 1, 512>}, {pipeline_mode = #tpu.pipeline_mode<synchronous>, transform_indices = @transform_4, window_bounds = array<i64: 512, 256>}, {pipeline_mode = #tpu.pipeline_mode<synchronous>, transform_indices = @transform_5, window_bounds = array<i64: 1, 256>}, {pipeline_mode = #tpu.pipeline_mode<synchronous>, transform_indices = @transform_6, window_bounds = array<i64: 256, 128>}, {pipeline_mode = #tpu.pipeline_mode<synchronous>, transform_indices = @transform_7, window_bounds = array<i64: 1, 128>}, {pipeline_mode = #tpu.pipeline_mode<synchronous>, transform_indices = @transform_8, window_bounds = array<i64: 128, 128>}, {pipeline_mode = #tpu.pipeline_mode<synchronous>, transform_indices = @transform_9, window_bounds = array<i64: 1, 128>}, {pipeline_mode = #tpu.pipeline_mode<synchronous>, transform_indices = @transform_10, window_bounds = array<i64: 128, 128>}, {pipeline_mode = #tpu.pipeline_mode<synchronous>, transform_indices = @transform_11, window_bounds = array<i64: 1, 128>}, {pipeline_mode = #tpu.pipeline_mode<synchronous>, transform_indices = @transform_12, window_bounds = array<i64: 128, 128>}, {pipeline_mode = #tpu.pipeline_mode<synchronous>, transform_indices = @transform_13, window_bounds = array<i64: 1, 128>}, {pipeline_mode = #tpu.pipeline_mode<synchronous>, transform_indices = @transform_14, window_bounds = array<i64: 128, 128>}, {pipeline_mode = #tpu.pipeline_mode<synchronous>, transform_indices = @transform_15, window_bounds = array<i64: 1, 128>}, {transform_indices = @transform_16, window_bounds = array<i64: 1, 1, 128>}]} {
    %c0 = arith.constant 0 : index
    %c0_0 = arith.constant 0 : index
    %c0_1 = arith.constant 0 : index
    %0 = vector.load %arg1[%c0, %c0_0, %c0_1] : memref<1x64x64xbf16, #tpu.memory_space<vmem>>, vector<1x64x64xbf16>
    %1 = vector.shape_cast %0 : vector<1x64x64xbf16> to vector<64x64xbf16>
    %c0_2 = arith.constant 0 : index
    %c0_3 = arith.constant 0 : index
    %c0_4 = arith.constant 0 : index
    %2 = vector.load %arg2[%c0_2, %c0_3, %c0_4] : memref<1x64x1024xf32, #tpu.memory_space<vmem>>, vector<1x64x1024xf32>
    %3 = vector.shape_cast %2 : vector<1x64x1024xf32> to vector<64x1024xf32>
    %4 = arith.truncf %3 : vector<64x1024xf32> to vector<64x1024xbf16>
    %c0_5 = arith.constant 0 : index
    %c0_6 = arith.constant 0 : index
    %5 = vector.load %arg3[%c0_5, %c0_6] : memref<1024x512xbf16, #tpu.memory_space<vmem>>, vector<1024x512xbf16>
    %cst = arith.constant dense<0.000000e+00> : vector<64x512xf32>
    %6 = tpu.matmul %4, %5, %cst {dimension_numbers = #tpu.dot_dimension_numbers<[1], [0], [0], [1], [0, 0, 1, 1], [], []>} : vector<64x1024xbf16>, vector<1024x512xbf16>, vector<64x512xf32> -> vector<64x512xf32>
    %7 = arith.truncf %6 : vector<64x512xf32> to vector<64x512xbf16>
    %cst_7 = arith.constant dense<0.000000e+00> : vector<64x512xf32>
    %8 = tpu.matmul %1, %7, %cst_7 {dimension_numbers = #tpu.dot_dimension_numbers<[1], [0], [0], [1], [0, 0, 1, 1], [], []>} : vector<64x64xbf16>, vector<64x512xbf16>, vector<64x512xf32> -> vector<64x512xf32>
    %c0_8 = arith.constant 0 : index
    %c0_9 = arith.constant 0 : index
    %9 = vector.load %arg4[%c0_8, %c0_9] : memref<1x512xf32, #tpu.memory_space<vmem>>, vector<1x512xf32>
    %10 = vector.broadcast %9 : vector<1x512xf32> to vector<64x512xf32>
    %11 = arith.addf %8, %10 : vector<64x512xf32>
    %cst_10 = arith.constant 0.000000e+00 : f32
    %12 = vector.broadcast %cst_10 : f32 to vector<64x512xf32>
    %13 = arith.maximumf %11, %12 : vector<64x512xf32>
    %14 = arith.truncf %13 : vector<64x512xf32> to vector<64x512xbf16>
    %c0_11 = arith.constant 0 : index
    %c0_12 = arith.constant 0 : index
    %15 = vector.load %arg5[%c0_11, %c0_12] : memref<512x256xbf16, #tpu.memory_space<vmem>>, vector<512x256xbf16>
    %cst_13 = arith.constant dense<0.000000e+00> : vector<64x256xf32>
    %16 = tpu.matmul %14, %15, %cst_13 {dimension_numbers = #tpu.dot_dimension_numbers<[1], [0], [0], [1], [0, 0, 1, 1], [], []>} : vector<64x512xbf16>, vector<512x256xbf16>, vector<64x256xf32> -> vector<64x256xf32>
    %17 = arith.truncf %16 : vector<64x256xf32> to vector<64x256xbf16>
    %cst_14 = arith.constant dense<0.000000e+00> : vector<64x256xf32>
    %18 = tpu.matmul %1, %17, %cst_14 {dimension_numbers = #tpu.dot_dimension_numbers<[1], [0], [0], [1], [0, 0, 1, 1], [], []>} : vector<64x64xbf16>, vector<64x256xbf16>, vector<64x256xf32> -> vector<64x256xf32>
    %c0_15 = arith.constant 0 : index
    %c0_16 = arith.constant 0 : index
    %19 = vector.load %arg6[%c0_15, %c0_16] : memref<1x256xf32, #tpu.memory_space<vmem>>, vector<1x256xf32>
    %20 = vector.broadcast %19 : vector<1x256xf32> to vector<64x256xf32>
    %21 = arith.addf %18, %20 : vector<64x256xf32>
    %cst_17 = arith.constant 0.000000e+00 : f32
    %22 = vector.broadcast %cst_17 : f32 to vector<64x256xf32>
    %23 = arith.maximumf %21, %22 : vector<64x256xf32>
    %24 = arith.truncf %23 : vector<64x256xf32> to vector<64x256xbf16>
    %c0_18 = arith.constant 0 : index
    %c0_19 = arith.constant 0 : index
    %25 = vector.load %arg7[%c0_18, %c0_19] : memref<256x128xbf16, #tpu.memory_space<vmem>>, vector<256x128xbf16>
    %cst_20 = arith.constant dense<0.000000e+00> : vector<64x128xf32>
    %26 = tpu.matmul %24, %25, %cst_20 {dimension_numbers = #tpu.dot_dimension_numbers<[1], [0], [0], [1], [0, 0, 1, 1], [], []>} : vector<64x256xbf16>, vector<256x128xbf16>, vector<64x128xf32> -> vector<64x128xf32>
    %27 = arith.truncf %26 : vector<64x128xf32> to vector<64x128xbf16>
    %cst_21 = arith.constant dense<0.000000e+00> : vector<64x128xf32>
    %28 = tpu.matmul %1, %27, %cst_21 {dimension_numbers = #tpu.dot_dimension_numbers<[1], [0], [0], [1], [0, 0, 1, 1], [], []>} : vector<64x64xbf16>, vector<64x128xbf16>, vector<64x128xf32> -> vector<64x128xf32>
    %c0_22 = arith.constant 0 : index
    %c0_23 = arith.constant 0 : index
    %29 = vector.load %arg8[%c0_22, %c0_23] : memref<1x128xf32, #tpu.memory_space<vmem>>, vector<1x128xf32>
    %30 = vector.broadcast %29 : vector<1x128xf32> to vector<64x128xf32>
    %31 = arith.addf %28, %30 : vector<64x128xf32>
    %cst_24 = arith.constant 0.000000e+00 : f32
    %32 = vector.broadcast %cst_24 : f32 to vector<64x128xf32>
    %33 = arith.maximumf %31, %32 : vector<64x128xf32>
    %34 = arith.truncf %33 : vector<64x128xf32> to vector<64x128xbf16>
    %c0_25 = arith.constant 0 : index
    %c0_26 = arith.constant 0 : index
    %35 = vector.load %arg9[%c0_25, %c0_26] : memref<128x128xbf16, #tpu.memory_space<vmem>>, vector<128x128xbf16>
    %cst_27 = arith.constant dense<0.000000e+00> : vector<64x128xf32>
    %36 = tpu.matmul %34, %35, %cst_27 {dimension_numbers = #tpu.dot_dimension_numbers<[1], [0], [0], [1], [0, 0, 1, 1], [], []>} : vector<64x128xbf16>, vector<128x128xbf16>, vector<64x128xf32> -> vector<64x128xf32>
    %37 = arith.truncf %36 : vector<64x128xf32> to vector<64x128xbf16>
    %cst_28 = arith.constant dense<0.000000e+00> : vector<64x128xf32>
    %38 = tpu.matmul %1, %37, %cst_28 {dimension_numbers = #tpu.dot_dimension_numbers<[1], [0], [0], [1], [0, 0, 1, 1], [], []>} : vector<64x64xbf16>, vector<64x128xbf16>, vector<64x128xf32> -> vector<64x128xf32>
    %c0_29 = arith.constant 0 : index
    %c0_30 = arith.constant 0 : index
    %39 = vector.load %arg10[%c0_29, %c0_30] : memref<1x128xf32, #tpu.memory_space<vmem>>, vector<1x128xf32>
    %40 = vector.broadcast %39 : vector<1x128xf32> to vector<64x128xf32>
    %41 = arith.addf %38, %40 : vector<64x128xf32>
    %cst_31 = arith.constant 0.000000e+00 : f32
    %42 = vector.broadcast %cst_31 : f32 to vector<64x128xf32>
    %43 = arith.maximumf %41, %42 : vector<64x128xf32>
    %44 = arith.truncf %43 : vector<64x128xf32> to vector<64x128xbf16>
    %c0_32 = arith.constant 0 : index
    %c0_33 = arith.constant 0 : index
    %45 = vector.load %arg11[%c0_32, %c0_33] : memref<128x128xbf16, #tpu.memory_space<vmem>>, vector<128x128xbf16>
    %cst_34 = arith.constant dense<0.000000e+00> : vector<64x128xf32>
    %46 = tpu.matmul %44, %45, %cst_34 {dimension_numbers = #tpu.dot_dimension_numbers<[1], [0], [0], [1], [0, 0, 1, 1], [], []>} : vector<64x128xbf16>, vector<128x128xbf16>, vector<64x128xf32> -> vector<64x128xf32>
    %47 = arith.truncf %46 : vector<64x128xf32> to vector<64x128xbf16>
    %cst_35 = arith.constant dense<0.000000e+00> : vector<64x128xf32>
    %48 = tpu.matmul %1, %47, %cst_35 {dimension_numbers = #tpu.dot_dimension_numbers<[1], [0], [0], [1], [0, 0, 1, 1], [], []>} : vector<64x64xbf16>, vector<64x128xbf16>, vector<64x128xf32> -> vector<64x128xf32>
    %c0_36 = arith.constant 0 : index
    %c0_37 = arith.constant 0 : index
    %49 = vector.load %arg12[%c0_36, %c0_37] : memref<1x128xf32, #tpu.memory_space<vmem>>, vector<1x128xf32>
    %50 = vector.broadcast %49 : vector<1x128xf32> to vector<64x128xf32>
    %51 = arith.addf %48, %50 : vector<64x128xf32>
    %cst_38 = arith.constant 0.000000e+00 : f32
    %52 = vector.broadcast %cst_38 : f32 to vector<64x128xf32>
    %53 = arith.maximumf %51, %52 : vector<64x128xf32>
    %54 = arith.truncf %53 : vector<64x128xf32> to vector<64x128xbf16>
    %c0_39 = arith.constant 0 : index
    %c0_40 = arith.constant 0 : index
    %55 = vector.load %arg13[%c0_39, %c0_40] : memref<128x128xbf16, #tpu.memory_space<vmem>>, vector<128x128xbf16>
    %cst_41 = arith.constant dense<0.000000e+00> : vector<64x128xf32>
    %56 = tpu.matmul %54, %55, %cst_41 {dimension_numbers = #tpu.dot_dimension_numbers<[1], [0], [0], [1], [0, 0, 1, 1], [], []>} : vector<64x128xbf16>, vector<128x128xbf16>, vector<64x128xf32> -> vector<64x128xf32>
    %57 = arith.truncf %56 : vector<64x128xf32> to vector<64x128xbf16>
    %cst_42 = arith.constant dense<0.000000e+00> : vector<64x128xf32>
    %58 = tpu.matmul %1, %57, %cst_42 {dimension_numbers = #tpu.dot_dimension_numbers<[1], [0], [0], [1], [0, 0, 1, 1], [], []>} : vector<64x64xbf16>, vector<64x128xbf16>, vector<64x128xf32> -> vector<64x128xf32>
    %c0_43 = arith.constant 0 : index
    %c0_44 = arith.constant 0 : index
    %59 = vector.load %arg14[%c0_43, %c0_44] : memref<1x128xf32, #tpu.memory_space<vmem>>, vector<1x128xf32>
    %60 = vector.broadcast %59 : vector<1x128xf32> to vector<64x128xf32>
    %61 = arith.addf %58, %60 : vector<64x128xf32>
    %cst_45 = arith.constant dense<0.000000e+00> : vector<128xf32>
    %62 = vector.multi_reduction <add>, %61, %cst_45 [0] : vector<64x128xf32> to vector<128xf32>
    %63 = vector.shape_cast %62 : vector<128xf32> to vector<1x128xf32>
    %64 = arith.truncf %63 : vector<1x128xf32> to vector<1x128xbf16>
    %c0_46 = arith.constant 0 : index
    %c0_47 = arith.constant 0 : index
    %65 = vector.load %arg15[%c0_46, %c0_47] : memref<128x128xbf16, #tpu.memory_space<vmem>>, vector<128x128xbf16>
    %cst_48 = arith.constant dense<0.000000e+00> : vector<1x128xf32>
    %66 = tpu.matmul %64, %65, %cst_48 {dimension_numbers = #tpu.dot_dimension_numbers<[1], [0], [0], [1], [0, 0, 1, 1], [], []>} : vector<1x128xbf16>, vector<128x128xbf16>, vector<1x128xf32> -> vector<1x128xf32>
    %c0_49 = arith.constant 0 : index
    %c0_50 = arith.constant 0 : index
    %67 = vector.load %arg16[%c0_49, %c0_50] : memref<1x128xf32, #tpu.memory_space<vmem>>, vector<1x128xf32>
    %68 = arith.addf %66, %67 : vector<1x128xf32>
    %c0_51 = arith.constant 0 : index
    %c0_52 = arith.constant 0 : index
    %c0_53 = arith.constant 0 : index
    %69 = vector.load %arg17[%c0_51, %c0_52, %c0_53] : memref<1x1x128xf32, #tpu.memory_space<vmem>>, vector<1x1x128xf32>
    %70 = vector.shape_cast %69 : vector<1x1x128xf32> to vector<1x128xf32>
    %71 = vector.shape_cast %68 : vector<1x128xf32> to vector<1x1x128xf32>
    tpu.vector_store %arg17[%c0_51, %c0_52, %c0_53], %71 {strides = array<i32>} : memref<1x1x128xf32, #tpu.memory_space<vmem>>, vector<1x1x128xf32>,
    return
  }
  func.func @transform_0(%arg0: i32) -> (i32, i32, i32) {
    %c0_i32 = arith.constant 0 : i32
    %c0_i32_0 = arith.constant 0 : i32
    %c0_i32_1 = arith.constant 0 : i32
    return %arg0, %c0_i32, %c0_i32_0 : i32, i32, i32
  }
  func.func @transform_1(%arg0: i32) -> (i32, i32, i32) {
    %c0_i32 = arith.constant 0 : i32
    %c0_i32_0 = arith.constant 0 : i32
    %c0_i32_1 = arith.constant 0 : i32
    return %arg0, %c0_i32, %c0_i32_0 : i32, i32, i32
  }
  func.func @transform_2(%arg0: i32) -> (i32, i32) {
    %c0_i32 = arith.constant 0 : i32
    %c0_i32_0 = arith.constant 0 : i32
    %c0_i32_1 = arith.constant 0 : i32
    return %c0_i32, %c0_i32_0 : i32, i32
  }
  func.func @transform_3(%arg0: i32) -> (i32, i32) {
    %c0_i32 = arith.constant 0 : i32
    %c0_i32_0 = arith.constant 0 : i32
    %c0_i32_1 = arith.constant 0 : i32
    return %c0_i32, %c0_i32_0 : i32, i32
  }
  func.func @transform_4(%arg0: i32) -> (i32, i32) {
    %c0_i32 = arith.constant 0 : i32
    %c0_i32_0 = arith.constant 0 : i32
    %c0_i32_1 = arith.constant 0 : i32
    return %c0_i32, %c0_i32_0 : i32, i32
  }
  func.func @transform_5(%arg0: i32) -> (i32, i32) {
    %c0_i32 = arith.constant 0 : i32
    %c0_i32_0 = arith.constant 0 : i32
    %c0_i32_1 = arith.constant 0 : i32
    return %c0_i32, %c0_i32_0 : i32, i32
  }
  func.func @transform_6(%arg0: i32) -> (i32, i32) {
    %c0_i32 = arith.constant 0 : i32
    %c0_i32_0 = arith.constant 0 : i32
    %c0_i32_1 = arith.constant 0 : i32
    return %c0_i32, %c0_i32_0 : i32, i32
  }
  func.func @transform_7(%arg0: i32) -> (i32, i32) {
    %c0_i32 = arith.constant 0 : i32
    %c0_i32_0 = arith.constant 0 : i32
    %c0_i32_1 = arith.constant 0 : i32
    return %c0_i32, %c0_i32_0 : i32, i32
  }
  func.func @transform_8(%arg0: i32) -> (i32, i32) {
    %c0_i32 = arith.constant 0 : i32
    %c0_i32_0 = arith.constant 0 : i32
    %c0_i32_1 = arith.constant 0 : i32
    return %c0_i32, %c0_i32_0 : i32, i32
  }
  func.func @transform_9(%arg0: i32) -> (i32, i32) {
    %c0_i32 = arith.constant 0 : i32
    %c0_i32_0 = arith.constant 0 : i32
    %c0_i32_1 = arith.constant 0 : i32
    return %c0_i32, %c0_i32_0 : i32, i32
  }
  func.func @transform_10(%arg0: i32) -> (i32, i32) {
    %c0_i32 = arith.constant 0 : i32
    %c0_i32_0 = arith.constant 0 : i32
    %c0_i32_1 = arith.constant 0 : i32
    return %c0_i32, %c0_i32_0 : i32, i32
  }
  func.func @transform_11(%arg0: i32) -> (i32, i32) {
    %c0_i32 = arith.constant 0 : i32
    %c0_i32_0 = arith.constant 0 : i32
    %c0_i32_1 = arith.constant 0 : i32
    return %c0_i32, %c0_i32_0 : i32, i32
  }
  func.func @transform_12(%arg0: i32) -> (i32, i32) {
    %c0_i32 = arith.constant 0 : i32
    %c0_i32_0 = arith.constant 0 : i32
    %c0_i32_1 = arith.constant 0 : i32
    return %c0_i32, %c0_i32_0 : i32, i32
  }
  func.func @transform_13(%arg0: i32) -> (i32, i32) {
    %c0_i32 = arith.constant 0 : i32
    %c0_i32_0 = arith.constant 0 : i32
    %c0_i32_1 = arith.constant 0 : i32
    return %c0_i32, %c0_i32_0 : i32, i32
  }
  func.func @transform_14(%arg0: i32) -> (i32, i32) {
    %c0_i32 = arith.constant 0 : i32
    %c0_i32_0 = arith.constant 0 : i32
    %c0_i32_1 = arith.constant 0 : i32
    return %c0_i32, %c0_i32_0 : i32, i32
  }
  func.func @transform_15(%arg0: i32) -> (i32, i32) {
    %c0_i32 = arith.constant 0 : i32
    %c0_i32_0 = arith.constant 0 : i32
    %c0_i32_1 = arith.constant 0 : i32
    return %c0_i32, %c0_i32_0 : i32, i32
  }
  func.func @transform_16(%arg0: i32) -> (i32, i32, i32) {
    %c0_i32 = arith.constant 0 : i32
    %c0_i32_0 = arith.constant 0 : i32
    %c0_i32_1 = arith.constant 0 : i32
    return %arg0, %c0_i32, %c0_i32_0 : i32, i32, i32
  }
}

</mosaic_0001>

<llo_original>
// kernel: gcn_forward_fused.1
$region0: #{gcn_forward_fused.1}
  #allocation0 [shape = 'u32[]', space=smem, size = 0x4, offset = 0x4, fixed_abs, tag = 'smem constant byte address 0x4 - core index']
  #allocation1 [shape = 'u32[144,128]{1,0:T(1,128)}', space=vmem, size = 0x12000, scoped, tag = 'internal scratch']
  %s0 = inlined_call_operand.hbm [shape: bf16[4,64,64], index: 0, kind: input, shape index: {}]
  %s1 = inlined_call_operand.hbm [shape: f32[4,64,1024], index: 1, kind: input, shape index: {}]
  %s2 = inlined_call_operand.hbm [shape: bf16[1024,512], index: 2, kind: input, shape index: {}]
  %s3 = inlined_call_operand.vmem [shape: f32[1,512], index: 3, kind: input, shape index: {}]
  %s4 = inlined_call_operand.hbm [shape: bf16[512,256], index: 4, kind: input, shape index: {}]
  %s5 = inlined_call_operand.vmem [shape: f32[1,256], index: 5, kind: input, shape index: {}]
  %s6 = inlined_call_operand.hbm [shape: bf16[256,128], index: 6, kind: input, shape index: {}]
  %s7 = inlined_call_operand.vmem [shape: f32[1,128], index: 7, kind: input, shape index: {}]
  %s8 = inlined_call_operand.hbm [shape: bf16[128,128], index: 8, kind: input, shape index: {}]
  %s9 = inlined_call_operand.vmem [shape: f32[1,128], index: 9, kind: input, shape index: {}]
  %s10 = inlined_call_operand.hbm [shape: bf16[128,128], index: 10, kind: input, shape index: {}]
  %s11 = inlined_call_operand.vmem [shape: f32[1,128], index: 11, kind: input, shape index: {}]
  %s12 = inlined_call_operand.hbm [shape: bf16[128,128], index: 12, kind: input, shape index: {}]
  %s13 = inlined_call_operand.vmem [shape: f32[1,128], index: 13, kind: input, shape index: {}]
  %s14 = inlined_call_operand.hbm [shape: bf16[128,128], index: 14, kind: input, shape index: {}]
  %s15 = inlined_call_operand.vmem [shape: f32[1,128], index: 15, kind: input, shape index: {}]
  %s16 = inlined_call_operand.hbm [shape: f32[4,1,128], index: 16, kind: output, shape index: {}]
  %s17 = sld [smem:[#allocation0]]
  $region133: #{gcn_forward_fused.1} parent=0
    _
  %s19 = ssub.s32 1, %s17
  %s20 = scalar_select 0, %s19, %s17
  $region1: #{gcn_forward_fused.1} parent=0
    #allocation2 [shape = 'u8[32768]{0}', space=vmem, size = 0x8000, scoped, tag = 'input window, operand 0']
    #allocation3 [shape = 's32[2]{0}', space=sflag, size = 0x8, scoped, tag = 'scoped memory for gcn_forward_fused.1']
    #allocation4 [shape = 's32[2]{0}', space=sflag, size = 0x8, scoped, tag = 'scoped memory for gcn_forward_fused.1']
    #allocation5 [shape = 'u8[524288]{0}', space=vmem, size = 0x80000, scoped, tag = 'input window, operand 1']
    #allocation6 [shape = 's32[2]{0}', space=sflag, size = 0x8, scoped, tag = 'scoped memory for gcn_forward_fused.1']
    #allocation7 [shape = 'u8[1048576]{0}', space=vmem, size = 0x100000, scoped, tag = 'input window, operand 2, single buffered']
    #allocation8 [shape = 'u8[262144]{0}', space=vmem, size = 0x40000, scoped, tag = 'input window, operand 4, single buffered']
    #allocation9 [shape = 's32[1]{0}', space=sflag, size = 0x4, scoped, tag = 'scoped memory for gcn_forward_fused.1']
    #allocation10 [shape = 'u8[65536]{0}', space=vmem, size = 0x10000, scoped, tag = 'input window, operand 6, single buffered']
    #allocation11 [shape = 'u8[32768]{0}', space=vmem, size = 0x8000, scoped, tag = 'input window, operand 8, single buffered']
    #allocation12 [shape = 's32[1]{0}', space=sflag, size = 0x4, scoped, tag = 'scoped memory for gcn_forward_fused.1']
    #allocation13 [shape = 'u8[32768]{0}', space=vmem, size = 0x8000, scoped, tag = 'input window, operand 10, single buffered']
    #allocation14 [shape = 'u8[32768]{0}', space=vmem, size = 0x8000, scoped, tag = 'input window, operand 12, single buffered']
    #allocation15 [shape = 's32[1]{0}', space=sflag, size = 0x4, scoped, tag = 'scoped memory for gcn_forward_fused.1']
    #allocation16 [shape = 'u8[32768]{0}', space=vmem, size = 0x8000, scoped, tag = 'input window, operand 14, single buffered']
    #allocation17 [shape = 'u8[1024]{0}', space=vmem, size = 0x400, scoped, tag = 'output window, operand 0']
    %21 = vsyncpa [#allocation3], 0
    %s22 = scalar_lea.sflag [#allocation3], 1
    %23 = vsyncpa %s22, 0
    %24 = vsyncpa [#allocation6], 0
    %s25 = scalar_lea.sflag [#allocation6], 1
    %26 = vsyncpa %s25, 0
    %27 = vsyncpa [#allocation9], 0
    %28 = vsyncpa [#allocation12], 0
    %29 = vsyncpa [#allocation15], 0
    %30 = vsyncpa [#allocation4], 0
    %s31 = scalar_lea.sflag [#allocation4], 1
    %32 = vsyncpa %s31, 0
    loop: start=0, step=1, limit=6
    $region2: #{gcn_forward_fused.1} parent=1 // loop_pre_header
      _
    $region3: #{gcn_forward_fused.1} parent=1 // loop_header
      %s34 = sphi 0, %s38
      %p35 = scmp.ge.s32.totalorder %s34, 6
      %s44 = sphi 0, %s46
      %s47 = sphi 0, %s44
      %s48 = sphi 0, %s47
      %s64 = sphi 0, %s48
      %s70 = sphi 0, %s72
      %s73 = sphi 0, %s70
      %s74 = sphi 0, %s73
      %s90 = sphi 0, %s74
      %s94 = sphi 0, %s94
      %s96 = sphi 0, %s94
      %s97 = sphi 0, %s96
      %s111 = sphi 0, %s97
      %s115 = sphi 0, %s115
      %s117 = sphi 0, %s115
      %s118 = sphi 0, %s117
      %s132 = sphi 0, %s118
      %s136 = sphi 0, %s136
      %s138 = sphi 0, %s136
      %s139 = sphi 0, %s138
      %s153 = sphi 0, %s139
      %s157 = sphi 0, %s157
      %s159 = sphi 0, %s157
      %s160 = sphi 0, %s159
      %s174 = sphi 0, %s160
      %s178 = sphi 0, %s178
      %s180 = sphi 0, %s178
      %s181 = sphi 0, %s180
      %s195 = sphi 0, %s181
      %s199 = sphi 0, %s199
      %s201 = sphi 0, %s199
      %s202 = sphi 0, %s201
      %s216 = sphi 0, %s202
      %s220 = sphi 0, %s220
      %s222 = sphi 0, %s220
      %s223 = sphi 0, %s222
      %s237 = sphi 0, %s223
      %s241 = sphi 0, %s241
      %s243 = sphi 0, %s241
      %s244 = sphi 0, %s243
      %s258 = sphi 0, %s244
      %s262 = sphi 0, %s262
      %s264 = sphi 0, %s262
      %s265 = sphi 0, %s264
      %s279 = sphi 0, %s265
      %s283 = sphi 0, %s283
      %s285 = sphi 0, %s283
      %s286 = sphi 0, %s285
      %s300 = sphi 0, %s286
      %s304 = sphi 0, %s304
      %s306 = sphi 0, %s304
      %s307 = sphi 0, %s306
      %s321 = sphi 0, %s307
      %s325 = sphi 0, %s325
      %s327 = sphi 0, %s325
      %s328 = sphi 0, %s327
      %s342 = sphi 0, %s328
      %s346 = sphi 0, %s346
      %s348 = sphi 0, %s346
      %s349 = sphi 0, %s348
      %s363 = sphi 0, %s349
      %s367 = sphi 0, %s367
      %s369 = sphi 0, %s367
      %s370 = sphi 0, %s369
      %s384 = sphi 0, %s370
      %s390 = sphi 0, %s392
      %s393 = sphi 0, %s390
      %s394 = sphi 0, %s393
      %s410 = sphi 0, %s394
    $region4: #{gcn_forward_fused.1} parent=1 // loop_header_branch
      %37 = sbr.rel (%p35) target = $region8
    $region5: #{gcn_forward_fused.1} parent=1 // loop_body
      %s39 = ssub.s32 %s34, 1
      %s40 = ssub.s32 %s34, 2
      %s41 = sadd.s32 %s34, 1
      %s42 = ssub.s32 %s34, %s41
      %p43 = scmp.eq.s32.totalorder %s42, 0
      %s45 = sadd.s32 %s44, 1
      %s46 = scalar_select %p43, %s44, %s45
      %p49 = pneg %p43
      %p50 = scmp.eq.s32.totalorder %s34, 3
      %p51 = por %p49, %p50
      %p52 = scmp.ne.s32.totalorder %s44, %s47
      %p53 = scmp.eq.s32.totalorder %s34, 0
      %p54 = por %p52, %p53
      %p55 = scmp.ne.s32.totalorder %s44, %s47
      %p56 = scmp.eq.s32.totalorder %s39, 3
      %p57 = por %p55, %p56
      %p58 = scmp.ne.s32.totalorder %s47, %s48
      %p59 = scmp.eq.s32.totalorder %s39, 0
      %p60 = por %p58, %p59
      %p61 = scmp.ne.s32.totalorder %s47, %s48
      %p62 = scmp.eq.s32.totalorder %s40, 3
      %p63 = por %p61, %p62
      %p65 = scmp.ne.s32.totalorder %s48, %s64
      %p66 = scmp.eq.s32.totalorder %s40, 0
      %p67 = por %p65, %p66
      %s68 = ssub.s32 %s34, %s41
      %p69 = scmp.eq.s32.totalorder %s68, 0
      %s71 = sadd.s32 %s70, 1
      %s72 = scalar_select %p69, %s70, %s71
      %p75 = pneg %p69
      %p76 = scmp.eq.s32.totalorder %s34, 3
      %p77 = por %p75, %p76
      %p78 = scmp.ne.s32.totalorder %s70, %s73
      %p79 = scmp.eq.s32.totalorder %s34, 0
      %p80 = por %p78, %p79
      %p81 = scmp.ne.s32.totalorder %s70, %s73
      %p82 = scmp.eq.s32.totalorder %s39, 3
      %p83 = por %p81, %p82
      %p84 = scmp.ne.s32.totalorder %s73, %s74
      %p85 = scmp.eq.s32.totalorder %s39, 0
      %p86 = por %p84, %p85
      %p87 = scmp.ne.s32.totalorder %s73, %s74
      %p88 = scmp.eq.s32.totalorder %s40, 3
      %p89 = por %p87, %p88
      %p91 = scmp.ne.s32.totalorder %s74, %s90
      %p92 = scmp.eq.s32.totalorder %s40, 0
      %p93 = por %p91, %p92
      %s95 = sadd.s32 %s94, 1
      %p98 = scmp.eq.s32.totalorder %s34, 3
      %p99 = scmp.ne.s32.totalorder %s94, %s96
      %p100 = scmp.eq.s32.totalorder %s34, 0
      %p101 = por %p99, %p100
      %p102 = scmp.ne.s32.totalorder %s94, %s96
      %p103 = scmp.eq.s32.totalorder %s39, 3
      %p104 = por %p102, %p103
      %p105 = scmp.ne.s32.totalorder %s96, %s97
      %p106 = scmp.eq.s32.totalorder %s39, 0
      %p107 = por %p105, %p106
      %p108 = scmp.ne.s32.totalorder %s96, %s97
      %p109 = scmp.eq.s32.totalorder %s40, 3
      %p110 = por %p108, %p109
      %p112 = scmp.ne.s32.totalorder %s97, %s111
      %p113 = scmp.eq.s32.totalorder %s40, 0
      %p114 = por %p112, %p113
      %s116 = sadd.s32 %s115, 1
      %p119 = scmp.eq.s32.totalorder %s34, 3
      %p120 = scmp.ne.s32.totalorder %s115, %s117
      %p121 = scmp.eq.s32.totalorder %s34, 0
      %p122 = por %p120, %p121
      %p123 = scmp.ne.s32.totalorder %s115, %s117
      %p124 = scmp.eq.s32.totalorder %s39, 3
      %p125 = por %p123, %p124
      %p126 = scmp.ne.s32.totalorder %s117, %s118
      %p127 = scmp.eq.s32.totalorder %s39, 0
      %p128 = por %p126, %p127
      %p129 = scmp.ne.s32.totalorder %s117, %s118
      %p130 = scmp.eq.s32.totalorder %s40, 3
      %p131 = por %p129, %p130
      %p133 = scmp.ne.s32.totalorder %s118, %s132
      %p134 = scmp.eq.s32.totalorder %s40, 0
      %p135 = por %p133, %p134
      %s137 = sadd.s32 %s136, 1
      %p140 = scmp.eq.s32.totalorder %s34, 3
      %p141 = scmp.ne.s32.totalorder %s136, %s138
      %p142 = scmp.eq.s32.totalorder %s34, 0
      %p143 = por %p141, %p142
      %p144 = scmp.ne.s32.totalorder %s136, %s138
      %p145 = scmp.eq.s32.totalorder %s39, 3
      %p146 = por %p144, %p145
      %p147 = scmp.ne.s32.totalorder %s138, %s139
      %p148 = scmp.eq.s32.totalorder %s39, 0
      %p149 = por %p147, %p148
      %p150 = scmp.ne.s32.totalorder %s138, %s139
      %p151 = scmp.eq.s32.totalorder %s40, 3
      %p152 = por %p150, %p151
      %p154 = scmp.ne.s32.totalorder %s139, %s153
      %p155 = scmp.eq.s32.totalorder %s40, 0
      %p156 = por %p154, %p155
      %s158 = sadd.s32 %s157, 1
      %p161 = scmp.eq.s32.totalorder %s34, 3
      %p162 = scmp.ne.s32.totalorder %s157, %s159
      %p163 = scmp.eq.s32.totalorder %s34, 0
      %p164 = por %p162, %p163
      %p165 = scmp.ne.s32.totalorder %s157, %s159
      %p166 = scmp.eq.s32.totalorder %s39, 3
      %p167 = por %p165, %p166
      %p168 = scmp.ne.s32.totalorder %s159, %s160
      %p169 = scmp.eq.s32.totalorder %s39, 0
      %p170 = por %p168, %p169
      %p171 = scmp.ne.s32.totalorder %s159, %s160
      %p172 = scmp.eq.s32.totalorder %s40, 3
      %p173 = por %p171, %p172
      %p175 = scmp.ne.s32.totalorder %s160, %s174
      %p176 = scmp.eq.s32.totalorder %s40, 0
      %p177 = por %p175, %p176
      %s179 = sadd.s32 %s178, 1
      %p182 = scmp.eq.s32.totalorder %s34, 3
      %p183 = scmp.ne.s32.totalorder %s178, %s180
      %p184 = scmp.eq.s32.totalorder %s34, 0
      %p185 = por %p183, %p184
      %p186 = scmp.ne.s32.totalorder %s178, %s180
      %p187 = scmp.eq.s32.totalorder %s39, 3
      %p188 = por %p186, %p187
      %p189 = scmp.ne.s32.totalorder %s180, %s181
      %p190 = scmp.eq.s32.totalorder %s39, 0
      %p191 = por %p189, %p190
      %p192 = scmp.ne.s32.totalorder %s180, %s181
      %p193 = scmp.eq.s32.totalorder %s40, 3
      %p194 = por %p192, %p193
      %p196 = scmp.ne.s32.totalorder %s181, %s195
      %p197 = scmp.eq.s32.totalorder %s40, 0
      %p198 = por %p196, %p197
      %s200 = sadd.s32 %s199, 1
      %p203 = scmp.eq.s32.totalorder %s34, 3
      %p204 = scmp.ne.s32.totalorder %s199, %s201
      %p205 = scmp.eq.s32.totalorder %s34, 0
      %p206 = por %p204, %p205
      %p207 = scmp.ne.s32.totalorder %s199, %s201
      %p208 = scmp.eq.s32.totalorder %s39, 3
      %p209 = por %p207, %p208
      %p210 = scmp.ne.s32.totalorder %s201, %s202
      %p211 = scmp.eq.s32.totalorder %s39, 0
      %p212 = por %p210, %p211
      %p213 = scmp.ne.s32.totalorder %s201, %s202
      %p214 = scmp.eq.s32.totalorder %s40, 3
      %p215 = por %p213, %p214
      %p217 = scmp.ne.s32.totalorder %s202, %s216
      %p218 = scmp.eq.s32.totalorder %s40, 0
      %p219 = por %p217, %p218
      %s221 = sadd.s32 %s220, 1
      %p224 = scmp.eq.s32.totalorder %s34, 3
      %p225 = scmp.ne.s32.totalorder %s220, %s222
      %p226 = scmp.eq.s32.totalorder %s34, 0
      %p227 = por %p225, %p226
      %p228 = scmp.ne.s32.totalorder %s220, %s222
      %p229 = scmp.eq.s32.totalorder %s39, 3
      %p230 = por %p228, %p229
      %p231 = scmp.ne.s32.totalorder %s222, %s223
      %p232 = scmp.eq.s32.totalorder %s39, 0
      %p233 = por %p231, %p232
      %p234 = scmp.ne.s32.totalorder %s222, %s223
      %p235 = scmp.eq.s32.totalorder %s40, 3
      %p236 = por %p234, %p235
      %p238 = scmp.ne.s32.totalorder %s223, %s237
      %p239 = scmp.eq.s32.totalorder %s40, 0
      %p240 = por %p238, %p239
      %s242 = sadd.s32 %s241, 1
      %p245 = scmp.eq.s32.totalorder %s34, 3
      %p246 = scmp.ne.s32.totalorder %s241, %s243
      %p247 = scmp.eq.s32.totalorder %s34, 0
      %p248 = por %p246, %p247
      %p249 = scmp.ne.s32.totalorder %s241, %s243
      %p250 = scmp.eq.s32.totalorder %s39, 3
      %p251 = por %p249, %p250
      %p252 = scmp.ne.s32.totalorder %s243, %s244
      %p253 = scmp.eq.s32.totalorder %s39, 0
      %p254 = por %p252, %p253
      %p255 = scmp.ne.s32.totalorder %s243, %s244
      %p256 = scmp.eq.s32.totalorder %s40, 3
      %p257 = por %p255, %p256
      %p259 = scmp.ne.s32.totalorder %s244, %s258
      %p260 = scmp.eq.s32.totalorder %s40, 0
      %p261 = por %p259, %p260
      %s263 = sadd.s32 %s262, 1
      %p266 = scmp.eq.s32.totalorder %s34, 3
      %p267 = scmp.ne.s32.totalorder %s262, %s264
      %p268 = scmp.eq.s32.totalorder %s34, 0
      %p269 = por %p267, %p268
      %p270 = scmp.ne.s32.totalorder %s262, %s264
      %p271 = scmp.eq.s32.totalorder %s39, 3
      %p272 = por %p270, %p271
      %p273 = scmp.ne.s32.totalorder %s264, %s265
      %p274 = scmp.eq.s32.totalorder %s39, 0
      %p275 = por %p273, %p274
      %p276 = scmp.ne.s32.totalorder %s264, %s265
      %p277 = scmp.eq.s32.totalorder %s40, 3
      %p278 = por %p276, %p277
      %p280 = scmp.ne.s32.totalorder %s265, %s279
      %p281 = scmp.eq.s32.totalorder %s40, 0
      %p282 = por %p280, %p281
      %s284 = sadd.s32 %s283, 1
      %p287 = scmp.eq.s32.totalorder %s34, 3
      %p288 = scmp.ne.s32.totalorder %s283, %s285
      %p289 = scmp.eq.s32.totalorder %s34, 0
      %p290 = por %p288, %p289
      %p291 = scmp.ne.s32.totalorder %s283, %s285
      %p292 = scmp.eq.s32.totalorder %s39, 3
      %p293 = por %p291, %p292
      %p294 = scmp.ne.s32.totalorder %s285, %s286
      %p295 = scmp.eq.s32.totalorder %s39, 0
      %p296 = por %p294, %p295
      %p297 = scmp.ne.s32.totalorder %s285, %s286
      %p298 = scmp.eq.s32.totalorder %s40, 3
      %p299 = por %p297, %p298
      %p301 = scmp.ne.s32.totalorder %s286, %s300
      %p302 = scmp.eq.s32.totalorder %s40, 0
      %p303 = por %p301, %p302
      %s305 = sadd.s32 %s304, 1
      %p308 = scmp.eq.s32.totalorder %s34, 3
      %p309 = scmp.ne.s32.totalorder %s304, %s306
      %p310 = scmp.eq.s32.totalorder %s34, 0
      %p311 = por %p309, %p310
      %p312 = scmp.ne.s32.totalorder %s304, %s306
      %p313 = scmp.eq.s32.totalorder %s39, 3
      %p314 = por %p312, %p313
      %p315 = scmp.ne.s32.totalorder %s306, %s307
      %p316 = scmp.eq.s32.totalorder %s39, 0
      %p317 = por %p315, %p316
      %p318 = scmp.ne.s32.totalorder %s306, %s307
      %p319 = scmp.eq.s32.totalorder %s40, 3
      %p320 = por %p318, %p319
      %p322 = scmp.ne.s32.totalorder %s307, %s321
      %p323 = scmp.eq.s32.totalorder %s40, 0
      %p324 = por %p322, %p323
      %s326 = sadd.s32 %s325, 1
      %p329 = scmp.eq.s32.totalorder %s34, 3
      %p330 = scmp.ne.s32.totalorder %s325, %s327
      %p331 = scmp.eq.s32.totalorder %s34, 0
      %p332 = por %p330, %p331
      %p333 = scmp.ne.s32.totalorder %s325, %s327
      %p334 = scmp.eq.s32.totalorder %s39, 3
      %p335 = por %p333, %p334
      %p336 = scmp.ne.s32.totalorder %s327, %s328
      %p337 = scmp.eq.s32.totalorder %s39, 0
      %p338 = por %p336, %p337
      %p339 = scmp.ne.s32.totalorder %s327, %s328
      %p340 = scmp.eq.s32.totalorder %s40, 3
      %p341 = por %p339, %p340
      %p343 = scmp.ne.s32.totalorder %s328, %s342
      %p344 = scmp.eq.s32.totalorder %s40, 0
      %p345 = por %p343, %p344
      %s347 = sadd.s32 %s346, 1
      %p350 = scmp.eq.s32.totalorder %s34, 3
      %p351 = scmp.ne.s32.totalorder %s346, %s348
      %p352 = scmp.eq.s32.totalorder %s34, 0
      %p353 = por %p351, %p352
      %p354 = scmp.ne.s32.totalorder %s346, %s348
      %p355 = scmp.eq.s32.totalorder %s39, 3
      %p356 = por %p354, %p355
      %p357 = scmp.ne.s32.totalorder %s348, %s349
      %p358 = scmp.eq.s32.totalorder %s39, 0
      %p359 = por %p357, %p358
      %p360 = scmp.ne.s32.totalorder %s348, %s349
      %p361 = scmp.eq.s32.totalorder %s40, 3
      %p362 = por %p360, %p361
      %p364 = scmp.ne.s32.totalorder %s349, %s363
      %p365 = scmp.eq.s32.totalorder %s40, 0
      %p366 = por %p364, %p365
      %s368 = sadd.s32 %s367, 1
      %p371 = scmp.eq.s32.totalorder %s34, 3
      %p372 = scmp.ne.s32.totalorder %s367, %s369
      %p373 = scmp.eq.s32.totalorder %s34, 0
      %p374 = por %p372, %p373
      %p375 = scmp.ne.s32.totalorder %s367, %s369
      %p376 = scmp.eq.s32.totalorder %s39, 3
      %p377 = por %p375, %p376
      %p378 = scmp.ne.s32.totalorder %s369, %s370
      %p379 = scmp.eq.s32.totalorder %s39, 0
      %p380 = por %p378, %p379
      %p381 = scmp.ne.s32.totalorder %s369, %s370
      %p382 = scmp.eq.s32.totalorder %s40, 3
      %p383 = por %p381, %p382
      %p385 = scmp.ne.s32.totalorder %s370, %s384
      %p386 = scmp.eq.s32.totalorder %s40, 0
      %p387 = por %p385, %p386
      %s388 = ssub.s32 %s34, %s41
      %p389 = scmp.eq.s32.totalorder %s388, 0
      %s391 = sadd.s32 %s390, 1
      %s392 = scalar_select %p389, %s390, %s391
      %p395 = pneg %p389
      %p396 = scmp.eq.s32.totalorder %s34, 3
      %p397 = por %p395, %p396
      %p398 = scmp.ne.s32.totalorder %s390, %s393
      %p399 = scmp.eq.s32.totalorder %s34, 0
      %p400 = por %p398, %p399
      %p401 = scmp.ne.s32.totalorder %s390, %s393
      %p402 = scmp.eq.s32.totalorder %s39, 3
      %p403 = por %p401, %p402
      %p404 = scmp.ne.s32.totalorder %s393, %s394
      %p405 = scmp.eq.s32.totalorder %s39, 0
      %p406 = por %p404, %p405
      %p407 = scmp.ne.s32.totalorder %s393, %s394
      %p408 = scmp.eq.s32.totalorder %s40, 3
      %p409 = por %p407, %p408
      %p411 = scmp.ne.s32.totalorder %s394, %s410
      %p412 = scmp.eq.s32.totalorder %s40, 0
      %p413 = por %p411, %p412
      %p414 = scmp.le.s32.totalorder 1, %s34
      %p415 = scmp.lt.s32.totalorder %s34, 5
      %p416 = pnand %p414, %p415
      %p417 = pneg %p416
      // Predicated region
      $region9: #{gcn_forward_fused.1} parent=5 // pred_check
        _
      $region10: #{gcn_forward_fused.1} parent=5 // pred_check_branch
        %419 = sbr.rel (%p416) target = $region12
      $region11: #{gcn_forward_fused.1} parent=5 // pred_region
        %s420 = ssub.s32 %s34, 1
        // Predicated region
        $region13: #{gcn_forward_fused.1} parent=11 // pred_check
          %p421 = pneg %p107
        $region14: #{gcn_forward_fused.1} parent=11 // pred_check_branch
          %423 = sbr.rel (%p421) target = $region16
        $region15: #{gcn_forward_fused.1} parent=11 // pred_region
          %s425 = ssub.s32 32768, 32768
          %426 = vsyncadd [#allocation6], %s425
          %s427 = sshll.u32 [#allocation7], 4
          %s428 = int_to_ptr.vmem [resolvable:$true] %s427
          %433 = dma.hbm_to_vmem [thread:$0]  %s2, 32768, %s428, [#allocation6], 256, 256, 16
        $region16: #{gcn_forward_fused.1} parent=11 // pred_fallthru
          _
        // Predicated region
        $region17: #{gcn_forward_fused.1} parent=11 // pred_check
          %p434 = pneg %p128
        $region18: #{gcn_forward_fused.1} parent=11 // pred_check_branch
          %436 = sbr.rel (%p434) target = $region20
        $region19: #{gcn_forward_fused.1} parent=11 // pred_region
          _
        $region20: #{gcn_forward_fused.1} parent=11 // pred_fallthru
          _
        // Predicated region
        $region21: #{gcn_forward_fused.1} parent=11 // pred_check
          %p437 = pneg %p149
        $region22: #{gcn_forward_fused.1} parent=11 // pred_check_branch
          %439 = sbr.rel (%p437) target = $region24
        $region23: #{gcn_forward_fused.1} parent=11 // pred_region
          %s441 = ssub.s32 8192, 8192
          %442 = vsyncadd [#allocation9], %s441
          %s443 = sshll.u32 [#allocation8], 4
          %s444 = int_to_ptr.vmem [resolvable:$true] %s443
          %449 = dma.hbm_to_vmem [thread:$0]  %s4, 8192, %s444, [#allocation9], 128, 128, 8
        $region24: #{gcn_forward_fused.1} parent=11 // pred_fallthru
          _
        // Predicated region
        $region25: #{gcn_forward_fused.1} parent=11 // pred_check
          %p450 = pneg %p170
        $region26: #{gcn_forward_fused.1} parent=11 // pred_check_branch
          %452 = sbr.rel (%p450) target = $region28
        $region27: #{gcn_forward_fused.1} parent=11 // pred_region
          _
        $region28: #{gcn_forward_fused.1} parent=11 // pred_fallthru
          _
        // Predicated region
        $region29: #{gcn_forward_fused.1} parent=11 // pred_check
          %p453 = pneg %p191
        $region30: #{gcn_forward_fused.1} parent=11 // pred_check_branch
          %455 = sbr.rel (%p453) target = $region32
        $region31: #{gcn_forward_fused.1} parent=11 // pred_region
          %s457 = ssub.s32 2048, 2048
          %458 = vsyncadd [#allocation9], %s457
          %s459 = sshll.u32 [#allocation10], 4
          %s460 = int_to_ptr.vmem [resolvable:$true] %s459
          %465 = dma.hbm_to_vmem [thread:$0]  %s6, 2048, %s460, [#allocation9], 64, 64, 4
        $region32: #{gcn_forward_fused.1} parent=11 // pred_fallthru
          _
        // Predicated region
        $region33: #{gcn_forward_fused.1} parent=11 // pred_check
          %p466 = pneg %p212
        $region34: #{gcn_forward_fused.1} parent=11 // pred_check_branch
          %468 = sbr.rel (%p466) target = $region36
        $region35: #{gcn_forward_fused.1} parent=11 // pred_region
          _
        $region36: #{gcn_forward_fused.1} parent=11 // pred_fallthru
          _
        // Predicated region
        $region37: #{gcn_forward_fused.1} parent=11 // pred_check
          %p469 = pneg %p233
        $region38: #{gcn_forward_fused.1} parent=11 // pred_check_branch
          %471 = sbr.rel (%p469) target = $region40
        $region39: #{gcn_forward_fused.1} parent=11 // pred_region
          %s473 = ssub.s32 1024, 1024
          %474 = vsyncadd [#allocation12], %s473
          %s475 = sshll.u32 [#allocation11], 4
          %s476 = int_to_ptr.vmem [resolvable:$true] %s475
          %481 = dma.hbm_to_vmem [thread:$0]  %s8, 1024, %s476, [#allocation12], 64, 64, 4
        $region40: #{gcn_forward_fused.1} parent=11 // pred_fallthru
          _
        // Predicated region
        $region41: #{gcn_forward_fused.1} parent=11 // pred_check
          %p482 = pneg %p254
        $region42: #{gcn_forward_fused.1} parent=11 // pred_check_branch
          %484 = sbr.rel (%p482) target = $region44
        $region43: #{gcn_forward_fused.1} parent=11 // pred_region
          _
        $region44: #{gcn_forward_fused.1} parent=11 // pred_fallthru
          _
        // Predicated region
        $region45: #{gcn_forward_fused.1} parent=11 // pred_check
          %p485 = pneg %p275
        $region46: #{gcn_forward_fused.1} parent=11 // pred_check_branch
          %487 = sbr.rel (%p485) target = $region48
        $region47: #{gcn_forward_fused.1} parent=11 // pred_region
          %s489 = ssub.s32 1024, 1024
          %490 = vsyncadd [#allocation12], %s489
          %s491 = sshll.u32 [#allocation13], 4
          %s492 = int_to_ptr.vmem [resolvable:$true] %s491
          %497 = dma.hbm_to_vmem [thread:$0]  %s10, 1024, %s492, [#allocation12], 64, 64, 4
        $region48: #{gcn_forward_fused.1} parent=11 // pred_fallthru
          _
        // Predicated region
        $region49: #{gcn_forward_fused.1} parent=11 // pred_check
          %p498 = pneg %p296
        $region50: #{gcn_forward_fused.1} parent=11 // pred_check_branch
          %500 = sbr.rel (%p498) target = $region52
        $region51: #{gcn_forward_fused.1} parent=11 // pred_region
          _
        $region52: #{gcn_forward_fused.1} parent=11 // pred_fallthru
          _
        // Predicated region
        $region53: #{gcn_forward_fused.1} parent=11 // pred_check
          %p501 = pneg %p317
        $region54: #{gcn_forward_fused.1} parent=11 // pred_check_branch
          %503 = sbr.rel (%p501) target = $region56
        $region55: #{gcn_forward_fused.1} parent=11 // pred_region
          %s505 = ssub.s32 1024, 1024
          %506 = vsyncadd [#allocation15], %s505
          %s507 = sshll.u32 [#allocation14], 4
          %s508 = int_to_ptr.vmem [resolvable:$true] %s507
          %513 = dma.hbm_to_vmem [thread:$0]  %s12, 1024, %s508, [#allocation15], 64, 64, 4
        $region56: #{gcn_forward_fused.1} parent=11 // pred_fallthru
          _
        // Predicated region
        $region57: #{gcn_forward_fused.1} parent=11 // pred_check
          %p514 = pneg %p338
        $region58: #{gcn_forward_fused.1} parent=11 // pred_check_branch
          %516 = sbr.rel (%p514) target = $region60
        $region59: #{gcn_forward_fused.1} parent=11 // pred_region
          _
        $region60: #{gcn_forward_fused.1} parent=11 // pred_fallthru
          _
        // Predicated region
        $region61: #{gcn_forward_fused.1} parent=11 // pred_check
          %p517 = pneg %p359
        $region62: #{gcn_forward_fused.1} parent=11 // pred_check_branch
          %519 = sbr.rel (%p517) target = $region64
        $region63: #{gcn_forward_fused.1} parent=11 // pred_region
          %s521 = ssub.s32 1024, 1024
          %522 = vsyncadd [#allocation15], %s521
          %s523 = sshll.u32 [#allocation16], 4
          %s524 = int_to_ptr.vmem [resolvable:$true] %s523
          %529 = dma.hbm_to_vmem [thread:$0]  %s14, 1024, %s524, [#allocation15], 64, 64, 4
        $region64: #{gcn_forward_fused.1} parent=11 // pred_fallthru
          _
        // Predicated region
        $region65: #{gcn_forward_fused.1} parent=11 // pred_check
          %p530 = pneg %p380
        $region66: #{gcn_forward_fused.1} parent=11 // pred_check_branch
          %532 = sbr.rel (%p530) target = $region68
        $region67: #{gcn_forward_fused.1} parent=11 // pred_region
          _
        $region68: #{gcn_forward_fused.1} parent=11 // pred_fallthru
          _
      $region12: #{gcn_forward_fused.1} parent=5 // pred_fallthru
        _
      %p533 = scmp.lt.s32.totalorder %s34, 4
      // Predicated region
      $region69: #{gcn_forward_fused.1} parent=5 // pred_check
        %p534 = pneg %p533
      $region70: #{gcn_forward_fused.1} parent=5 // pred_check_branch
        %536 = sbr.rel (%p534) target = $region72
      $region71: #{gcn_forward_fused.1} parent=5 // pred_region
        // Predicated region
        $region73: #{gcn_forward_fused.1} parent=71 // pred_check
          %p537 = pneg %p54
        $region74: #{gcn_forward_fused.1} parent=71 // pred_check_branch
          %539 = sbr.rel (%p537) target = $region76
        $region75: #{gcn_forward_fused.1} parent=71 // pred_region
          %s540 = sand.u32 %s44, 1
          %s541 = scalar_lea.sflag [#allocation3], %s540
          %s542 = sand.u32 %s44, 1
          %s543 = smul.addr %s542, 32
          %s544 = scalar_lea.vmem [#allocation2], %s543
          %s546 = ssub.s32 512, 512
          %547 = vsyncadd %s541, %s546
          %s548 = smul.addr %s34, 8
          %s549 = smul.addr %s548, 64
          %s550 = scalar_lea.hbm %s0, %s549
          %s551 = sshll.u32 %s544, 4
          %s552 = int_to_ptr.vmem [resolvable:$true] %s551
          %557 = dma.hbm_to_vmem [thread:$0]  %s550, 512, %s552, %s541, 64, 64, 4
        $region76: #{gcn_forward_fused.1} parent=71 // pred_fallthru
          _
        // Predicated region
        $region77: #{gcn_forward_fused.1} parent=71 // pred_check
          %p558 = pneg %p80
        $region78: #{gcn_forward_fused.1} parent=71 // pred_check_branch
          %560 = sbr.rel (%p558) target = $region80
        $region79: #{gcn_forward_fused.1} parent=71 // pred_region
          %s561 = sand.u32 %s34, 1
          %s562 = scalar_lea.sflag [#allocation6], %s561
          %s563 = sand.u32 %s70, 1
          %s564 = smul.addr %s563, 512
          %s565 = scalar_lea.vmem [#allocation5], %s564
          %s567 = ssub.s32 8192, 8192
          %568 = vsyncadd %s562, %s567
          %s569 = smul.addr %s34, 64
          %s570 = smul.addr %s569, 128
          %s571 = scalar_lea.hbm %s1, %s570
          %s572 = sshll.u32 %s565, 4
          %s573 = int_to_ptr.vmem [resolvable:$true] %s572
          %578 = dma.hbm_to_vmem [thread:$0]  %s571, 8192, %s573, %s562, 1024, 1024, 64
        $region80: #{gcn_forward_fused.1} parent=71 // pred_fallthru
          _
      $region72: #{gcn_forward_fused.1} parent=5 // pred_fallthru
        _
      %p579 = scmp.le.s32.totalorder 1, %s34
      %p580 = scmp.lt.s32.totalorder %s34, 5
      %p581 = pnand %p579, %p580
      %p582 = pneg %p581
      // Predicated region
      $region81: #{gcn_forward_fused.1} parent=5 // pred_check
        _
      $region82: #{gcn_forward_fused.1} parent=5 // pred_check_branch
        %584 = sbr.rel (%p581) target = $region84
      $region83: #{gcn_forward_fused.1} parent=5 // pred_region
        %s585 = ssub.s32 %s34, 1
        %s586 = sand.u32 %s47, 1
        %s587 = scalar_lea.sflag [#allocation3], %s586
        %s588 = sand.u32 %s47, 1
        %s589 = smul.addr %s588, 32
        %s590 = scalar_lea.vmem [#allocation2], %s589
        // Predicated region
        $region85: #{gcn_forward_fused.1} parent=83 // pred_check
          %p591 = pneg %p60
        $region86: #{gcn_forward_fused.1} parent=83 // pred_check_branch
          %593 = sbr.rel (%p591) target = $region88
        $region87: #{gcn_forward_fused.1} parent=83 // pred_region
          %594 = dma.done %s587, 512
        $region88: #{gcn_forward_fused.1} parent=83 // pred_fallthru
          _
        %s595 = sand.u32 %s39, 1
        %s596 = scalar_lea.sflag [#allocation6], %s595
        %s597 = sand.u32 %s73, 1
        %s598 = smul.addr %s597, 512
        %s599 = scalar_lea.vmem [#allocation5], %s598
        // Predicated region
        $region89: #{gcn_forward_fused.1} parent=83 // pred_check
          %p600 = pneg %p86
        $region90: #{gcn_forward_fused.1} parent=83 // pred_check_branch
          %602 = sbr.rel (%p600) target = $region92
        $region91: #{gcn_forward_fused.1} parent=83 // pred_region
          %603 = dma.done %s596, 8192
        $region92: #{gcn_forward_fused.1} parent=83 // pred_fallthru
          _
        // Predicated region
        $region93: #{gcn_forward_fused.1} parent=83 // pred_check
          %p604 = pneg %p107
        $region94: #{gcn_forward_fused.1} parent=83 // pred_check_branch
          %606 = sbr.rel (%p604) target = $region96
        $region95: #{gcn_forward_fused.1} parent=83 // pred_region
          %607 = dma.done [#allocation6], 32768
        $region96: #{gcn_forward_fused.1} parent=83 // pred_fallthru
          _
        // Predicated region
        $region97: #{gcn_forward_fused.1} parent=83 // pred_check
          %p608 = pneg %p149
        $region98: #{gcn_forward_fused.1} parent=83 // pred_check_branch
          %610 = sbr.rel (%p608) target = $region100
        $region99: #{gcn_forward_fused.1} parent=83 // pred_region
          %611 = dma.done [#allocation9], 8192
        $region100: #{gcn_forward_fused.1} parent=83 // pred_fallthru
          _
        // Predicated region
        $region101: #{gcn_forward_fused.1} parent=83 // pred_check
          %p612 = pneg %p191
        $region102: #{gcn_forward_fused.1} parent=83 // pred_check_branch
          %614 = sbr.rel (%p612) target = $region104
        $region103: #{gcn_forward_fused.1} parent=83 // pred_region
          %615 = dma.done [#allocation9], 2048
        $region104: #{gcn_forward_fused.1} parent=83 // pred_fallthru
          _
        // Predicated region
        $region105: #{gcn_forward_fused.1} parent=83 // pred_check
          %p616 = pneg %p233
        $region106: #{gcn_forward_fused.1} parent=83 // pred_check_branch
          %618 = sbr.rel (%p616) target = $region108
        $region107: #{gcn_forward_fused.1} parent=83 // pred_region
          %619 = dma.done [#allocation12], 1024
        $region108: #{gcn_forward_fused.1} parent=83 // pred_fallthru
          _
        // Predicated region
        $region109: #{gcn_forward_fused.1} parent=83 // pred_check
          %p620 = pneg %p275
        $region110: #{gcn_forward_fused.1} parent=83 // pred_check_branch
          %622 = sbr.rel (%p620) target = $region112
        $region111: #{gcn_forward_fused.1} parent=83 // pred_region
          %623 = dma.done [#allocation12], 1024
        $region112: #{gcn_forward_fused.1} parent=83 // pred_fallthru
          _
        // Predicated region
        $region113: #{gcn_forward_fused.1} parent=83 // pred_check
          %p624 = pneg %p317
        $region114: #{gcn_forward_fused.1} parent=83 // pred_check_branch
          %626 = sbr.rel (%p624) target = $region116
        $region115: #{gcn_forward_fused.1} parent=83 // pred_region
          %627 = dma.done [#allocation15], 1024
        $region116: #{gcn_forward_fused.1} parent=83 // pred_fallthru
          _
        // Predicated region
        $region117: #{gcn_forward_fused.1} parent=83 // pred_check
          %p628 = pneg %p359
        $region118: #{gcn_forward_fused.1} parent=83 // pred_check_branch
          %630 = sbr.rel (%p628) target = $region120
        $region119: #{gcn_forward_fused.1} parent=83 // pred_region
          %631 = dma.done [#allocation15], 1024
        $region120: #{gcn_forward_fused.1} parent=83 // pred_fallthru
          _
        %s632 = sand.u32 %s47, 1
        %s633 = scalar_lea.sflag [#allocation3], %s632
        %s634 = sand.u32 %s47, 1
        %s635 = smul.addr %s634, 32
        %s636 = scalar_lea.vmem [#allocation2], %s635
        %p637 = pneg %p60
        %p638 = pneg %p57
        %s639 = sand.u32 %s39, 1
        %s640 = scalar_lea.sflag [#allocation6], %s639
        %s641 = sand.u32 %s73, 1
        %s642 = smul.addr %s641, 512
        %s643 = scalar_lea.vmem [#allocation5], %s642
        %p644 = pneg %p86
        %p645 = pneg %p83
        %p646 = pneg %p107
        %p647 = pneg %p104
        %p648 = pneg %p128
        %p649 = pneg %p125
        %p650 = pneg %p149
        %p651 = pneg %p146
        %p652 = pneg %p170
        %p653 = pneg %p167
        %p654 = pneg %p191
        %p655 = pneg %p188
        %p656 = pneg %p212
        %p657 = pneg %p209
        %p658 = pneg %p233
        %p659 = pneg %p230
        %p660 = pneg %p254
        %p661 = pneg %p251
        %p662 = pneg %p275
        %p663 = pneg %p272
        %p664 = pneg %p296
        %p665 = pneg %p293
        %p666 = pneg %p317
        %p667 = pneg %p314
        %p668 = pneg %p338
        %p669 = pneg %p335
        %p670 = pneg %p359
        %p671 = pneg %p356
        %p672 = pneg %p380
        %p673 = pneg %p377
        %p674 = pneg %p406
        %p675 = pneg %p403
        %s676 = sand.u32 %s393, 1
        %s677 = scalar_lea.sflag [#allocation4], %s676
        %s678 = sand.u32 %s393, 1
        %s679 = scalar_lea.vmem [#allocation17], %s678
        %v681 = vld [vmem:[%s590] sm:$0xf]
        %v682 = vld [vmem:[%s590 + $0x4] sm:$0xf]
        %v683 = vld [vmem:[%s590 + $0x8] sm:$0xf]
        %v684 = vld [vmem:[%s590 + $0xc] sm:$0xf]
        %v685 = vld [vmem:[%s590 + $0x10] sm:$0xf]
        %v686 = vld [vmem:[%s590 + $0x14] sm:$0xf]
        %v687 = vld [vmem:[%s590 + $0x18] sm:$0xf]
        %v688 = vld [vmem:[%s590 + $0x1c] sm:$0xf]
        %v689 = vld [vmem:[%s599] sm:$0xff]
        %v690 = vld [vmem:[%s599 + $0x8] sm:$0xff]
        %v691 = vld [vmem:[%s599 + $0x10] sm:$0xff]
        %v692 = vld [vmem:[%s599 + $0x18] sm:$0xff]
        %v693 = vld [vmem:[%s599 + $0x20] sm:$0xff]
        %v694 = vld [vmem:[%s599 + $0x28] sm:$0xff]
        %v695 = vld [vmem:[%s599 + $0x30] sm:$0xff]
        %v696 = vld [vmem:[%s599 + $0x38] sm:$0xff]
        %v697 = vld [vmem:[%s599 + $0x40] sm:$0xff]
        %v698 = vld [vmem:[%s599 + $0x48] sm:$0xff]
        %v699 = vld [vmem:[%s599 + $0x50] sm:$0xff]
        %v700 = vld [vmem:[%s599 + $0x58] sm:$0xff]
        %v701 = vld [vmem:[%s599 + $0x60] sm:$0xff]
        %v702 = vld [vmem:[%s599 + $0x68] sm:$0xff]
        %v703 = vld [vmem:[%s599 + $0x70] sm:$0xff]
        %v704 = vld [vmem:[%s599 + $0x78] sm:$0xff]
        %v705 = vld [vmem:[%s599 + $0x80] sm:$0xff]
        %v706 = vld [vmem:[%s599 + $0x88] sm:$0xff]
        %v707 = vld [vmem:[%s599 + $0x90] sm:$0xff]
        %v708 = vld [vmem:[%s599 + $0x98] sm:$0xff]
        %v709 = vld [vmem:[%s599 + $0xa0] sm:$0xff]
        %v710 = vld [vmem:[%s599 + $0xa8] sm:$0xff]
        %v711 = vld [vmem:[%s599 + $0xb0] sm:$0xff]
        %v712 = vld [vmem:[%s599 + $0xb8] sm:$0xff]
        %v713 = vld [vmem:[%s599 + $0xc0] sm:$0xff]
        %v714 = vld [vmem:[%s599 + $0xc8] sm:$0xff]
        %v715 = vld [vmem:[%s599 + $0xd0] sm:$0xff]
        %v716 = vld [vmem:[%s599 + $0xd8] sm:$0xff]
        %v717 = vld [vmem:[%s599 + $0xe0] sm:$0xff]
        %v718 = vld [vmem:[%s599 + $0xe8] sm:$0xff]
        %v719 = vld [vmem:[%s599 + $0xf0] sm:$0xff]
        %v720 = vld [vmem:[%s599 + $0xf8] sm:$0xff]
        %v721 = vld [vmem:[%s599 + $0x100] sm:$0xff]
        %v722 = vld [vmem:[%s599 + $0x108] sm:$0xff]
        %v723 = vld [vmem:[%s599 + $0x110] sm:$0xff]
        %v724 = vld [vmem:[%s599 + $0x118] sm:$0xff]
        %v725 = vld [vmem:[%s599 + $0x120] sm:$0xff]
        %v726 = vld [vmem:[%s599 + $0x128] sm:$0xff]
        %v727 = vld [vmem:[%s599 + $0x130] sm:$0xff]
        %v728 = vld [vmem:[%s599 + $0x138] sm:$0xff]
        %v729 = vld [vmem:[%s599 + $0x140] sm:$0xff]
        %v730 = vld [vmem:[%s599 + $0x148] sm:$0xff]
        %v731 = vld [vmem:[%s599 + $0x150] sm:$0xff]
        %v732 = vld [vmem:[%s599 + $0x158] sm:$0xff]
        %v733 = vld [vmem:[%s599 + $0x160] sm:$0xff]
        %v734 = vld [vmem:[%s599 + $0x168] sm:$0xff]
        %v735 = vld [vmem:[%s599 + $0x170] sm:$0xff]
        %v736 = vld [vmem:[%s599 + $0x178] sm:$0xff]
        %v737 = vld [vmem:[%s599 + $0x180] sm:$0xff]
        %v738 = vld [vmem:[%s599 + $0x188] sm:$0xff]
        %v739 = vld [vmem:[%s599 + $0x190] sm:$0xff]
        %v740 = vld [vmem:[%s599 + $0x198] sm:$0xff]
        %v741 = vld [vmem:[%s599 + $0x1a0] sm:$0xff]
        %v742 = vld [vmem:[%s599 + $0x1a8] sm:$0xff]
        %v743 = vld [vmem:[%s599 + $0x1b0] sm:$0xff]
        %v744 = vld [vmem:[%s599 + $0x1b8] sm:$0xff]
        %v745 = vld [vmem:[%s599 + $0x1c0] sm:$0xff]
        %v746 = vld [vmem:[%s599 + $0x1c8] sm:$0xff]
        %v747 = vld [vmem:[%s599 + $0x1d0] sm:$0xff]
        %v748 = vld [vmem:[%s599 + $0x1d8] sm:$0xff]
        %v749 = vld [vmem:[%s599 + $0x1e0] sm:$0xff]
        %v750 = vld [vmem:[%s599 + $0x1e8] sm:$0xff]
        %v751 = vld [vmem:[%s599 + $0x1f0] sm:$0xff]
        %v752 = vld [vmem:[%s599 + $0x1f8] sm:$0xff]
        %v753 = vpack.c.bf16 %v697, %v689
        %v754 = vpack.c.bf16 %v698, %v690
        %v755 = vpack.c.bf16 %v699, %v691
        %v756 = vpack.c.bf16 %v700, %v692
        %v757 = vpack.c.bf16 %v701, %v693
        %v758 = vpack.c.bf16 %v702, %v694
        %v759 = vpack.c.bf16 %v703, %v695
        %v760 = vpack.c.bf16 %v704, %v696
        %v761 = vpack.c.bf16 %v713, %v705
        %v762 = vpack.c.bf16 %v714, %v706
        %v763 = vpack.c.bf16 %v715, %v707
        %v764 = vpack.c.bf16 %v716, %v708
        %v765 = vpack.c.bf16 %v717, %v709
        %v766 = vpack.c.bf16 %v718, %v710
        %v767 = vpack.c.bf16 %v719, %v711
        %v768 = vpack.c.bf16 %v720, %v712
        %v769 = vpack.c.bf16 %v729, %v721
        %v770 = vpack.c.bf16 %v730, %v722
        %v771 = vpack.c.bf16 %v731, %v723
        %v772 = vpack.c.bf16 %v732, %v724
        %v773 = vpack.c.bf16 %v733, %v725
        %v774 = vpack.c.bf16 %v734, %v726
        %v775 = vpack.c.bf16 %v735, %v727
        %v776 = vpack.c.bf16 %v736, %v728
        %v777 = vpack.c.bf16 %v745, %v737
        %v778 = vpack.c.bf16 %v746, %v738
        %v779 = vpack.c.bf16 %v747, %v739
        %v780 = vpack.c.bf16 %v748, %v740
        %v781 = vpack.c.bf16 %v749, %v741
        %v782 = vpack.c.bf16 %v750, %v742
        %v783 = vpack.c.bf16 %v751, %v743
        %v784 = vpack.c.bf16 %v752, %v744
        %v785 = vld [vmem:[#allocation7] sm:$0xff]
        %v786 = vld [vmem:[#allocation7 + $0x8] sm:$0xff]
        %v787 = vld [vmem:[#allocation7 + $0x10] sm:$0xff]
        %v788 = vld [vmem:[#allocation7 + $0x18] sm:$0xff]
        %v789 = vld [vmem:[#allocation7 + $0x20] sm:$0xff]
        %v790 = vld [vmem:[#allocation7 + $0x28] sm:$0xff]
        %v791 = vld [vmem:[#allocation7 + $0x30] sm:$0xff]
        %v792 = vld [vmem:[#allocation7 + $0x38] sm:$0xff]
        %v793 = vld [vmem:[#allocation7 + $0x40] sm:$0xff]
        %v794 = vld [vmem:[#allocation7 + $0x48] sm:$0xff]
        %v795 = vld [vmem:[#allocation7 + $0x50] sm:$0xff]
        %v796 = vld [vmem:[#allocation7 + $0x58] sm:$0xff]
        %v797 = vld [vmem:[#allocation7 + $0x60] sm:$0xff]
        %v798 = vld [vmem:[#allocation7 + $0x68] sm:$0xff]
        %v799 = vld [vmem:[#allocation7 + $0x70] sm:$0xff]
        %v800 = vld [vmem:[#allocation7 + $0x78] sm:$0xff]
        %v801 = vld [vmem:[#allocation7 + $0x80] sm:$0xff]
        %v802 = vld [vmem:[#allocation7 + $0x88] sm:$0xff]
        %v803 = vld [vmem:[#allocation7 + $0x90] sm:$0xff]
        %v804 = vld [vmem:[#allocation7 + $0x98] sm:$0xff]
        %v805 = vld [vmem:[#allocation7 + $0xa0] sm:$0xff]
        %v806 = vld [vmem:[#allocation7 + $0xa8] sm:$0xff]
        %v807 = vld [vmem:[#allocation7 + $0xb0] sm:$0xff]
        %v808 = vld [vmem:[#allocation7 + $0xb8] sm:$0xff]
        %v809 = vld [vmem:[#allocation7 + $0xc0] sm:$0xff]
        %v810 = vld [vmem:[#allocation7 + $0xc8] sm:$0xff]
        %v811 = vld [vmem:[#allocation7 + $0xd0] sm:$0xff]
        %v812 = vld [vmem:[#allocation7 + $0xd8] sm:$0xff]
        %v813 = vld [vmem:[#allocation7 + $0xe0] sm:$0xff]
        %v814 = vld [vmem:[#allocation7 + $0xe8] sm:$0xff]
        %v815 = vld [vmem:[#allocation7 + $0xf0] sm:$0xff]
        %v816 = vld [vmem:[#allocation7 + $0xf8] sm:$0xff]
        %v817 = vld [vmem:[#allocation7 + $0x100] sm:$0xff]
        %v818 = vld [vmem:[#allocation7 + $0x108] sm:$0xff]
        %v819 = vld [vmem:[#allocation7 + $0x110] sm:$0xff]
        %v820 = vld [vmem:[#allocation7 + $0x118] sm:$0xff]
        %v821 = vld [vmem:[#allocation7 + $0x120] sm:$0xff]
        %v822 = vld [vmem:[#allocation7 + $0x128] sm:$0xff]
        %v823 = vld [vmem:[#allocation7 + $0x130] sm:$0xff]
        %v824 = vld [vmem:[#allocation7 + $0x138] sm:$0xff]
        %v825 = vld [vmem:[#allocation7 + $0x140] sm:$0xff]
        %v826 = vld [vmem:[#allocation7 + $0x148] sm:$0xff]
        %v827 = vld [vmem:[#allocation7 + $0x150] sm:$0xff]
        %v828 = vld [vmem:[#allocation7 + $0x158] sm:$0xff]
        %v829 = vld [vmem:[#allocation7 + $0x160] sm:$0xff]
        %v830 = vld [vmem:[#allocation7 + $0x168] sm:$0xff]
        %v831 = vld [vmem:[#allocation7 + $0x170] sm:$0xff]
        %v832 = vld [vmem:[#allocation7 + $0x178] sm:$0xff]
        %v833 = vld [vmem:[#allocation7 + $0x180] sm:$0xff]
        %v834 = vld [vmem:[#allocation7 + $0x188] sm:$0xff]
        %v835 = vld [vmem:[#allocation7 + $0x190] sm:$0xff]
        %v836 = vld [vmem:[#allocation7 + $0x198] sm:$0xff]
        %v837 = vld [vmem:[#allocation7 + $0x1a0] sm:$0xff]
        %v838 = vld [vmem:[#allocation7 + $0x1a8] sm:$0xff]
        %v839 = vld [vmem:[#allocation7 + $0x1b0] sm:$0xff]
        %v840 = vld [vmem:[#allocation7 + $0x1b8] sm:$0xff]
        %v841 = vld [vmem:[#allocation7 + $0x1c0] sm:$0xff]
        %v842 = vld [vmem:[#allocation7 + $0x1c8] sm:$0xff]
        %v843 = vld [vmem:[#allocation7 + $0x1d0] sm:$0xff]
        %v844 = vld [vmem:[#allocation7 + $0x1d8] sm:$0xff]
        %v845 = vld [vmem:[#allocation7 + $0x1e0] sm:$0xff]
        %v846 = vld [vmem:[#allocation7 + $0x1e8] sm:$0xff]
        %v847 = vld [vmem:[#allocation7 + $0x1f0] sm:$0xff]
        %v848 = vld [vmem:[#allocation7 + $0x1f8] sm:$0xff]
        %v849 = vld [vmem:[#allocation7 + $0x200] sm:$0xff]
        %v850 = vld [vmem:[#allocation7 + $0x208] sm:$0xff]
        %v851 = vld [vmem:[#allocation7 + $0x210] sm:$0xff]
        %v852 = vld [vmem:[#allocation7 + $0x218] sm:$0xff]
        %v853 = vld [vmem:[#allocation7 + $0x220] sm:$0xff]
        %v854 = vld [vmem:[#allocation7 + $0x228] sm:$0xff]
        %v855 = vld [vmem:[#allocation7 + $0x230] sm:$0xff]
        %v856 = vld [vmem:[#allocation7 + $0x238] sm:$0xff]
        %v857 = vld [vmem:[#allocation7 + $0x240] sm:$0xff]
        %v858 = vld [vmem:[#allocation7 + $0x248] sm:$0xff]
        %v859 = vld [vmem:[#allocation7 + $0x250] sm:$0xff]
        %v860 = vld [vmem:[#allocation7 + $0x258] sm:$0xff]
        %v861 = vld [vmem:[#allocation7 + $0x260] sm:$0xff]
        %v862 = vld [vmem:[#allocation7 + $0x268] sm:$0xff]
        %v863 = vld [vmem:[#allocation7 + $0x270] sm:$0xff]
        %v864 = vld [vmem:[#allocation7 + $0x278] sm:$0xff]
        %v865 = vld [vmem:[#allocation7 + $0x280] sm:$0xff]
        %v866 = vld [vmem:[#allocation7 + $0x288] sm:$0xff]
        %v867 = vld [vmem:[#allocation7 + $0x290] sm:$0xff]
        %v868 = vld [vmem:[#allocation7 + $0x298] sm:$0xff]
        %v869 = vld [vmem:[#allocation7 + $0x2a0] sm:$0xff]
        %v870 = vld [vmem:[#allocation7 + $0x2a8] sm:$0xff]
        %v871 = vld [vmem:[#allocation7 + $0x2b0] sm:$0xff]
        %v872 = vld [vmem:[#allocation7 + $0x2b8] sm:$0xff]
        %v873 = vld [vmem:[#allocation7 + $0x2c0] sm:$0xff]
        %v874 = vld [vmem:[#allocation7 + $0x2c8] sm:$0xff]
        %v875 = vld [vmem:[#allocation7 + $0x2d0] sm:$0xff]
        %v876 = vld [vmem:[#allocation7 + $0x2d8] sm:$0xff]
        %v877 = vld [vmem:[#allocation7 + $0x2e0] sm:$0xff]
        %v878 = vld [vmem:[#allocation7 + $0x2e8] sm:$0xff]
        %v879 = vld [vmem:[#allocation7 + $0x2f0] sm:$0xff]
        %v880 = vld [vmem:[#allocation7 + $0x2f8] sm:$0xff]
        %v881 = vld [vmem:[#allocation7 + $0x300] sm:$0xff]
        %v882 = vld [vmem:[#allocation7 + $0x308] sm:$0xff]
        %v883 = vld [vmem:[#allocation7 + $0x310] sm:$0xff]
        %v884 = vld [vmem:[#allocation7 + $0x318] sm:$0xff]
        %v885 = vld [vmem:[#allocation7 + $0x320] sm:$0xff]
        %v886 = vld [vmem:[#allocation7 + $0x328] sm:$0xff]
        %v887 = vld [vmem:[#allocation7 + $0x330] sm:$0xff]
        %v888 = vld [vmem:[#allocation7 + $0x338] sm:$0xff]
        %v889 = vld [vmem:[#allocation7 + $0x340] sm:$0xff]
        %v890 = vld [vmem:[#allocation7 + $0x348] sm:$0xff]
        %v891 = vld [vmem:[#allocation7 + $0x350] sm:$0xff]
        %v892 = vld [vmem:[#allocation7 + $0x358] sm:$0xff]
        %v893 = vld [vmem:[#allocation7 + $0x360] sm:$0xff]
        %v894 = vld [vmem:[#allocation7 + $0x368] sm:$0xff]
        %v895 = vld [vmem:[#allocation7 + $0x370] sm:$0xff]
        %v896 = vld [vmem:[#allocation7 + $0x378] sm:$0xff]
        %v897 = vld [vmem:[#allocation7 + $0x380] sm:$0xff]
        %v898 = vld [vmem:[#allocation7 + $0x388] sm:$0xff]
        %v899 = vld [vmem:[#allocation7 + $0x390] sm:$0xff]
        %v900 = vld [vmem:[#allocation7 + $0x398] sm:$0xff]
        %v901 = vld [vmem:[#allocation7 + $0x3a0] sm:$0xff]
        %v902 = vld [vmem:[#allocation7 + $0x3a8] sm:$0xff]
        %v903 = vld [vmem:[#allocation7 + $0x3b0] sm:$0xff]
        %v904 = vld [vmem:[#allocation7 + $0x3b8] sm:$0xff]
        %v905 = vld [vmem:[#allocation7 + $0x3c0] sm:$0xff]
        %v906 = vld [vmem:[#allocation7 + $0x3c8] sm:$0xff]
        %v907 = vld [vmem:[#allocation7 + $0x3d0] sm:$0xff]
        %v908 = vld [vmem:[#allocation7 + $0x3d8] sm:$0xff]
        %v909 = vld [vmem:[#allocation7 + $0x3e0] sm:$0xff]
        %v910 = vld [vmem:[#allocation7 + $0x3e8] sm:$0xff]
        %v911 = vld [vmem:[#allocation7 + $0x3f0] sm:$0xff]
        %v912 = vld [vmem:[#allocation7 + $0x3f8] sm:$0xff]
        %v913 = vld [vmem:[#allocation7 + $0x400] sm:$0xff]
        %v914 = vld [vmem:[#allocation7 + $0x408] sm:$0xff]
        %v915 = vld [vmem:[#allocation7 + $0x410] sm:$0xff]
        %v916 = vld [vmem:[#allocation7 + $0x418] sm:$0xff]
        %v917 = vld [vmem:[#allocation7 + $0x420] sm:$0xff]
        %v918 = vld [vmem:[#allocation7 + $0x428] sm:$0xff]
        %v919 = vld [vmem:[#allocation7 + $0x430] sm:$0xff]
        %v920 = vld [vmem:[#allocation7 + $0x438] sm:$0xff]
        %v921 = vld [vmem:[#allocation7 + $0x440] sm:$0xff]
        %v922 = vld [vmem:[#allocation7 + $0x448] sm:$0xff]
        %v923 = vld [vmem:[#allocation7 + $0x450] sm:$0xff]
        %v924 = vld [vmem:[#allocation7 + $0x458] sm:$0xff]
        %v925 = vld [vmem:[#allocation7 + $0x460] sm:$0xff]
        %v926 = vld [vmem:[#allocation7 + $0x468] sm:$0xff]
        %v927 = vld [vmem:[#allocation7 + $0x470] sm:$0xff]
        %v928 = vld [vmem:[#allocation7 + $0x478] sm:$0xff]
        %v929 = vld [vmem:[#allocation7 + $0x480] sm:$0xff]
        %v930 = vld [vmem:[#allocation7 + $0x488] sm:$0xff]
        %v931 = vld [vmem:[#allocation7 + $0x490] sm:$0xff]
        %v932 = vld [vmem:[#allocation7 + $0x498] sm:$0xff]
        %v933 = vld [vmem:[#allocation7 + $0x4a0] sm:$0xff]
        %v934 = vld [vmem:[#allocation7 + $0x4a8] sm:$0xff]
        %v935 = vld [vmem:[#allocation7 + $0x4b0] sm:$0xff]
        %v936 = vld [vmem:[#allocation7 + $0x4b8] sm:$0xff]
        %v937 = vld [vmem:[#allocation7 + $0x4c0] sm:$0xff]
        %v938 = vld [vmem:[#allocation7 + $0x4c8] sm:$0xff]
        %v939 = vld [vmem:[#allocation7 + $0x4d0] sm:$0xff]
        %v940 = vld [vmem:[#allocation7 + $0x4d8] sm:$0xff]
        %v941 = vld [vmem:[#allocation7 + $0x4e0] sm:$0xff]
        %v942 = vld [vmem:[#allocation7 + $0x4e8] sm:$0xff]
        %v943 = vld [vmem:[#allocation7 + $0x4f0] sm:$0xff]
        %v944 = vld [vmem:[#allocation7 + $0x4f8] sm:$0xff]
        %v945 = vld [vmem:[#allocation7 + $0x500] sm:$0xff]
        %v946 = vld [vmem:[#allocation7 + $0x508] sm:$0xff]
        %v947 = vld [vmem:[#allocation7 + $0x510] sm:$0xff]
        %v948 = vld [vmem:[#allocation7 + $0x518] sm:$0xff]
        %v949 = vld [vmem:[#allocation7 + $0x520] sm:$0xff]
        %v950 = vld [vmem:[#allocation7 + $0x528] sm:$0xff]
        %v951 = vld [vmem:[#allocation7 + $0x530] sm:$0xff]
        %v952 = vld [vmem:[#allocation7 + $0x538] sm:$0xff]
        %v953 = vld [vmem:[#allocation7 + $0x540] sm:$0xff]
        %v954 = vld [vmem:[#allocation7 + $0x548] sm:$0xff]
        %v955 = vld [vmem:[#allocation7 + $0x550] sm:$0xff]
        %v956 = vld [vmem:[#allocation7 + $0x558] sm:$0xff]
        %v957 = vld [vmem:[#allocation7 + $0x560] sm:$0xff]
        %v958 = vld [vmem:[#allocation7 + $0x568] sm:$0xff]
        %v959 = vld [vmem:[#allocation7 + $0x570] sm:$0xff]
        %v960 = vld [vmem:[#allocation7 + $0x578] sm:$0xff]
        %v961 = vld [vmem:[#allocation7 + $0x580] sm:$0xff]
        %v962 = vld [vmem:[#allocation7 + $0x588] sm:$0xff]
        %v963 = vld [vmem:[#allocation7 + $0x590] sm:$0xff]
        %v964 = vld [vmem:[#allocation7 + $0x598] sm:$0xff]
        %v965 = vld [vmem:[#allocation7 + $0x5a0] sm:$0xff]
        %v966 = vld [vmem:[#allocation7 + $0x5a8] sm:$0xff]
        %v967 = vld [vmem:[#allocation7 + $0x5b0] sm:$0xff]
        %v968 = vld [vmem:[#allocation7 + $0x5b8] sm:$0xff]
        %v969 = vld [vmem:[#allocation7 + $0x5c0] sm:$0xff]
        %v970 = vld [vmem:[#allocation7 + $0x5c8] sm:$0xff]
        %v971 = vld [vmem:[#allocation7 + $0x5d0] sm:$0xff]
        %v972 = vld [vmem:[#allocation7 + $0x5d8] sm:$0xff]
        %v973 = vld [vmem:[#allocation7 + $0x5e0] sm:$0xff]
        %v974 = vld [vmem:[#allocation7 + $0x5e8] sm:$0xff]
        %v975 = vld [vmem:[#allocation7 + $0x5f0] sm:$0xff]
        %v976 = vld [vmem:[#allocation7 + $0x5f8] sm:$0xff]
        %v977 = vld [vmem:[#allocation7 + $0x600] sm:$0xff]
        %v978 = vld [vmem:[#allocation7 + $0x608] sm:$0xff]
        %v979 = vld [vmem:[#allocation7 + $0x610] sm:$0xff]
        %v980 = vld [vmem:[#allocation7 + $0x618] sm:$0xff]
        %v981 = vld [vmem:[#allocation7 + $0x620] sm:$0xff]
        %v982 = vld [vmem:[#allocation7 + $0x628] sm:$0xff]
        %v983 = vld [vmem:[#allocation7 + $0x630] sm:$0xff]
        %v984 = vld [vmem:[#allocation7 + $0x638] sm:$0xff]
        %v985 = vld [vmem:[#allocation7 + $0x640] sm:$0xff]
        %v986 = vld [vmem:[#allocation7 + $0x648] sm:$0xff]
        %v987 = vld [vmem:[#allocation7 + $0x650] sm:$0xff]
        %v988 = vld [vmem:[#allocation7 + $0x658] sm:$0xff]
        %v989 = vld [vmem:[#allocation7 + $0x660] sm:$0xff]
        %v990 = vld [vmem:[#allocation7 + $0x668] sm:$0xff]
        %v991 = vld [vmem:[#allocation7 + $0x670] sm:$0xff]
        %v992 = vld [vmem:[#allocation7 + $0x678] sm:$0xff]
        %v993 = vld [vmem:[#allocation7 + $0x680] sm:$0xff]
        %v994 = vld [vmem:[#allocation7 + $0x688] sm:$0xff]
        %v995 = vld [vmem:[#allocation7 + $0x690] sm:$0xff]
        %v996 = vld [vmem:[#allocation7 + $0x698] sm:$0xff]
        %v997 = vld [vmem:[#allocation7 + $0x6a0] sm:$0xff]
        %v998 = vld [vmem:[#allocation7 + $0x6a8] sm:$0xff]
        %v999 = vld [vmem:[#allocation7 + $0x6b0] sm:$0xff]
        %v1000 = vld [vmem:[#allocation7 + $0x6b8] sm:$0xff]
        %v1001 = vld [vmem:[#allocation7 + $0x6c0] sm:$0xff]
        %v1002 = vld [vmem:[#allocation7 + $0x6c8] sm:$0xff]
        %v1003 = vld [vmem:[#allocation7 + $0x6d0] sm:$0xff]
        %v1004 = vld [vmem:[#allocation7 + $0x6d8] sm:$0xff]
        %v1005 = vld [vmem:[#allocation7 + $0x6e0] sm:$0xff]
        %v1006 = vld [vmem:[#allocation7 + $0x6e8] sm:$0xff]
        %v1007 = vld [vmem:[#allocation7 + $0x6f0] sm:$0xff]
        %v1008 = vld [vmem:[#allocation7 + $0x6f8] sm:$0xff]
        %v1009 = vld [vmem:[#allocation7 + $0x700] sm:$0xff]
        %v1010 = vld [vmem:[#allocation7 + $0x708] sm:$0xff]
        %v1011 = vld [vmem:[#allocation7 + $0x710] sm:$0xff]
        %v1012 = vld [vmem:[#allocation7 + $0x718] sm:$0xff]
        %v1013 = vld [vmem:[#allocation7 + $0x720] sm:$0xff]
        %v1014 = vld [vmem:[#allocation7 + $0x728] sm:$0xff]
        %v1015 = vld [vmem:[#allocation7 + $0x730] sm:$0xff]
        %v1016 = vld [vmem:[#allocation7 + $0x738] sm:$0xff]
        %v1017 = vld [vmem:[#allocation7 + $0x740] sm:$0xff]
        %v1018 = vld [vmem:[#allocation7 + $0x748] sm:$0xff]
        %v1019 = vld [vmem:[#allocation7 + $0x750] sm:$0xff]
        %v1020 = vld [vmem:[#allocation7 + $0x758] sm:$0xff]
        %v1021 = vld [vmem:[#allocation7 + $0x760] sm:$0xff]
        %v1022 = vld [vmem:[#allocation7 + $0x768] sm:$0xff]
        %v1023 = vld [vmem:[#allocation7 + $0x770] sm:$0xff]
        %v1024 = vld [vmem:[#allocation7 + $0x778] sm:$0xff]
        %v1025 = vld [vmem:[#allocation7 + $0x780] sm:$0xff]
        %v1026 = vld [vmem:[#allocation7 + $0x788] sm:$0xff]
        %v1027 = vld [vmem:[#allocation7 + $0x790] sm:$0xff]
        %v1028 = vld [vmem:[#allocation7 + $0x798] sm:$0xff]
        %v1029 = vld [vmem:[#allocation7 + $0x7a0] sm:$0xff]
        %v1030 = vld [vmem:[#allocation7 + $0x7a8] sm:$0xff]
        %v1031 = vld [vmem:[#allocation7 + $0x7b0] sm:$0xff]
        %v1032 = vld [vmem:[#allocation7 + $0x7b8] sm:$0xff]
        %v1033 = vld [vmem:[#allocation7 + $0x7c0] sm:$0xff]
        %v1034 = vld [vmem:[#allocation7 + $0x7c8] sm:$0xff]
        %v1035 = vld [vmem:[#allocation7 + $0x7d0] sm:$0xff]
        %v1036 = vld [vmem:[#allocation7 + $0x7d8] sm:$0xff]
        %v1037 = vld [vmem:[#allocation7 + $0x7e0] sm:$0xff]
        %v1038 = vld [vmem:[#allocation7 + $0x7e8] sm:$0xff]
        %v1039 = vld [vmem:[#allocation7 + $0x7f0] sm:$0xff]
        %v1040 = vld [vmem:[#allocation7 + $0x7f8] sm:$0xff]
        %v1297 = vunpack.c.l.b16 %v785
        %v1298 = vunpack.c.h.b16 %v785
        %v1299 = vunpack.c.l.b16 %v786
        %v1300 = vunpack.c.h.b16 %v786
        %v1301 = vunpack.c.l.b16 %v787
        %v1302 = vunpack.c.h.b16 %v787
        %v1303 = vunpack.c.l.b16 %v788
        %v1304 = vunpack.c.h.b16 %v788
        %v1305 = vunpack.c.l.b16 %v789
        %v1306 = vunpack.c.h.b16 %v789
        %v1307 = vunpack.c.l.b16 %v790
        %v1308 = vunpack.c.h.b16 %v790
        %v1309 = vunpack.c.l.b16 %v791
        %v1310 = vunpack.c.h.b16 %v791
        %v1311 = vunpack.c.l.b16 %v792
        %v1312 = vunpack.c.h.b16 %v792
        %v1313 = vunpack.c.l.b16 %v793
        %v1314 = vunpack.c.h.b16 %v793
        %v1315 = vunpack.c.l.b16 %v794
        %v1316 = vunpack.c.h.b16 %v794
        %v1317 = vunpack.c.l.b16 %v795
        %v1318 = vunpack.c.h.b16 %v795
        %v1319 = vunpack.c.l.b16 %v796
        %v1320 = vunpack.c.h.b16 %v796
        %v1321 = vunpack.c.l.b16 %v797
        %v1322 = vunpack.c.h.b16 %v797
        %v1323 = vunpack.c.l.b16 %v798
        %v1324 = vunpack.c.h.b16 %v798
        %v1325 = vunpack.c.l.b16 %v799
        %v1326 = vunpack.c.h.b16 %v799
        %v1327 = vunpack.c.l.b16 %v800
        %v1328 = vunpack.c.h.b16 %v800
        %v1329 = vunpack.c.l.b16 %v801
        %v1330 = vunpack.c.h.b16 %v801
        %v1331 = vunpack.c.l.b16 %v802
        %v1332 = vunpack.c.h.b16 %v802
        %v1333 = vunpack.c.l.b16 %v803
        %v1334 = vunpack.c.h.b16 %v803
        %v1335 = vunpack.c.l.b16 %v804
        %v1336 = vunpack.c.h.b16 %v804
        %v1337 = vunpack.c.l.b16 %v805
        %v1338 = vunpack.c.h.b16 %v805
        %v1339 = vunpack.c.l.b16 %v806
        %v1340 = vunpack.c.h.b16 %v806
        %v1341 = vunpack.c.l.b16 %v807
        %v1342 = vunpack.c.h.b16 %v807
        %v1343 = vunpack.c.l.b16 %v808
        %v1344 = vunpack.c.h.b16 %v808
        %v1345 = vunpack.c.l.b16 %v809
        %v1346 = vunpack.c.h.b16 %v809
        %v1347 = vunpack.c.l.b16 %v810
        %v1348 = vunpack.c.h.b16 %v810
        %v1349 = vunpack.c.l.b16 %v811
        %v1350 = vunpack.c.h.b16 %v811
        %v1351 = vunpack.c.l.b16 %v812
        %v1352 = vunpack.c.h.b16 %v812
        %v1353 = vunpack.c.l.b16 %v813
        %v1354 = vunpack.c.h.b16 %v813
        %v1355 = vunpack.c.l.b16 %v814
        %v1356 = vunpack.c.h.b16 %v814
        %v1357 = vunpack.c.l.b16 %v815
        %v1358 = vunpack.c.h.b16 %v815
        %v1359 = vunpack.c.l.b16 %v816
        %v1360 = vunpack.c.h.b16 %v816
        %v1361 = vunpack.c.l.b16 %v817
        %v1362 = vunpack.c.h.b16 %v817
        %v1363 = vunpack.c.l.b16 %v818
        %v1364 = vunpack.c.h.b16 %v818
        %v1365 = vunpack.c.l.b16 %v819
        %v1366 = vunpack.c.h.b16 %v819
        %v1367 = vunpack.c.l.b16 %v820
        %v1368 = vunpack.c.h.b16 %v820
        %v1369 = vunpack.c.l.b16 %v821
        %v1370 = vunpack.c.h.b16 %v821
        %v1371 = vunpack.c.l.b16 %v822
        %v1372 = vunpack.c.h.b16 %v822
        %v1373 = vunpack.c.l.b16 %v823
        %v1374 = vunpack.c.h.b16 %v823
        %v1375 = vunpack.c.l.b16 %v824
        %v1376 = vunpack.c.h.b16 %v824
        %v1377 = vunpack.c.l.b16 %v825
        %v1378 = vunpack.c.h.b16 %v825
        %v1379 = vunpack.c.l.b16 %v826
        %v1380 = vunpack.c.h.b16 %v826
        %v1381 = vunpack.c.l.b16 %v827
        %v1382 = vunpack.c.h.b16 %v827
        %v1383 = vunpack.c.l.b16 %v828
        %v1384 = vunpack.c.h.b16 %v828
        %v1385 = vunpack.c.l.b16 %v829
        %v1386 = vunpack.c.h.b16 %v829
        %v1387 = vunpack.c.l.b16 %v830
        %v1388 = vunpack.c.h.b16 %v830
        %v1389 = vunpack.c.l.b16 %v831
        %v1390 = vunpack.c.h.b16 %v831
        %v1391 = vunpack.c.l.b16 %v832
        %v1392 = vunpack.c.h.b16 %v832
        %v1393 = vunpack.c.l.b16 %v833
        %v1394 = vunpack.c.h.b16 %v833
        %v1395 = vunpack.c.l.b16 %v834
        %v1396 = vunpack.c.h.b16 %v834
        %v1397 = vunpack.c.l.b16 %v835
        %v1398 = vunpack.c.h.b16 %v835
        %v1399 = vunpack.c.l.b16 %v836
        %v1400 = vunpack.c.h.b16 %v836
        %v1401 = vunpack.c.l.b16 %v837
        %v1402 = vunpack.c.h.b16 %v837
        %v1403 = vunpack.c.l.b16 %v838
        %v1404 = vunpack.c.h.b16 %v838
        %v1405 = vunpack.c.l.b16 %v839
        %v1406 = vunpack.c.h.b16 %v839
        %v1407 = vunpack.c.l.b16 %v840
        %v1408 = vunpack.c.h.b16 %v840
        %v1409 = vunpack.c.l.b16 %v841
        %v1410 = vunpack.c.h.b16 %v841
        %v1411 = vunpack.c.l.b16 %v842
        %v1412 = vunpack.c.h.b16 %v842
        %v1413 = vunpack.c.l.b16 %v843
        %v1414 = vunpack.c.h.b16 %v843
        %v1415 = vunpack.c.l.b16 %v844
        %v1416 = vunpack.c.h.b16 %v844
        %v1417 = vunpack.c.l.b16 %v845
        %v1418 = vunpack.c.h.b16 %v845
        %v1419 = vunpack.c.l.b16 %v846
        %v1420 = vunpack.c.h.b16 %v846
        %v1421 = vunpack.c.l.b16 %v847
        %v1422 = vunpack.c.h.b16 %v847
        %v1423 = vunpack.c.l.b16 %v848
        %v1424 = vunpack.c.h.b16 %v848
        %v1425 = vunpack.c.l.b16 %v849
        %v1426 = vunpack.c.h.b16 %v849
        %v1427 = vunpack.c.l.b16 %v850
        %v1428 = vunpack.c.h.b16 %v850
        %v1429 = vunpack.c.l.b16 %v851
        %v1430 = vunpack.c.h.b16 %v851
        %v1431 = vunpack.c.l.b16 %v852
        %v1432 = vunpack.c.h.b16 %v852
        %v1433 = vunpack.c.l.b16 %v853
        %v1434 = vunpack.c.h.b16 %v853
        %v1435 = vunpack.c.l.b16 %v854
        %v1436 = vunpack.c.h.b16 %v854
        %v1437 = vunpack.c.l.b16 %v855
        %v1438 = vunpack.c.h.b16 %v855
        %v1439 = vunpack.c.l.b16 %v856
        %v1440 = vunpack.c.h.b16 %v856
        %v1441 = vunpack.c.l.b16 %v857
        %v1442 = vunpack.c.h.b16 %v857
        %v1443 = vunpack.c.l.b16 %v858
        %v1444 = vunpack.c.h.b16 %v858
        %v1445 = vunpack.c.l.b16 %v859
        %v1446 = vunpack.c.h.b16 %v859
        %v1447 = vunpack.c.l.b16 %v860
        %v1448 = vunpack.c.h.b16 %v860
        %v1449 = vunpack.c.l.b16 %v861
        %v1450 = vunpack.c.h.b16 %v861
        %v1451 = vunpack.c.l.b16 %v862
        %v1452 = vunpack.c.h.b16 %v862
        %v1453 = vunpack.c.l.b16 %v863
        %v1454 = vunpack.c.h.b16 %v863
        %v1455 = vunpack.c.l.b16 %v864
        %v1456 = vunpack.c.h.b16 %v864
        %v1457 = vunpack.c.l.b16 %v865
        %v1458 = vunpack.c.h.b16 %v865
        %v1459 = vunpack.c.l.b16 %v866
        %v1460 = vunpack.c.h.b16 %v866
        %v1461 = vunpack.c.l.b16 %v867
        %v1462 = vunpack.c.h.b16 %v867
        %v1463 = vunpack.c.l.b16 %v868
        %v1464 = vunpack.c.h.b16 %v868
        %v1465 = vunpack.c.l.b16 %v869
        %v1466 = vunpack.c.h.b16 %v869
        %v1467 = vunpack.c.l.b16 %v870
        %v1468 = vunpack.c.h.b16 %v870
        %v1469 = vunpack.c.l.b16 %v871
        %v1470 = vunpack.c.h.b16 %v871
        %v1471 = vunpack.c.l.b16 %v872
        %v1472 = vunpack.c.h.b16 %v872
        %v1473 = vunpack.c.l.b16 %v873
        %v1474 = vunpack.c.h.b16 %v873
        %v1475 = vunpack.c.l.b16 %v874
        %v1476 = vunpack.c.h.b16 %v874
        %v1477 = vunpack.c.l.b16 %v875
        %v1478 = vunpack.c.h.b16 %v875
        %v1479 = vunpack.c.l.b16 %v876
        %v1480 = vunpack.c.h.b16 %v876
        %v1481 = vunpack.c.l.b16 %v877
        %v1482 = vunpack.c.h.b16 %v877
        %v1483 = vunpack.c.l.b16 %v878
        %v1484 = vunpack.c.h.b16 %v878
        %v1485 = vunpack.c.l.b16 %v879
        %v1486 = vunpack.c.h.b16 %v879
        %v1487 = vunpack.c.l.b16 %v880
        %v1488 = vunpack.c.h.b16 %v880
        %v1489 = vunpack.c.l.b16 %v881
        %v1490 = vunpack.c.h.b16 %v881
        %v1491 = vunpack.c.l.b16 %v882
        %v1492 = vunpack.c.h.b16 %v882
        %v1493 = vunpack.c.l.b16 %v883
        %v1494 = vunpack.c.h.b16 %v883
        %v1495 = vunpack.c.l.b16 %v884
        %v1496 = vunpack.c.h.b16 %v884
        %v1497 = vunpack.c.l.b16 %v885
        %v1498 = vunpack.c.h.b16 %v885
        %v1499 = vunpack.c.l.b16 %v886
        %v1500 = vunpack.c.h.b16 %v886
        %v1501 = vunpack.c.l.b16 %v887
        %v1502 = vunpack.c.h.b16 %v887
        %v1503 = vunpack.c.l.b16 %v888
        %v1504 = vunpack.c.h.b16 %v888
        %v1505 = vunpack.c.l.b16 %v889
        %v1506 = vunpack.c.h.b16 %v889
        %v1507 = vunpack.c.l.b16 %v890
        %v1508 = vunpack.c.h.b16 %v890
        %v1509 = vunpack.c.l.b16 %v891
        %v1510 = vunpack.c.h.b16 %v891
        %v1511 = vunpack.c.l.b16 %v892
        %v1512 = vunpack.c.h.b16 %v892
        %v1513 = vunpack.c.l.b16 %v893
        %v1514 = vunpack.c.h.b16 %v893
        %v1515 = vunpack.c.l.b16 %v894
        %v1516 = vunpack.c.h.b16 %v894
        %v1517 = vunpack.c.l.b16 %v895
        %v1518 = vunpack.c.h.b16 %v895
        %v1519 = vunpack.c.l.b16 %v896
        %v1520 = vunpack.c.h.b16 %v896
        %v1521 = vunpack.c.l.b16 %v897
        %v1522 = vunpack.c.h.b16 %v897
        %v1523 = vunpack.c.l.b16 %v898
        %v1524 = vunpack.c.h.b16 %v898
        %v1525 = vunpack.c.l.b16 %v899
        %v1526 = vunpack.c.h.b16 %v899
        %v1527 = vunpack.c.l.b16 %v900
        %v1528 = vunpack.c.h.b16 %v900
        %v1529 = vunpack.c.l.b16 %v901
        %v1530 = vunpack.c.h.b16 %v901
        %v1531 = vunpack.c.l.b16 %v902
        %v1532 = vunpack.c.h.b16 %v902
        %v1533 = vunpack.c.l.b16 %v903
        %v1534 = vunpack.c.h.b16 %v903
        %v1535 = vunpack.c.l.b16 %v904
        %v1536 = vunpack.c.h.b16 %v904
        %v1537 = vunpack.c.l.b16 %v905
        %v1538 = vunpack.c.h.b16 %v905
        %v1539 = vunpack.c.l.b16 %v906
        %v1540 = vunpack.c.h.b16 %v906
        %v1541 = vunpack.c.l.b16 %v907
        %v1542 = vunpack.c.h.b16 %v907
        %v1543 = vunpack.c.l.b16 %v908
        %v1544 = vunpack.c.h.b16 %v908
        %v1545 = vunpack.c.l.b16 %v909
        %v1546 = vunpack.c.h.b16 %v909
        %v1547 = vunpack.c.l.b16 %v910
        %v1548 = vunpack.c.h.b16 %v910
        %v1549 = vunpack.c.l.b16 %v911
        %v1550 = vunpack.c.h.b16 %v911
        %v1551 = vunpack.c.l.b16 %v912
        %v1552 = vunpack.c.h.b16 %v912
        %v1553 = vunpack.c.l.b16 %v913
        %v1554 = vunpack.c.h.b16 %v913
        %v1555 = vunpack.c.l.b16 %v914
        %v1556 = vunpack.c.h.b16 %v914
        %v1557 = vunpack.c.l.b16 %v915
        %v1558 = vunpack.c.h.b16 %v915
        %v1559 = vunpack.c.l.b16 %v916
        %v1560 = vunpack.c.h.b16 %v916
        %v1561 = vunpack.c.l.b16 %v917
        %v1562 = vunpack.c.h.b16 %v917
        %v1563 = vunpack.c.l.b16 %v918
        %v1564 = vunpack.c.h.b16 %v918
        %v1565 = vunpack.c.l.b16 %v919
        %v1566 = vunpack.c.h.b16 %v919
        %v1567 = vunpack.c.l.b16 %v920
        %v1568 = vunpack.c.h.b16 %v920
        %v1569 = vunpack.c.l.b16 %v921
        %v1570 = vunpack.c.h.b16 %v921
        %v1571 = vunpack.c.l.b16 %v922
        %v1572 = vunpack.c.h.b16 %v922
        %v1573 = vunpack.c.l.b16 %v923
        %v1574 = vunpack.c.h.b16 %v923
        %v1575 = vunpack.c.l.b16 %v924
        %v1576 = vunpack.c.h.b16 %v924
        %v1577 = vunpack.c.l.b16 %v925
        %v1578 = vunpack.c.h.b16 %v925
        %v1579 = vunpack.c.l.b16 %v926
        %v1580 = vunpack.c.h.b16 %v926
        %v1581 = vunpack.c.l.b16 %v927
        %v1582 = vunpack.c.h.b16 %v927
        %v1583 = vunpack.c.l.b16 %v928
        %v1584 = vunpack.c.h.b16 %v928
        %v1585 = vunpack.c.l.b16 %v929
        %v1586 = vunpack.c.h.b16 %v929
        %v1587 = vunpack.c.l.b16 %v930
        %v1588 = vunpack.c.h.b16 %v930
        %v1589 = vunpack.c.l.b16 %v931
        %v1590 = vunpack.c.h.b16 %v931
        %v1591 = vunpack.c.l.b16 %v932
        %v1592 = vunpack.c.h.b16 %v932
        %v1593 = vunpack.c.l.b16 %v933
        %v1594 = vunpack.c.h.b16 %v933
        %v1595 = vunpack.c.l.b16 %v934
        %v1596 = vunpack.c.h.b16 %v934
        %v1597 = vunpack.c.l.b16 %v935
        %v1598 = vunpack.c.h.b16 %v935
        %v1599 = vunpack.c.l.b16 %v936
        %v1600 = vunpack.c.h.b16 %v936
        %v1601 = vunpack.c.l.b16 %v937
        %v1602 = vunpack.c.h.b16 %v937
        %v1603 = vunpack.c.l.b16 %v938
        %v1604 = vunpack.c.h.b16 %v938
        %v1605 = vunpack.c.l.b16 %v939
        %v1606 = vunpack.c.h.b16 %v939
        %v1607 = vunpack.c.l.b16 %v940
        %v1608 = vunpack.c.h.b16 %v940
        %v1609 = vunpack.c.l.b16 %v941
        %v1610 = vunpack.c.h.b16 %v941
        %v1611 = vunpack.c.l.b16 %v942
        %v1612 = vunpack.c.h.b16 %v942
        %v1613 = vunpack.c.l.b16 %v943
        %v1614 = vunpack.c.h.b16 %v943
        %v1615 = vunpack.c.l.b16 %v944
        %v1616 = vunpack.c.h.b16 %v944
        %v1617 = vunpack.c.l.b16 %v945
        %v1618 = vunpack.c.h.b16 %v945
        %v1619 = vunpack.c.l.b16 %v946
        %v1620 = vunpack.c.h.b16 %v946
        %v1621 = vunpack.c.l.b16 %v947
        %v1622 = vunpack.c.h.b16 %v947
        %v1623 = vunpack.c.l.b16 %v948
        %v1624 = vunpack.c.h.b16 %v948
        %v1625 = vunpack.c.l.b16 %v949
        %v1626 = vunpack.c.h.b16 %v949
        %v1627 = vunpack.c.l.b16 %v950
        %v1628 = vunpack.c.h.b16 %v950
        %v1629 = vunpack.c.l.b16 %v951
        %v1630 = vunpack.c.h.b16 %v951
        %v1631 = vunpack.c.l.b16 %v952
        %v1632 = vunpack.c.h.b16 %v952
        %v1633 = vunpack.c.l.b16 %v953
        %v1634 = vunpack.c.h.b16 %v953
        %v1635 = vunpack.c.l.b16 %v954
        %v1636 = vunpack.c.h.b16 %v954
        %v1637 = vunpack.c.l.b16 %v955
        %v1638 = vunpack.c.h.b16 %v955
        %v1639 = vunpack.c.l.b16 %v956
        %v1640 = vunpack.c.h.b16 %v956
        %v1641 = vunpack.c.l.b16 %v957
        %v1642 = vunpack.c.h.b16 %v957
        %v1643 = vunpack.c.l.b16 %v958
        %v1644 = vunpack.c.h.b16 %v958
        %v1645 = vunpack.c.l.b16 %v959
        %v1646 = vunpack.c.h.b16 %v959
        %v1647 = vunpack.c.l.b16 %v960
        %v1648 = vunpack.c.h.b16 %v960
        %v1649 = vunpack.c.l.b16 %v961
        %v1650 = vunpack.c.h.b16 %v961
        %v1651 = vunpack.c.l.b16 %v962
        %v1652 = vunpack.c.h.b16 %v962
        %v1653 = vunpack.c.l.b16 %v963
        %v1654 = vunpack.c.h.b16 %v963
        %v1655 = vunpack.c.l.b16 %v964
        %v1656 = vunpack.c.h.b16 %v964
        %v1657 = vunpack.c.l.b16 %v965
        %v1658 = vunpack.c.h.b16 %v965
        %v1659 = vunpack.c.l.b16 %v966
        %v1660 = vunpack.c.h.b16 %v966
        %v1661 = vunpack.c.l.b16 %v967
        %v1662 = vunpack.c.h.b16 %v967
        %v1663 = vunpack.c.l.b16 %v968
        %v1664 = vunpack.c.h.b16 %v968
        %v1665 = vunpack.c.l.b16 %v969
        %v1666 = vunpack.c.h.b16 %v969
        %v1667 = vunpack.c.l.b16 %v970
        %v1668 = vunpack.c.h.b16 %v970
        %v1669 = vunpack.c.l.b16 %v971
        %v1670 = vunpack.c.h.b16 %v971
        %v1671 = vunpack.c.l.b16 %v972
        %v1672 = vunpack.c.h.b16 %v972
        %v1673 = vunpack.c.l.b16 %v973
        %v1674 = vunpack.c.h.b16 %v973
        %v1675 = vunpack.c.l.b16 %v974
        %v1676 = vunpack.c.h.b16 %v974
        %v1677 = vunpack.c.l.b16 %v975
        %v1678 = vunpack.c.h.b16 %v975
        %v1679 = vunpack.c.l.b16 %v976
        %v1680 = vunpack.c.h.b16 %v976
        %v1681 = vunpack.c.l.b16 %v977
        %v1682 = vunpack.c.h.b16 %v977
        %v1683 = vunpack.c.l.b16 %v978
        %v1684 = vunpack.c.h.b16 %v978
        %v1685 = vunpack.c.l.b16 %v979
        %v1686 = vunpack.c.h.b16 %v979
        %v1687 = vunpack.c.l.b16 %v980
        %v1688 = vunpack.c.h.b16 %v980
        %v1689 = vunpack.c.l.b16 %v981
        %v1690 = vunpack.c.h.b16 %v981
        %v1691 = vunpack.c.l.b16 %v982
        %v1692 = vunpack.c.h.b16 %v982
        %v1693 = vunpack.c.l.b16 %v983
        %v1694 = vunpack.c.h.b16 %v983
        %v1695 = vunpack.c.l.b16 %v984
        %v1696 = vunpack.c.h.b16 %v984
        %v1697 = vunpack.c.l.b16 %v985
        %v1698 = vunpack.c.h.b16 %v985
        %v1699 = vunpack.c.l.b16 %v986
        %v1700 = vunpack.c.h.b16 %v986
        %v1701 = vunpack.c.l.b16 %v987
        %v1702 = vunpack.c.h.b16 %v987
        %v1703 = vunpack.c.l.b16 %v988
        %v1704 = vunpack.c.h.b16 %v988
        %v1705 = vunpack.c.l.b16 %v989
        %v1706 = vunpack.c.h.b16 %v989
        %v1707 = vunpack.c.l.b16 %v990
        %v1708 = vunpack.c.h.b16 %v990
        %v1709 = vunpack.c.l.b16 %v991
        %v1710 = vunpack.c.h.b16 %v991
        %v1711 = vunpack.c.l.b16 %v992
        %v1712 = vunpack.c.h.b16 %v992
        %v1713 = vunpack.c.l.b16 %v993
        %v1714 = vunpack.c.h.b16 %v993
        %v1715 = vunpack.c.l.b16 %v994
        %v1716 = vunpack.c.h.b16 %v994
        %v1717 = vunpack.c.l.b16 %v995
        %v1718 = vunpack.c.h.b16 %v995
        %v1719 = vunpack.c.l.b16 %v996
        %v1720 = vunpack.c.h.b16 %v996
        %v1721 = vunpack.c.l.b16 %v997
        %v1722 = vunpack.c.h.b16 %v997
        %v1723 = vunpack.c.l.b16 %v998
        %v1724 = vunpack.c.h.b16 %v998
        %v1725 = vunpack.c.l.b16 %v999
        %v1726 = vunpack.c.h.b16 %v999
        %v1727 = vunpack.c.l.b16 %v1000
        %v1728 = vunpack.c.h.b16 %v1000
        %v1729 = vunpack.c.l.b16 %v1001
        %v1730 = vunpack.c.h.b16 %v1001
        %v1731 = vunpack.c.l.b16 %v1002
        %v1732 = vunpack.c.h.b16 %v1002
        %v1733 = vunpack.c.l.b16 %v1003
        %v1734 = vunpack.c.h.b16 %v1003
        %v1735 = vunpack.c.l.b16 %v1004
        %v1736 = vunpack.c.h.b16 %v1004
        %v1737 = vunpack.c.l.b16 %v1005
        %v1738 = vunpack.c.h.b16 %v1005
        %v1739 = vunpack.c.l.b16 %v1006
        %v1740 = vunpack.c.h.b16 %v1006
        %v1741 = vunpack.c.l.b16 %v1007
        %v1742 = vunpack.c.h.b16 %v1007
        %v1743 = vunpack.c.l.b16 %v1008
        %v1744 = vunpack.c.h.b16 %v1008
        %v1745 = vunpack.c.l.b16 %v1009
        %v1746 = vunpack.c.h.b16 %v1009
        %v1747 = vunpack.c.l.b16 %v1010
        %v1748 = vunpack.c.h.b16 %v1010
        %v1749 = vunpack.c.l.b16 %v1011
        %v1750 = vunpack.c.h.b16 %v1011
        %v1751 = vunpack.c.l.b16 %v1012
        %v1752 = vunpack.c.h.b16 %v1012
        %v1753 = vunpack.c.l.b16 %v1013
        %v1754 = vunpack.c.h.b16 %v1013
        %v1755 = vunpack.c.l.b16 %v1014
        %v1756 = vunpack.c.h.b16 %v1014
        %v1757 = vunpack.c.l.b16 %v1015
        %v1758 = vunpack.c.h.b16 %v1015
        %v1759 = vunpack.c.l.b16 %v1016
        %v1760 = vunpack.c.h.b16 %v1016
        %v1761 = vunpack.c.l.b16 %v1017
        %v1762 = vunpack.c.h.b16 %v1017
        %v1763 = vunpack.c.l.b16 %v1018
        %v1764 = vunpack.c.h.b16 %v1018
        %v1765 = vunpack.c.l.b16 %v1019
        %v1766 = vunpack.c.h.b16 %v1019
        %v1767 = vunpack.c.l.b16 %v1020
        %v1768 = vunpack.c.h.b16 %v1020
        %v1769 = vunpack.c.l.b16 %v1021
        %v1770 = vunpack.c.h.b16 %v1021
        %v1771 = vunpack.c.l.b16 %v1022
        %v1772 = vunpack.c.h.b16 %v1022
        %v1773 = vunpack.c.l.b16 %v1023
        %v1774 = vunpack.c.h.b16 %v1023
        %v1775 = vunpack.c.l.b16 %v1024
        %v1776 = vunpack.c.h.b16 %v1024
        %v1777 = vunpack.c.l.b16 %v1025
        %v1778 = vunpack.c.h.b16 %v1025
        %v1779 = vunpack.c.l.b16 %v1026
        %v1780 = vunpack.c.h.b16 %v1026
        %v1781 = vunpack.c.l.b16 %v1027
        %v1782 = vunpack.c.h.b16 %v1027
        %v1783 = vunpack.c.l.b16 %v1028
        %v1784 = vunpack.c.h.b16 %v1028
        %v1785 = vunpack.c.l.b16 %v1029
        %v1786 = vunpack.c.h.b16 %v1029
        %v1787 = vunpack.c.l.b16 %v1030
        %v1788 = vunpack.c.h.b16 %v1030
        %v1789 = vunpack.c.l.b16 %v1031
        %v1790 = vunpack.c.h.b16 %v1031
        %v1791 = vunpack.c.l.b16 %v1032
        %v1792 = vunpack.c.h.b16 %v1032
        %v1793 = vunpack.c.l.b16 %v1033
        %v1794 = vunpack.c.h.b16 %v1033
        %v1795 = vunpack.c.l.b16 %v1034
        %v1796 = vunpack.c.h.b16 %v1034
        %v1797 = vunpack.c.l.b16 %v1035
        %v1798 = vunpack.c.h.b16 %v1035
        %v1799 = vunpack.c.l.b16 %v1036
        %v1800 = vunpack.c.h.b16 %v1036
        %v1801 = vunpack.c.l.b16 %v1037
        %v1802 = vunpack.c.h.b16 %v1037
        %v1803 = vunpack.c.l.b16 %v1038
        %v1804 = vunpack.c.h.b16 %v1038
        %v1805 = vunpack.c.l.b16 %v1039
        %v1806 = vunpack.c.h.b16 %v1039
        %v1807 = vunpack.c.l.b16 %v1040
        %v1808 = vunpack.c.h.b16 %v1040
        %v1809 = vpack.c.b16 %v1301, %v1297
        %v1810 = vpack.c.b16 %v1302, %v1298
        %v1811 = vpack.c.b16 %v1303, %v1299
        %v1812 = vpack.c.b16 %v1304, %v1300
        %v1813 = vpack.c.b16 %v1309, %v1305
        %v1814 = vpack.c.b16 %v1310, %v1306
        %v1815 = vpack.c.b16 %v1311, %v1307
        %v1816 = vpack.c.b16 %v1312, %v1308
        %v1817 = vpack.c.b16 %v1317, %v1313
        %v1818 = vpack.c.b16 %v1318, %v1314
        %v1819 = vpack.c.b16 %v1319, %v1315
        %v1820 = vpack.c.b16 %v1320, %v1316
        %v1821 = vpack.c.b16 %v1325, %v1321
        %v1822 = vpack.c.b16 %v1326, %v1322
        %v1823 = vpack.c.b16 %v1327, %v1323
        %v1824 = vpack.c.b16 %v1328, %v1324
        %v1825 = vpack.c.b16 %v1333, %v1329
        %v1826 = vpack.c.b16 %v1334, %v1330
        %v1827 = vpack.c.b16 %v1335, %v1331
        %v1828 = vpack.c.b16 %v1336, %v1332
        %v1829 = vpack.c.b16 %v1341, %v1337
        %v1830 = vpack.c.b16 %v1342, %v1338
        %v1831 = vpack.c.b16 %v1343, %v1339
        %v1832 = vpack.c.b16 %v1344, %v1340
        %v1833 = vpack.c.b16 %v1349, %v1345
        %v1834 = vpack.c.b16 %v1350, %v1346
        %v1835 = vpack.c.b16 %v1351, %v1347
        %v1836 = vpack.c.b16 %v1352, %v1348
        %v1837 = vpack.c.b16 %v1357, %v1353
        %v1838 = vpack.c.b16 %v1358, %v1354
        %v1839 = vpack.c.b16 %v1359, %v1355
        %v1840 = vpack.c.b16 %v1360, %v1356
        %v1841 = vpack.c.b16 %v1365, %v1361
        %v1842 = vpack.c.b16 %v1366, %v1362
        %v1843 = vpack.c.b16 %v1367, %v1363
        %v1844 = vpack.c.b16 %v1368, %v1364
        %v1845 = vpack.c.b16 %v1373, %v1369
        %v1846 = vpack.c.b16 %v1374, %v1370
        %v1847 = vpack.c.b16 %v1375, %v1371
        %v1848 = vpack.c.b16 %v1376, %v1372
        %v1849 = vpack.c.b16 %v1381, %v1377
        %v1850 = vpack.c.b16 %v1382, %v1378
        %v1851 = vpack.c.b16 %v1383, %v1379
        %v1852 = vpack.c.b16 %v1384, %v1380
        %v1853 = vpack.c.b16 %v1389, %v1385
        %v1854 = vpack.c.b16 %v1390, %v1386
        %v1855 = vpack.c.b16 %v1391, %v1387
        %v1856 = vpack.c.b16 %v1392, %v1388
        %v1857 = vpack.c.b16 %v1397, %v1393
        %v1858 = vpack.c.b16 %v1398, %v1394
        %v1859 = vpack.c.b16 %v1399, %v1395
        %v1860 = vpack.c.b16 %v1400, %v1396
        %v1861 = vpack.c.b16 %v1405, %v1401
        %v1862 = vpack.c.b16 %v1406, %v1402
        %v1863 = vpack.c.b16 %v1407, %v1403
        %v1864 = vpack.c.b16 %v1408, %v1404
        %v1865 = vpack.c.b16 %v1413, %v1409
        %v1866 = vpack.c.b16 %v1414, %v1410
        %v1867 = vpack.c.b16 %v1415, %v1411
        %v1868 = vpack.c.b16 %v1416, %v1412
        %v1869 = vpack.c.b16 %v1421, %v1417
        %v1870 = vpack.c.b16 %v1422, %v1418
        %v1871 = vpack.c.b16 %v1423, %v1419
        %v1872 = vpack.c.b16 %v1424, %v1420
        %v1873 = vpack.c.b16 %v1429, %v1425
        %v1874 = vpack.c.b16 %v1430, %v1426
        %v1875 = vpack.c.b16 %v1431, %v1427
        %v1876 = vpack.c.b16 %v1432, %v1428
        %v1877 = vpack.c.b16 %v1437, %v1433
        %v1878 = vpack.c.b16 %v1438, %v1434
        %v1879 = vpack.c.b16 %v1439, %v1435
        %v1880 = vpack.c.b16 %v1440, %v1436
        %v1881 = vpack.c.b16 %v1445, %v1441
        %v1882 = vpack.c.b16 %v1446, %v1442
        %v1883 = vpack.c.b16 %v1447, %v1443
        %v1884 = vpack.c.b16 %v1448, %v1444
        %v1885 = vpack.c.b16 %v1453, %v1449
        %v1886 = vpack.c.b16 %v1454, %v1450
        %v1887 = vpack.c.b16 %v1455, %v1451
        %v1888 = vpack.c.b16 %v1456, %v1452
        %v1889 = vpack.c.b16 %v1461, %v1457
        %v1890 = vpack.c.b16 %v1462, %v1458
        %v1891 = vpack.c.b16 %v1463, %v1459
        %v1892 = vpack.c.b16 %v1464, %v1460
        %v1893 = vpack.c.b16 %v1469, %v1465
        %v1894 = vpack.c.b16 %v1470, %v1466
        %v1895 = vpack.c.b16 %v1471, %v1467
        %v1896 = vpack.c.b16 %v1472, %v1468
        %v1897 = vpack.c.b16 %v1477, %v1473
        %v1898 = vpack.c.b16 %v1478, %v1474
        %v1899 = vpack.c.b16 %v1479, %v1475
        %v1900 = vpack.c.b16 %v1480, %v1476
        %v1901 = vpack.c.b16 %v1485, %v1481
        %v1902 = vpack.c.b16 %v1486, %v1482
        %v1903 = vpack.c.b16 %v1487, %v1483
        %v1904 = vpack.c.b16 %v1488, %v1484
        %v1905 = vpack.c.b16 %v1493, %v1489
        %v1906 = vpack.c.b16 %v1494, %v1490
        %v1907 = vpack.c.b16 %v1495, %v1491
        %v1908 = vpack.c.b16 %v1496, %v1492
        %v1909 = vpack.c.b16 %v1501, %v1497
        %v1910 = vpack.c.b16 %v1502, %v1498
        %v1911 = vpack.c.b16 %v1503, %v1499
        %v1912 = vpack.c.b16 %v1504, %v1500
        %v1913 = vpack.c.b16 %v1509, %v1505
        %v1914 = vpack.c.b16 %v1510, %v1506
        %v1915 = vpack.c.b16 %v1511, %v1507
        %v1916 = vpack.c.b16 %v1512, %v1508
        %v1917 = vpack.c.b16 %v1517, %v1513
        %v1918 = vpack.c.b16 %v1518, %v1514
        %v1919 = vpack.c.b16 %v1519, %v1515
        %v1920 = vpack.c.b16 %v1520, %v1516
        %v1921 = vpack.c.b16 %v1525, %v1521
        %v1922 = vpack.c.b16 %v1526, %v1522
        %v1923 = vpack.c.b16 %v1527, %v1523
        %v1924 = vpack.c.b16 %v1528, %v1524
        %v1925 = vpack.c.b16 %v1533, %v1529
        %v1926 = vpack.c.b16 %v1534, %v1530
        %v1927 = vpack.c.b16 %v1535, %v1531
        %v1928 = vpack.c.b16 %v1536, %v1532
        %v1929 = vpack.c.b16 %v1541, %v1537
        %v1930 = vpack.c.b16 %v1542, %v1538
        %v1931 = vpack.c.b16 %v1543, %v1539
        %v1932 = vpack.c.b16 %v1544, %v1540
        %v1933 = vpack.c.b16 %v1549, %v1545
        %v1934 = vpack.c.b16 %v1550, %v1546
        %v1935 = vpack.c.b16 %v1551, %v1547
        %v1936 = vpack.c.b16 %v1552, %v1548
        %v1937 = vpack.c.b16 %v1557, %v1553
        %v1938 = vpack.c.b16 %v1558, %v1554
        %v1939 = vpack.c.b16 %v1559, %v1555
        %v1940 = vpack.c.b16 %v1560, %v1556
        %v1941 = vpack.c.b16 %v1565, %v1561
        %v1942 = vpack.c.b16 %v1566, %v1562
        %v1943 = vpack.c.b16 %v1567, %v1563
        %v1944 = vpack.c.b16 %v1568, %v1564
        %v1945 = vpack.c.b16 %v1573, %v1569
        %v1946 = vpack.c.b16 %v1574, %v1570
        %v1947 = vpack.c.b16 %v1575, %v1571
        %v1948 = vpack.c.b16 %v1576, %v1572
        %v1949 = vpack.c.b16 %v1581, %v1577
        %v1950 = vpack.c.b16 %v1582, %v1578
        %v1951 = vpack.c.b16 %v1583, %v1579
        %v1952 = vpack.c.b16 %v1584, %v1580
        %v1953 = vpack.c.b16 %v1589, %v1585
        %v1954 = vpack.c.b16 %v1590, %v1586
        %v1955 = vpack.c.b16 %v1591, %v1587
        %v1956 = vpack.c.b16 %v1592, %v1588
        %v1957 = vpack.c.b16 %v1597, %v1593
        %v1958 = vpack.c.b16 %v1598, %v1594
        %v1959 = vpack.c.b16 %v1599, %v1595
        %v1960 = vpack.c.b16 %v1600, %v1596
        %v1961 = vpack.c.b16 %v1605, %v1601
        %v1962 = vpack.c.b16 %v1606, %v1602
        %v1963 = vpack.c.b16 %v1607, %v1603
        %v1964 = vpack.c.b16 %v1608, %v1604
        %v1965 = vpack.c.b16 %v1613, %v1609
        %v1966 = vpack.c.b16 %v1614, %v1610
        %v1967 = vpack.c.b16 %v1615, %v1611
        %v1968 = vpack.c.b16 %v1616, %v1612
        %v1969 = vpack.c.b16 %v1621, %v1617
        %v1970 = vpack.c.b16 %v1622, %v1618
        %v1971 = vpack.c.b16 %v1623, %v1619
        %v1972 = vpack.c.b16 %v1624, %v1620
        %v1973 = vpack.c.b16 %v1629, %v1625
        %v1974 = vpack.c.b16 %v1630, %v1626
        %v1975 = vpack.c.b16 %v1631, %v1627
        %v1976 = vpack.c.b16 %v1632, %v1628
        %v1977 = vpack.c.b16 %v1637, %v1633
        %v1978 = vpack.c.b16 %v1638, %v1634
        %v1979 = vpack.c.b16 %v1639, %v1635
        %v1980 = vpack.c.b16 %v1640, %v1636
        %v1981 = vpack.c.b16 %v1645, %v1641
        %v1982 = vpack.c.b16 %v1646, %v1642
        %v1983 = vpack.c.b16 %v1647, %v1643
        %v1984 = vpack.c.b16 %v1648, %v1644
        %v1985 = vpack.c.b16 %v1653, %v1649
        %v1986 = vpack.c.b16 %v1654, %v1650
        %v1987 = vpack.c.b16 %v1655, %v1651
        %v1988 = vpack.c.b16 %v1656, %v1652
        %v1989 = vpack.c.b16 %v1661, %v1657
        %v1990 = vpack.c.b16 %v1662, %v1658
        %v1991 = vpack.c.b16 %v1663, %v1659
        %v1992 = vpack.c.b16 %v1664, %v1660
        %v1993 = vpack.c.b16 %v1669, %v1665
        %v1994 = vpack.c.b16 %v1670, %v1666
        %v1995 = vpack.c.b16 %v1671, %v1667
        %v1996 = vpack.c.b16 %v1672, %v1668
        %v1997 = vpack.c.b16 %v1677, %v1673
        %v1998 = vpack.c.b16 %v1678, %v1674
        %v1999 = vpack.c.b16 %v1679, %v1675
        %v2000 = vpack.c.b16 %v1680, %v1676
        %v2001 = vpack.c.b16 %v1685, %v1681
        %v2002 = vpack.c.b16 %v1686, %v1682
        %v2003 = vpack.c.b16 %v1687, %v1683
        %v2004 = vpack.c.b16 %v1688, %v1684
        %v2005 = vpack.c.b16 %v1693, %v1689
        %v2006 = vpack.c.b16 %v1694, %v1690
        %v2007 = vpack.c.b16 %v1695, %v1691
        %v2008 = vpack.c.b16 %v1696, %v1692
        %v2009 = vpack.c.b16 %v1701, %v1697
        %v2010 = vpack.c.b16 %v1702, %v1698
        %v2011 = vpack.c.b16 %v1703, %v1699
        %v2012 = vpack.c.b16 %v1704, %v1700
        %v2013 = vpack.c.b16 %v1709, %v1705
        %v2014 = vpack.c.b16 %v1710, %v1706
        %v2015 = vpack.c.b16 %v1711, %v1707
        %v2016 = vpack.c.b16 %v1712, %v1708
        %v2017 = vpack.c.b16 %v1717, %v1713
        %v2018 = vpack.c.b16 %v1718, %v1714
        %v2019 = vpack.c.b16 %v1719, %v1715
        %v2020 = vpack.c.b16 %v1720, %v1716
        %v2021 = vpack.c.b16 %v1725, %v1721
        %v2022 = vpack.c.b16 %v1726, %v1722
        %v2023 = vpack.c.b16 %v1727, %v1723
        %v2024 = vpack.c.b16 %v1728, %v1724
        %v2025 = vpack.c.b16 %v1733, %v1729
        %v2026 = vpack.c.b16 %v1734, %v1730
        %v2027 = vpack.c.b16 %v1735, %v1731
        %v2028 = vpack.c.b16 %v1736, %v1732
        %v2029 = vpack.c.b16 %v1741, %v1737
        %v2030 = vpack.c.b16 %v1742, %v1738
        %v2031 = vpack.c.b16 %v1743, %v1739
        %v2032 = vpack.c.b16 %v1744, %v1740
        %v2033 = vpack.c.b16 %v1749, %v1745
        %v2034 = vpack.c.b16 %v1750, %v1746
        %v2035 = vpack.c.b16 %v1751, %v1747
        %v2036 = vpack.c.b16 %v1752, %v1748
        %v2037 = vpack.c.b16 %v1757, %v1753
        %v2038 = vpack.c.b16 %v1758, %v1754
        %v2039 = vpack.c.b16 %v1759, %v1755
        %v2040 = vpack.c.b16 %v1760, %v1756
        %v2041 = vpack.c.b16 %v1765, %v1761
        %v2042 = vpack.c.b16 %v1766, %v1762
        %v2043 = vpack.c.b16 %v1767, %v1763
        %v2044 = vpack.c.b16 %v1768, %v1764
        %v2045 = vpack.c.b16 %v1773, %v1769
        %v2046 = vpack.c.b16 %v1774, %v1770
        %v2047 = vpack.c.b16 %v1775, %v1771
        %v2048 = vpack.c.b16 %v1776, %v1772
        %v2049 = vpack.c.b16 %v1781, %v1777
        %v2050 = vpack.c.b16 %v1782, %v1778
        %v2051 = vpack.c.b16 %v1783, %v1779
        %v2052 = vpack.c.b16 %v1784, %v1780
        %v2053 = vpack.c.b16 %v1789, %v1785
        %v2054 = vpack.c.b16 %v1790, %v1786
        %v2055 = vpack.c.b16 %v1791, %v1787
        %v2056 = vpack.c.b16 %v1792, %v1788
        %v2057 = vpack.c.b16 %v1797, %v1793
        %v2058 = vpack.c.b16 %v1798, %v1794
        %v2059 = vpack.c.b16 %v1799, %v1795
        %v2060 = vpack.c.b16 %v1800, %v1796
        %v2061 = vpack.c.b16 %v1805, %v1801
        %v2062 = vpack.c.b16 %v1806, %v1802
        %v2063 = vpack.c.b16 %v1807, %v1803
        %v2064 = vpack.c.b16 %v1808, %v1804
        %2321 = vmatprep.subr.bf16.mxu0 %v1810
        %2322 = vmatpush1.bf16.msra.mxu0 %v1809
        %2323 = vmatprep.subr.bf16.mxu0 %v1814
        %2324 = vmatpush1.bf16.msra.mxu0 %v1813
        %2325 = vmatprep.subr.bf16.mxu0 %v1818
        %2326 = vmatpush1.bf16.msra.mxu0 %v1817
        %2327 = vmatprep.subr.bf16.mxu0 %v1822
        %2328 = vmatpush1.bf16.msra.mxu0 %v1821
        %2329 = vmatprep.subr.bf16.mxu0 %v1826
        %2330 = vmatpush1.bf16.msra.mxu0 %v1825
        %2331 = vmatprep.subr.bf16.mxu0 %v1830
        %2332 = vmatpush1.bf16.msra.mxu0 %v1829
        %2333 = vmatprep.subr.bf16.mxu0 %v1834
        %2334 = vmatpush1.bf16.msra.mxu0 %v1833
        %2335 = vmatprep.subr.bf16.mxu0 %v1838
        %2336 = vmatpush1.bf16.msra.mxu0 %v1837
        %2337 = vmatprep.subr.bf16.mxu0 %v1842
        %2338 = vmatpush1.bf16.msra.mxu0 %v1841
        %2339 = vmatprep.subr.bf16.mxu0 %v1846
        %2340 = vmatpush1.bf16.msra.mxu0 %v1845
        %2341 = vmatprep.subr.bf16.mxu0 %v1850
        %2342 = vmatpush1.bf16.msra.mxu0 %v1849
        %2343 = vmatprep.subr.bf16.mxu0 %v1854
        %2344 = vmatpush1.bf16.msra.mxu0 %v1853
        %2345 = vmatprep.subr.bf16.mxu0 %v1858
        %2346 = vmatpush1.bf16.msra.mxu0 %v1857
        %2347 = vmatprep.subr.bf16.mxu0 %v1862
        %2348 = vmatpush1.bf16.msra.mxu0 %v1861
        %2349 = vmatprep.subr.bf16.mxu0 %v1866
        %2350 = vmatpush1.bf16.msra.mxu0 %v1865
        %2351 = vmatprep.subr.bf16.mxu0 %v1870
        %2352 = vmatpush1.bf16.msra.mxu0 %v1869
        %2353 = vmatprep.mubr.bf16.mxu0 %v754
        %2354 = vmatmul.mubr.bf16.gmra.mrb[0].mxu0 %v753
        %v2355 = vpop.f32.mrb[0].mxu0
        %v2356 = vadd.f32 0.0, %v2355
        %v2357 = vpop.f32.mrb[0].mxu0
        %v2358 = vadd.f32 0.0, %v2357
        %v2359 = vpop.f32.mrb[0].mxu0
        %v2360 = vadd.f32 0.0, %v2359
        %v2361 = vpop.f32.mrb[0].mxu0
        %v2362 = vadd.f32 0.0, %v2361
        %2363 = vmatprep.mubr.bf16.mxu0 %v762
        %2364 = vmatmul.mubr.bf16.gmra.mrb[0].mxu0 %v761
        %v2365 = vpop.f32.mrb[0].mxu0
        %v2366 = vadd.f32 0.0, %v2365
        %v2367 = vpop.f32.mrb[0].mxu0
        %v2368 = vadd.f32 0.0, %v2367
        %v2369 = vpop.f32.mrb[0].mxu0
        %v2370 = vadd.f32 0.0, %v2369
        %v2371 = vpop.f32.mrb[0].mxu0
        %v2372 = vadd.f32 0.0, %v2371
        %2373 = vmatprep.mubr.bf16.mxu0 %v770
        %2374 = vmatmul.mubr.bf16.gmra.mrb[0].mxu0 %v769
        %v2375 = vpop.f32.mrb[0].mxu0
        %v2376 = vadd.f32 0.0, %v2375
        %v2377 = vpop.f32.mrb[0].mxu0
        %v2378 = vadd.f32 0.0, %v2377
        %v2379 = vpop.f32.mrb[0].mxu0
        %v2380 = vadd.f32 0.0, %v2379
        %v2381 = vpop.f32.mrb[0].mxu0
        %v2382 = vadd.f32 0.0, %v2381
        %2383 = vmatprep.mubr.bf16.mxu0 %v778
        %2384 = vmatmul.mubr.bf16.gmra.mrb[0].mxu0 %v777
        %v2385 = vpop.f32.mrb[0].mxu0
        %v2386 = vadd.f32 0.0, %v2385
        %v2387 = vpop.f32.mrb[0].mxu0
        %v2388 = vadd.f32 0.0, %v2387
        %v2389 = vpop.f32.mrb[0].mxu0
        %v2390 = vadd.f32 0.0, %v2389
        %v2391 = vpop.f32.mrb[0].mxu0
        %v2392 = vadd.f32 0.0, %v2391
        %2393 = vdwg.mxu0
        %2394 = vmatprep.subr.bf16.mxu0 %v1874
        %2395 = vmatpush1.bf16.msra.mxu0 %v1873
        %2396 = vmatprep.subr.bf16.mxu0 %v1878
        %2397 = vmatpush1.bf16.msra.mxu0 %v1877
        %2398 = vmatprep.subr.bf16.mxu0 %v1882
        %2399 = vmatpush1.bf16.msra.mxu0 %v1881
        %2400 = vmatprep.subr.bf16.mxu0 %v1886
        %2401 = vmatpush1.bf16.msra.mxu0 %v1885
        %2402 = vmatprep.subr.bf16.mxu0 %v1890
        %2403 = vmatpush1.bf16.msra.mxu0 %v1889
        %2404 = vmatprep.subr.bf16.mxu0 %v1894
        %2405 = vmatpush1.bf16.msra.mxu0 %v1893
        %2406 = vmatprep.subr.bf16.mxu0 %v1898
        %2407 = vmatpush1.bf16.msra.mxu0 %v1897
        %2408 = vmatprep.subr.bf16.mxu0 %v1902
        %2409 = vmatpush1.bf16.msra.mxu0 %v1901
        %2410 = vmatprep.subr.bf16.mxu0 %v1906
        %2411 = vmatpush1.bf16.msra.mxu0 %v1905
        %2412 = vmatprep.subr.bf16.mxu0 %v1910
        %2413 = vmatpush1.bf16.msra.mxu0 %v1909
        %2414 = vmatprep.subr.bf16.mxu0 %v1914
        %2415 = vmatpush1.bf16.msra.mxu0 %v1913
        %2416 = vmatprep.subr.bf16.mxu0 %v1918
        %2417 = vmatpush1.bf16.msra.mxu0 %v1917
        %2418 = vmatprep.subr.bf16.mxu0 %v1922
        %2419 = vmatpush1.bf16.msra.mxu0 %v1921
        %2420 = vmatprep.subr.bf16.mxu0 %v1926
        %2421 = vmatpush1.bf16.msra.mxu0 %v1925
        %2422 = vmatprep.subr.bf16.mxu0 %v1930
        %2423 = vmatpush1.bf16.msra.mxu0 %v1929
        %2424 = vmatprep.subr.bf16.mxu0 %v1934
        %2425 = vmatpush1.bf16.msra.mxu0 %v1933
        %2426 = vmatprep.mubr.bf16.mxu0 %v756
        %2427 = vmatmul.mubr.bf16.gmra.mrb[0].mxu0 %v755
        %v2428 = vpop.f32.mrb[0].mxu0
        %v2429 = vadd.f32 %v2356, %v2428
        %v2430 = vpop.f32.mrb[0].mxu0
        %v2431 = vadd.f32 %v2358, %v2430
        %v2432 = vpop.f32.mrb[0].mxu0
        %v2433 = vadd.f32 %v2360, %v2432
        %v2434 = vpop.f32.mrb[0].mxu0
        %v2435 = vadd.f32 %v2362, %v2434
        %2436 = vmatprep.mubr.bf16.mxu0 %v764
        %2437 = vmatmul.mubr.bf16.gmra.mrb[0].mxu0 %v763
        %v2438 = vpop.f32.mrb[0].mxu0
        %v2439 = vadd.f32 %v2366, %v2438
        %v2440 = vpop.f32.mrb[0].mxu0
        %v2441 = vadd.f32 %v2368, %v2440
        %v2442 = vpop.f32.mrb[0].mxu0
        %v2443 = vadd.f32 %v2370, %v2442
        %v2444 = vpop.f32.mrb[0].mxu0
        %v2445 = vadd.f32 %v2372, %v2444
        %2446 = vmatprep.mubr.bf16.mxu0 %v772
        %2447 = vmatmul.mubr.bf16.gmra.mrb[0].mxu0 %v771
        %v2448 = vpop.f32.mrb[0].mxu0
        %v2449 = vadd.f32 %v2376, %v2448
        %v2450 = vpop.f32.mrb[0].mxu0
        %v2451 = vadd.f32 %v2378, %v2450
        %v2452 = vpop.f32.mrb[0].mxu0
        %v2453 = vadd.f32 %v2380, %v2452
        %v2454 = vpop.f32.mrb[0].mxu0
        %v2455 = vadd.f32 %v2382, %v2454
        %2456 = vmatprep.mubr.bf16.mxu0 %v780
        %2457 = vmatmul.mubr.bf16.gmra.mrb[0].mxu0 %v779
        %v2458 = vpop.f32.mrb[0].mxu0
        %v2459 = vadd.f32 %v2386, %v2458
        %v2460 = vpop.f32.mrb[0].mxu0
        %v2461 = vadd.f32 %v2388, %v2460
        %v2462 = vpop.f32.mrb[0].mxu0
        %v2463 = vadd.f32 %v2390, %v2462
        %v2464 = vpop.f32.mrb[0].mxu0
        %v2465 = vadd.f32 %v2392, %v2464
        %2466 = vdwg.mxu0
        %2467 = vmatprep.subr.bf16.mxu0 %v1938
        %2468 = vmatpush1.bf16.msra.mxu0 %v1937
        %2469 = vmatprep.subr.bf16.mxu0 %v1942
        %2470 = vmatpush1.bf16.msra.mxu0 %v1941
        %2471 = vmatprep.subr.bf16.mxu0 %v1946
        %2472 = vmatpush1.bf16.msra.mxu0 %v1945
        %2473 = vmatprep.subr.bf16.mxu0 %v1950
        %2474 = vmatpush1.bf16.msra.mxu0 %v1949
        %2475 = vmatprep.subr.bf16.mxu0 %v1954
        %2476 = vmatpush1.bf16.msra.mxu0 %v1953
        %2477 = vmatprep.subr.bf16.mxu0 %v1958
        %2478 = vmatpush1.bf16.msra.mxu0 %v1957
        %2479 = vmatprep.subr.bf16.mxu0 %v1962
        %2480 = vmatpush1.bf16.msra.mxu0 %v1961
        %2481 = vmatprep.subr.bf16.mxu0 %v1966
        %2482 = vmatpush1.bf16.msra.mxu0 %v1965
        %2483 = vmatprep.subr.bf16.mxu0 %v1970
        %2484 = vmatpush1.bf16.msra.mxu0 %v1969
        %2485 = vmatprep.subr.bf16.mxu0 %v1974
        %2486 = vmatpush1.bf16.msra.mxu0 %v1973
        %2487 = vmatprep.subr.bf16.mxu0 %v1978
        %2488 = vmatpush1.bf16.msra.mxu0 %v1977
        %2489 = vmatprep.subr.bf16.mxu0 %v1982
        %2490 = vmatpush1.bf16.msra.mxu0 %v1981
        %2491 = vmatprep.subr.bf16.mxu0 %v1986
        %2492 = vmatpush1.bf16.msra.mxu0 %v1985
        %2493 = vmatprep.subr.bf16.mxu0 %v1990
        %2494 = vmatpush1.bf16.msra.mxu0 %v1989
        %2495 = vmatprep.subr.bf16.mxu0 %v1994
        %2496 = vmatpush1.bf16.msra.mxu0 %v1993
        %2497 = vmatprep.subr.bf16.mxu0 %v1998
        %2498 = vmatpush1.bf16.msra.mxu0 %v1997
        %2499 = vmatprep.mubr.bf16.mxu0 %v758
        %2500 = vmatmul.mubr.bf16.gmra.mrb[0].mxu0 %v757
        %v2501 = vpop.f32.mrb[0].mxu0
        %v2502 = vadd.f32 %v2429, %v2501
        %v2503 = vpop.f32.mrb[0].mxu0
        %v2504 = vadd.f32 %v2431, %v2503
        %v2505 = vpop.f32.mrb[0].mxu0
        %v2506 = vadd.f32 %v2433, %v2505
        %v2507 = vpop.f32.mrb[0].mxu0
        %v2508 = vadd.f32 %v2435, %v2507
        %2509 = vmatprep.mubr.bf16.mxu0 %v766
        %2510 = vmatmul.mubr.bf16.gmra.mrb[0].mxu0 %v765
        %v2511 = vpop.f32.mrb[0].mxu0
        %v2512 = vadd.f32 %v2439, %v2511
        %v2513 = vpop.f32.mrb[0].mxu0
        %v2514 = vadd.f32 %v2441, %v2513
        %v2515 = vpop.f32.mrb[0].mxu0
        %v2516 = vadd.f32 %v2443, %v2515
        %v2517 = vpop.f32.mrb[0].mxu0
        %v2518 = vadd.f32 %v2445, %v2517
        %2519 = vmatprep.mubr.bf16.mxu0 %v774
        %2520 = vmatmul.mubr.bf16.gmra.mrb[0].mxu0 %v773
        %v2521 = vpop.f32.mrb[0].mxu0
        %v2522 = vadd.f32 %v2449, %v2521
        %v2523 = vpop.f32.mrb[0].mxu0
        %v2524 = vadd.f32 %v2451, %v2523
        %v2525 = vpop.f32.mrb[0].mxu0
        %v2526 = vadd.f32 %v2453, %v2525
        %v2527 = vpop.f32.mrb[0].mxu0
        %v2528 = vadd.f32 %v2455, %v2527
        %2529 = vmatprep.mubr.bf16.mxu0 %v782
        %2530 = vmatmul.mubr.bf16.gmra.mrb[0].mxu0 %v781
        %v2531 = vpop.f32.mrb[0].mxu0
        %v2532 = vadd.f32 %v2459, %v2531
        %v2533 = vpop.f32.mrb[0].mxu0
        %v2534 = vadd.f32 %v2461, %v2533
        %v2535 = vpop.f32.mrb[0].mxu0
        %v2536 = vadd.f32 %v2463, %v2535
        %v2537 = vpop.f32.mrb[0].mxu0
        %v2538 = vadd.f32 %v2465, %v2537
        %2539 = vdwg.mxu0
        %2540 = vmatprep.subr.bf16.mxu0 %v2002
        %2541 = vmatpush1.bf16.msra.mxu0 %v2001
        %2542 = vmatprep.subr.bf16.mxu0 %v2006
        %2543 = vmatpush1.bf16.msra.mxu0 %v2005
        %2544 = vmatprep.subr.bf16.mxu0 %v2010
        %2545 = vmatpush1.bf16.msra.mxu0 %v2009
        %2546 = vmatprep.subr.bf16.mxu0 %v2014
        %2547 = vmatpush1.bf16.msra.mxu0 %v2013
        %2548 = vmatprep.subr.bf16.mxu0 %v2018
        %2549 = vmatpush1.bf16.msra.mxu0 %v2017
        %2550 = vmatprep.subr.bf16.mxu0 %v2022
        %2551 = vmatpush1.bf16.msra.mxu0 %v2021
        %2552 = vmatprep.subr.bf16.mxu0 %v2026
        %2553 = vmatpush1.bf16.msra.mxu0 %v2025
        %2554 = vmatprep.subr.bf16.mxu0 %v2030
        %2555 = vmatpush1.bf16.msra.mxu0 %v2029
        %2556 = vmatprep.subr.bf16.mxu0 %v2034
        %2557 = vmatpush1.bf16.msra.mxu0 %v2033
        %2558 = vmatprep.subr.bf16.mxu0 %v2038
        %2559 = vmatpush1.bf16.msra.mxu0 %v2037
        %2560 = vmatprep.subr.bf16.mxu0 %v2042
        %2561 = vmatpush1.bf16.msra.mxu0 %v2041
        %2562 = vmatprep.subr.bf16.mxu0 %v2046
        %2563 = vmatpush1.bf16.msra.mxu0 %v2045
        %2564 = vmatprep.subr.bf16.mxu0 %v2050
        %2565 = vmatpush1.bf16.msra.mxu0 %v2049
        %2566 = vmatprep.subr.bf16.mxu0 %v2054
        %2567 = vmatpush1.bf16.msra.mxu0 %v2053
        %2568 = vmatprep.subr.bf16.mxu0 %v2058
        %2569 = vmatpush1.bf16.msra.mxu0 %v2057
        %2570 = vmatprep.subr.bf16.mxu0 %v2062
        %2571 = vmatpush1.bf16.msra.mxu0 %v2061
        %2572 = vmatprep.mubr.bf16.mxu0 %v760
        %2573 = vmatmul.mubr.bf16.gmra.mrb[0].mxu0 %v759
        %v2574 = vpop.f32.mrb[0].mxu0
        %v2575 = vadd.f32 %v2502, %v2574
        %v2576 = vpop.f32.mrb[0].mxu0
        %v2577 = vadd.f32 %v2504, %v2576
        %v2578 = vpop.f32.mrb[0].mxu0
        %v2579 = vadd.f32 %v2506, %v2578
        %v2580 = vpop.f32.mrb[0].mxu0
        %v2581 = vadd.f32 %v2508, %v2580
        %2582 = vmatprep.mubr.bf16.mxu0 %v768
        %2583 = vmatmul.mubr.bf16.gmra.mrb[0].mxu0 %v767
        %v2584 = vpop.f32.mrb[0].mxu0
        %v2585 = vadd.f32 %v2512, %v2584
        %v2586 = vpop.f32.mrb[0].mxu0
        %v2587 = vadd.f32 %v2514, %v2586
        %v2588 = vpop.f32.mrb[0].mxu0
        %v2589 = vadd.f32 %v2516, %v2588
        %v2590 = vpop.f32.mrb[0].mxu0
        %v2591 = vadd.f32 %v2518, %v2590
        %2592 = vmatprep.mubr.bf16.mxu0 %v776
        %2593 = vmatmul.mubr.bf16.gmra.mrb[0].mxu0 %v775
        %v2594 = vpop.f32.mrb[0].mxu0
        %v2595 = vadd.f32 %v2522, %v2594
        %v2596 = vpop.f32.mrb[0].mxu0
        %v2597 = vadd.f32 %v2524, %v2596
        %v2598 = vpop.f32.mrb[0].mxu0
        %v2599 = vadd.f32 %v2526, %v2598
        %v2600 = vpop.f32.mrb[0].mxu0
        %v2601 = vadd.f32 %v2528, %v2600
        %2602 = vmatprep.mubr.bf16.mxu0 %v784
        %2603 = vmatmul.mubr.bf16.gmra.mrb[0].mxu0 %v783
        %v2604 = vpop.f32.mrb[0].mxu0
        %v2605 = vadd.f32 %v2532, %v2604
        %v2606 = vpop.f32.mrb[0].mxu0
        %v2607 = vadd.f32 %v2534, %v2606
        %v2608 = vpop.f32.mrb[0].mxu0
        %v2609 = vadd.f32 %v2536, %v2608
        %v2610 = vpop.f32.mrb[0].mxu0
        %v2611 = vadd.f32 %v2538, %v2610
        %2612 = vdwg.mxu0
        %2613 = vmatprep.subr.bf16.mxu0 %v1812
        %2614 = vmatpush1.bf16.msra.mxu0 %v1811
        %2615 = vmatprep.subr.bf16.mxu0 %v1816
        %2616 = vmatpush1.bf16.msra.mxu0 %v1815
        %2617 = vmatprep.subr.bf16.mxu0 %v1820
        %2618 = vmatpush1.bf16.msra.mxu0 %v1819
        %2619 = vmatprep.subr.bf16.mxu0 %v1824
        %2620 = vmatpush1.bf16.msra.mxu0 %v1823
        %2621 = vmatprep.subr.bf16.mxu0 %v1828
        %2622 = vmatpush1.bf16.msra.mxu0 %v1827
        %2623 = vmatprep.subr.bf16.mxu0 %v1832
        %2624 = vmatpush1.bf16.msra.mxu0 %v1831
        %2625 = vmatprep.subr.bf16.mxu0 %v1836
        %2626 = vmatpush1.bf16.msra.mxu0 %v1835
        %2627 = vmatprep.subr.bf16.mxu0 %v1840
        %2628 = vmatpush1.bf16.msra.mxu0 %v1839
        %2629 = vmatprep.subr.bf16.mxu0 %v1844
        %2630 = vmatpush1.bf16.msra.mxu0 %v1843
        %2631 = vmatprep.subr.bf16.mxu0 %v1848
        %2632 = vmatpush1.bf16.msra.mxu0 %v1847
        %2633 = vmatprep.subr.bf16.mxu0 %v1852
        %2634 = vmatpush1.bf16.msra.mxu0 %v1851
        %2635 = vmatprep.subr.bf16.mxu0 %v1856
        %2636 = vmatpush1.bf16.msra.mxu0 %v1855
        %2637 = vmatprep.subr.bf16.mxu0 %v1860
        %2638 = vmatpush1.bf16.msra.mxu0 %v1859
        %2639 = vmatprep.subr.bf16.mxu0 %v1864
        %2640 = vmatpush1.bf16.msra.mxu0 %v1863
        %2641 = vmatprep.subr.bf16.mxu0 %v1868
        %2642 = vmatpush1.bf16.msra.mxu0 %v1867
        %2643 = vmatprep.subr.bf16.mxu0 %v1872
        %2644 = vmatpush1.bf16.msra.mxu0 %v1871
        %2645 = vmatprep.mubr.bf16.mxu0 %v754
        %2646 = vmatmul.mubr.bf16.gmra.mrb[0].mxu0 %v753
        %v2647 = vpop.f32.mrb[0].mxu0
        %v2648 = vadd.f32 0.0, %v2647
        %v2649 = vpop.f32.mrb[0].mxu0
        %v2650 = vadd.f32 0.0, %v2649
        %v2651 = vpop.f32.mrb[0].mxu0
        %v2652 = vadd.f32 0.0, %v2651
        %v2653 = vpop.f32.mrb[0].mxu0
        %v2654 = vadd.f32 0.0, %v2653
        %2655 = vmatprep.mubr.bf16.mxu0 %v762
        %2656 = vmatmul.mubr.bf16.gmra.mrb[0].mxu0 %v761
        %v2657 = vpop.f32.mrb[0].mxu0
        %v2658 = vadd.f32 0.0, %v2657
        %v2659 = vpop.f32.mrb[0].mxu0
        %v2660 = vadd.f32 0.0, %v2659
        %v2661 = vpop.f32.mrb[0].mxu0
        %v2662 = vadd.f32 0.0, %v2661
        %v2663 = vpop.f32.mrb[0].mxu0
        %v2664 = vadd.f32 0.0, %v2663
        %2665 = vmatprep.mubr.bf16.mxu0 %v770
        %2666 = vmatmul.mubr.bf16.gmra.mrb[0].mxu0 %v769
        %v2667 = vpop.f32.mrb[0].mxu0
        %v2668 = vadd.f32 0.0, %v2667
        %v2669 = vpop.f32.mrb[0].mxu0
        %v2670 = vadd.f32 0.0, %v2669
        %v2671 = vpop.f32.mrb[0].mxu0
        %v2672 = vadd.f32 0.0, %v2671
        %v2673 = vpop.f32.mrb[0].mxu0
        %v2674 = vadd.f32 0.0, %v2673
        %2675 = vmatprep.mubr.bf16.mxu0 %v778
        %2676 = vmatmul.mubr.bf16.gmra.mrb[0].mxu0 %v777
        %v2677 = vpop.f32.mrb[0].mxu0
        %v2678 = vadd.f32 0.0, %v2677
        %v2679 = vpop.f32.mrb[0].mxu0
        %v2680 = vadd.f32 0.0, %v2679
        %v2681 = vpop.f32.mrb[0].mxu0
        %v2682 = vadd.f32 0.0, %v2681
        %v2683 = vpop.f32.mrb[0].mxu0
        %v2684 = vadd.f32 0.0, %v2683
        %2685 = vdwg.mxu0
        %2686 = vmatprep.subr.bf16.mxu0 %v1876
        %2687 = vmatpush1.bf16.msra.mxu0 %v1875
        %2688 = vmatprep.subr.bf16.mxu0 %v1880
        %2689 = vmatpush1.bf16.msra.mxu0 %v1879
        %2690 = vmatprep.subr.bf16.mxu0 %v1884
        %2691 = vmatpush1.bf16.msra.mxu0 %v1883
        %2692 = vmatprep.subr.bf16.mxu0 %v1888
        %2693 = vmatpush1.bf16.msra.mxu0 %v1887
        %2694 = vmatprep.subr.bf16.mxu0 %v1892
        %2695 = vmatpush1.bf16.msra.mxu0 %v1891
        %2696 = vmatprep.subr.bf16.mxu0 %v1896
        %2697 = vmatpush1.bf16.msra.mxu0 %v1895
        %2698 = vmatprep.subr.bf16.mxu0 %v1900
        %2699 = vmatpush1.bf16.msra.mxu0 %v1899
        %2700 = vmatprep.subr.bf16.mxu0 %v1904
        %2701 = vmatpush1.bf16.msra.mxu0 %v1903
        %2702 = vmatprep.subr.bf16.mxu0 %v1908
        %2703 = vmatpush1.bf16.msra.mxu0 %v1907
        %2704 = vmatprep.subr.bf16.mxu0 %v1912
        %2705 = vmatpush1.bf16.msra.mxu0 %v1911
        %2706 = vmatprep.subr.bf16.mxu0 %v1916
        %2707 = vmatpush1.bf16.msra.mxu0 %v1915
        %2708 = vmatprep.subr.bf16.mxu0 %v1920
        %2709 = vmatpush1.bf16.msra.mxu0 %v1919
        %2710 = vmatprep.subr.bf16.mxu0 %v1924
        %2711 = vmatpush1.bf16.msra.mxu0 %v1923
        %2712 = vmatprep.subr.bf16.mxu0 %v1928
        %2713 = vmatpush1.bf16.msra.mxu0 %v1927
        %2714 = vmatprep.subr.bf16.mxu0 %v1932
        %2715 = vmatpush1.bf16.msra.mxu0 %v1931
        %2716 = vmatprep.subr.bf16.mxu0 %v1936
        %2717 = vmatpush1.bf16.msra.mxu0 %v1935
        %2718 = vmatprep.mubr.bf16.mxu0 %v756
        %2719 = vmatmul.mubr.bf16.gmra.mrb[0].mxu0 %v755
        %v2720 = vpop.f32.mrb[0].mxu0
        %v2721 = vadd.f32 %v2648, %v2720
        %v2722 = vpop.f32.mrb[0].mxu0
        %v2723 = vadd.f32 %v2650, %v2722
        %v2724 = vpop.f32.mrb[0].mxu0
        %v2725 = vadd.f32 %v2652, %v2724
        %v2726 = vpop.f32.mrb[0].mxu0
        %v2727 = vadd.f32 %v2654, %v2726
        %2728 = vmatprep.mubr.bf16.mxu0 %v764
        %2729 = vmatmul.mubr.bf16.gmra.mrb[0].mxu0 %v763
        %v2730 = vpop.f32.mrb[0].mxu0
        %v2731 = vadd.f32 %v2658, %v2730
        %v2732 = vpop.f32.mrb[0].mxu0
        %v2733 = vadd.f32 %v2660, %v2732
        %v2734 = vpop.f32.mrb[0].mxu0
        %v2735 = vadd.f32 %v2662, %v2734
        %v2736 = vpop.f32.mrb[0].mxu0
        %v2737 = vadd.f32 %v2664, %v2736
        %2738 = vmatprep.mubr.bf16.mxu0 %v772
        %2739 = vmatmul.mubr.bf16.gmra.mrb[0].mxu0 %v771
        %v2740 = vpop.f32.mrb[0].mxu0
        %v2741 = vadd.f32 %v2668, %v2740
        %v2742 = vpop.f32.mrb[0].mxu0
        %v2743 = vadd.f32 %v2670, %v2742
        %v2744 = vpop.f32.mrb[0].mxu0
        %v2745 = vadd.f32 %v2672, %v2744
        %v2746 = vpop.f32.mrb[0].mxu0
        %v2747 = vadd.f32 %v2674, %v2746
        %2748 = vmatprep.mubr.bf16.mxu0 %v780
        %2749 = vmatmul.mubr.bf16.gmra.mrb[0].mxu0 %v779
        %v2750 = vpop.f32.mrb[0].mxu0
        %v2751 = vadd.f32 %v2678, %v2750
        %v2752 = vpop.f32.mrb[0].mxu0
        %v2753 = vadd.f32 %v2680, %v2752
        %v2754 = vpop.f32.mrb[0].mxu0
        %v2755 = vadd.f32 %v2682, %v2754
        %v2756 = vpop.f32.mrb[0].mxu0
        %v2757 = vadd.f32 %v2684, %v2756
        %2758 = vdwg.mxu0
        %2759 = vmatprep.subr.bf16.mxu0 %v1940
        %2760 = vmatpush1.bf16.msra.mxu0 %v1939
        %2761 = vmatprep.subr.bf16.mxu0 %v1944
        %2762 = vmatpush1.bf16.msra.mxu0 %v1943
        %2763 = vmatprep.subr.bf16.mxu0 %v1948
        %2764 = vmatpush1.bf16.msra.mxu0 %v1947
        %2765 = vmatprep.subr.bf16.mxu0 %v1952
        %2766 = vmatpush1.bf16.msra.mxu0 %v1951
        %2767 = vmatprep.subr.bf16.mxu0 %v1956
        %2768 = vmatpush1.bf16.msra.mxu0 %v1955
        %2769 = vmatprep.subr.bf16.mxu0 %v1960
        %2770 = vmatpush1.bf16.msra.mxu0 %v1959
        %2771 = vmatprep.subr.bf16.mxu0 %v1964
        %2772 = vmatpush1.bf16.msra.mxu0 %v1963
        %2773 = vmatprep.subr.bf16.mxu0 %v1968
        %2774 = vmatpush1.bf16.msra.mxu0 %v1967
        %2775 = vmatprep.subr.bf16.mxu0 %v1972
        %2776 = vmatpush1.bf16.msra.mxu0 %v1971
        %2777 = vmatprep.subr.bf16.mxu0 %v1976
        %2778 = vmatpush1.bf16.msra.mxu0 %v1975
        %2779 = vmatprep.subr.bf16.mxu0 %v1980
        %2780 = vmatpush1.bf16.msra.mxu0 %v1979
        %2781 = vmatprep.subr.bf16.mxu0 %v1984
        %2782 = vmatpush1.bf16.msra.mxu0 %v1983
        %2783 = vmatprep.subr.bf16.mxu0 %v1988
        %2784 = vmatpush1.bf16.msra.mxu0 %v1987
        %2785 = vmatprep.subr.bf16.mxu0 %v1992
        %2786 = vmatpush1.bf16.msra.mxu0 %v1991
        %2787 = vmatprep.subr.bf16.mxu0 %v1996
        %2788 = vmatpush1.bf16.msra.mxu0 %v1995
        %2789 = vmatprep.subr.bf16.mxu0 %v2000
        %2790 = vmatpush1.bf16.msra.mxu0 %v1999
        %2791 = vmatprep.mubr.bf16.mxu0 %v758
        %2792 = vmatmul.mubr.bf16.gmra.mrb[0].mxu0 %v757
        %v2793 = vpop.f32.mrb[0].mxu0
        %v2794 = vadd.f32 %v2721, %v2793
        %v2795 = vpop.f32.mrb[0].mxu0
        %v2796 = vadd.f32 %v2723, %v2795
        %v2797 = vpop.f32.mrb[0].mxu0
        %v2798 = vadd.f32 %v2725, %v2797
        %v2799 = vpop.f32.mrb[0].mxu0
        %v2800 = vadd.f32 %v2727, %v2799
        %2801 = vmatprep.mubr.bf16.mxu0 %v766
        %2802 = vmatmul.mubr.bf16.gmra.mrb[0].mxu0 %v765
        %v2803 = vpop.f32.mrb[0].mxu0
        %v2804 = vadd.f32 %v2731, %v2803
        %v2805 = vpop.f32.mrb[0].mxu0
        %v2806 = vadd.f32 %v2733, %v2805
        %v2807 = vpop.f32.mrb[0].mxu0
        %v2808 = vadd.f32 %v2735, %v2807
        %v2809 = vpop.f32.mrb[0].mxu0
        %v2810 = vadd.f32 %v2737, %v2809
        %2811 = vmatprep.mubr.bf16.mxu0 %v774
        %2812 = vmatmul.mubr.bf16.gmra.mrb[0].mxu0 %v773
        %v2813 = vpop.f32.mrb[0].mxu0
        %v2814 = vadd.f32 %v2741, %v2813
        %v2815 = vpop.f32.mrb[0].mxu0
        %v2816 = vadd.f32 %v2743, %v2815
        %v2817 = vpop.f32.mrb[0].mxu0
        %v2818 = vadd.f32 %v2745, %v2817
        %v2819 = vpop.f32.mrb[0].mxu0
        %v2820 = vadd.f32 %v2747, %v2819
        %2821 = vmatprep.mubr.bf16.mxu0 %v782
        %2822 = vmatmul.mubr.bf16.gmra.mrb[0].mxu0 %v781
        %v2823 = vpop.f32.mrb[0].mxu0
        %v2824 = vadd.f32 %v2751, %v2823
        %v2825 = vpop.f32.mrb[0].mxu0
        %v2826 = vadd.f32 %v2753, %v2825
        %v2827 = vpop.f32.mrb[0].mxu0
        %v2828 = vadd.f32 %v2755, %v2827
        %v2829 = vpop.f32.mrb[0].mxu0
        %v2830 = vadd.f32 %v2757, %v2829
        %2831 = vdwg.mxu0
        %2832 = vmatprep.subr.bf16.mxu0 %v2004
        %2833 = vmatpush1.bf16.msra.mxu0 %v2003
        %2834 = vmatprep.subr.bf16.mxu0 %v2008
        %2835 = vmatpush1.bf16.msra.mxu0 %v2007
        %2836 = vmatprep.subr.bf16.mxu0 %v2012
        %2837 = vmatpush1.bf16.msra.mxu0 %v2011
        %2838 = vmatprep.subr.bf16.mxu0 %v2016
        %2839 = vmatpush1.bf16.msra.mxu0 %v2015
        %2840 = vmatprep.subr.bf16.mxu0 %v2020
        %2841 = vmatpush1.bf16.msra.mxu0 %v2019
        %2842 = vmatprep.subr.bf16.mxu0 %v2024
        %2843 = vmatpush1.bf16.msra.mxu0 %v2023
        %2844 = vmatprep.subr.bf16.mxu0 %v2028
        %2845 = vmatpush1.bf16.msra.mxu0 %v2027
        %2846 = vmatprep.subr.bf16.mxu0 %v2032
        %2847 = vmatpush1.bf16.msra.mxu0 %v2031
        %2848 = vmatprep.subr.bf16.mxu0 %v2036
        %2849 = vmatpush1.bf16.msra.mxu0 %v2035
        %2850 = vmatprep.subr.bf16.mxu0 %v2040
        %2851 = vmatpush1.bf16.msra.mxu0 %v2039
        %2852 = vmatprep.subr.bf16.mxu0 %v2044
        %2853 = vmatpush1.bf16.msra.mxu0 %v2043
        %2854 = vmatprep.subr.bf16.mxu0 %v2048
        %2855 = vmatpush1.bf16.msra.mxu0 %v2047
        %2856 = vmatprep.subr.bf16.mxu0 %v2052
        %2857 = vmatpush1.bf16.msra.mxu0 %v2051
        %2858 = vmatprep.subr.bf16.mxu0 %v2056
        %2859 = vmatpush1.bf16.msra.mxu0 %v2055
        %2860 = vmatprep.subr.bf16.mxu0 %v2060
        %2861 = vmatpush1.bf16.msra.mxu0 %v2059
        %2862 = vmatprep.subr.bf16.mxu0 %v2064
        %2863 = vmatpush1.bf16.msra.mxu0 %v2063
        %2864 = vmatprep.mubr.bf16.mxu0 %v760
        %2865 = vmatmul.mubr.bf16.gmra.mrb[0].mxu0 %v759
        %v2866 = vpop.f32.mrb[0].mxu0
        %v2867 = vadd.f32 %v2794, %v2866
        %v2868 = vpop.f32.mrb[0].mxu0
        %v2869 = vadd.f32 %v2796, %v2868
        %v2870 = vpop.f32.mrb[0].mxu0
        %v2871 = vadd.f32 %v2798, %v2870
        %v2872 = vpop.f32.mrb[0].mxu0
        %v2873 = vadd.f32 %v2800, %v2872
        %2874 = vmatprep.mubr.bf16.mxu0 %v768
        %2875 = vmatmul.mubr.bf16.gmra.mrb[0].mxu0 %v767
        %v2876 = vpop.f32.mrb[0].mxu0
        %v2877 = vadd.f32 %v2804, %v2876
        %v2878 = vpop.f32.mrb[0].mxu0
        %v2879 = vadd.f32 %v2806, %v2878
        %v2880 = vpop.f32.mrb[0].mxu0
        %v2881 = vadd.f32 %v2808, %v2880
        %v2882 = vpop.f32.mrb[0].mxu0
        %v2883 = vadd.f32 %v2810, %v2882
        %2884 = vmatprep.mubr.bf16.mxu0 %v776
        %2885 = vmatmul.mubr.bf16.gmra.mrb[0].mxu0 %v775
        %v2886 = vpop.f32.mrb[0].mxu0
        %v2887 = vadd.f32 %v2814, %v2886
        %v2888 = vpop.f32.mrb[0].mxu0
        %v2889 = vadd.f32 %v2816, %v2888
        %v2890 = vpop.f32.mrb[0].mxu0
        %v2891 = vadd.f32 %v2818, %v2890
        %v2892 = vpop.f32.mrb[0].mxu0
        %v2893 = vadd.f32 %v2820, %v2892
        %2894 = vmatprep.mubr.bf16.mxu0 %v784
        %2895 = vmatmul.mubr.bf16.gmra.mrb[0].mxu0 %v783
        %v2896 = vpop.f32.mrb[0].mxu0
        %v2897 = vadd.f32 %v2824, %v2896
        %v2898 = vpop.f32.mrb[0].mxu0
        %v2899 = vadd.f32 %v2826, %v2898
        %v2900 = vpop.f32.mrb[0].mxu0
        %v2901 = vadd.f32 %v2828, %v2900
        %v2902 = vpop.f32.mrb[0].mxu0
        %v2903 = vadd.f32 %v2830, %v2902
        %2904 = vdwg.mxu0
        %v2905 = vpack.c.bf16 %v2579, %v2575
        %v2906 = vpack.c.bf16 %v2581, %v2577
        %v2907 = vpack.c.bf16 %v2871, %v2867
        %v2908 = vpack.c.bf16 %v2873, %v2869
        %v2909 = vpack.c.bf16 %v2589, %v2585
        %v2910 = vpack.c.bf16 %v2591, %v2587
        %v2911 = vpack.c.bf16 %v2881, %v2877
        %v2912 = vpack.c.bf16 %v2883, %v2879
        %v2913 = vpack.c.bf16 %v2599, %v2595
        %v2914 = vpack.c.bf16 %v2601, %v2597
        %v2915 = vpack.c.bf16 %v2891, %v2887
        %v2916 = vpack.c.bf16 %v2893, %v2889
        %v2917 = vpack.c.bf16 %v2609, %v2605
        %v2918 = vpack.c.bf16 %v2611, %v2607
        %v2919 = vpack.c.bf16 %v2901, %v2897
        %v2920 = vpack.c.bf16 %v2903, %v2899
        %v2921 = vld [vmem:[%s3] sm:$0xf]
        %v2923 = vlaneseq
        %v2924 = vshrl.u32 %v2923, 7
        %v2925 = vsub.s32 0, %v2924
        %v2926 = vrot.slane %v2921, %v2925
        %v2927 = vlaneseq
        %v2928 = vshrl.u32 %v2927, 7
        %v2929 = vsub.s32 1, %v2928
        %v2930 = vrot.slane %v2921, %v2929
        %v2931 = vlaneseq
        %v2932 = vshrl.u32 %v2931, 7
        %v2933 = vsub.s32 2, %v2932
        %v2934 = vrot.slane %v2921, %v2933
        %v2935 = vlaneseq
        %v2936 = vshrl.u32 %v2935, 7
        %v2937 = vsub.s32 3, %v2936
        %v2938 = vrot.slane %v2921, %v2937
        %v2951 = vunpack.c.l.b16 %v681
        %v2952 = vunpack.c.l.b16 %v682
        %v2953 = vunpack.c.l.b16 %v683
        %v2954 = vunpack.c.l.b16 %v684
        %v2955 = vunpack.c.l.b16 %v685
        %v2956 = vunpack.c.l.b16 %v686
        %v2957 = vunpack.c.l.b16 %v687
        %v2958 = vunpack.c.l.b16 %v688
        %v2959 = vpack.c.b16 %v2952, %v2951
        %v2960 = vpack.c.b16 %v2954, %v2953
        %v2961 = vpack.c.b16 %v2956, %v2955
        %v2962 = vpack.c.b16 %v2958, %v2957
        %vm2963 = vcmask 523264
        %v2965 = vsel %vm2963, %v2959, 0
        %v2968 = vsel %vm2963, %v2960, 0
        %v2971 = vsel %vm2963, %v2961, 0
        %v2974 = vsel %vm2963, %v2962, 0
        %2976 = vmatprep.subr.bf16.mxu0 %v2906
        %2977 = vmatpush1.bf16.msra.mxu0 %v2905
        %2978 = vmatprep.subr.bf16.mxu0 %v2910
        %2979 = vmatpush1.bf16.msra.mxu0 %v2909
        %2980 = vmatprep.subr.bf16.mxu0 %v2914
        %2981 = vmatpush1.bf16.msra.mxu0 %v2913
        %2982 = vmatprep.subr.bf16.mxu0 %v2918
        %2983 = vmatpush1.bf16.msra.mxu0 %v2917
        %2984 = vmatprep.subr.bf16.mxu0 0
        %2985 = vmatpush1.bf16.msra.mxu0 0
        %2986 = vmatprep.subr.bf16.mxu0 0
        %2987 = vmatpush1.bf16.msra.mxu0 0
        %2988 = vmatprep.subr.bf16.mxu0 0
        %2989 = vmatpush1.bf16.msra.mxu0 0
        %2990 = vmatprep.subr.bf16.mxu0 0
        %2991 = vmatpush1.bf16.msra.mxu0 0
        %2992 = vmatprep.subr.bf16.mxu0 0
        %2993 = vmatpush1.bf16.msra.mxu0 0
        %2994 = vmatprep.subr.bf16.mxu0 0
        %2995 = vmatpush1.bf16.msra.mxu0 0
        %2996 = vmatprep.subr.bf16.mxu0 0
        %2997 = vmatpush1.bf16.msra.mxu0 0
        %2998 = vmatprep.subr.bf16.mxu0 0
        %2999 = vmatpush1.bf16.msra.mxu0 0
        %3000 = vmatprep.subr.bf16.mxu0 0
        %3001 = vmatpush1.bf16.msra.mxu0 0
        %3002 = vmatprep.subr.bf16.mxu0 0
        %3003 = vmatpush1.bf16.msra.mxu0 0
        %3004 = vmatprep.subr.bf16.mxu0 0
        %3005 = vmatpush1.bf16.msra.mxu0 0
        %3006 = vmatprep.subr.bf16.mxu0 0
        %3007 = vmatpush1.bf16.msra.mxu0 0
        %3008 = vmatprep.mubr.bf16.mxu0 0
        %3009 = vmatmul.mubr.bf16.gmra.mrb[0].mxu0 %v2965
        %v3010 = vpop.f32.mrb[0].mxu0
        %v3011 = vadd.f32 %v2926, %v3010
        %v3012 = vpop.f32.mrb[0].mxu0
        %v3013 = vadd.f32 %v2930, %v3012
        %v3014 = vpop.f32.mrb[0].mxu0
        %v3015 = vadd.f32 %v2926, %v3014
        %v3016 = vpop.f32.mrb[0].mxu0
        %v3017 = vadd.f32 %v2930, %v3016
        %3018 = vmatprep.mubr.bf16.mxu0 0
        %3019 = vmatmul.mubr.bf16.gmra.mrb[0].mxu0 %v2968
        %v3020 = vpop.f32.mrb[0].mxu0
        %v3021 = vadd.f32 %v2926, %v3020
        %v3022 = vpop.f32.mrb[0].mxu0
        %v3023 = vadd.f32 %v2930, %v3022
        %v3024 = vpop.f32.mrb[0].mxu0
        %v3025 = vadd.f32 %v2926, %v3024
        %v3026 = vpop.f32.mrb[0].mxu0
        %v3027 = vadd.f32 %v2930, %v3026
        %3028 = vmatprep.mubr.bf16.mxu0 0
        %3029 = vmatmul.mubr.bf16.gmra.mrb[0].mxu0 %v2971
        %v3030 = vpop.f32.mrb[0].mxu0
        %v3031 = vadd.f32 %v2926, %v3030
        %v3032 = vpop.f32.mrb[0].mxu0
        %v3033 = vadd.f32 %v2930, %v3032
        %v3034 = vpop.f32.mrb[0].mxu0
        %v3035 = vadd.f32 %v2926, %v3034
        %v3036 = vpop.f32.mrb[0].mxu0
        %v3037 = vadd.f32 %v2930, %v3036
        %3038 = vmatprep.mubr.bf16.mxu0 0
        %3039 = vmatmul.mubr.bf16.gmra.mrb[0].mxu0 %v2974
        %v3040 = vpop.f32.mrb[0].mxu0
        %v3041 = vadd.f32 %v2926, %v3040
        %v3042 = vpop.f32.mrb[0].mxu0
        %v3043 = vadd.f32 %v2930, %v3042
        %v3044 = vpop.f32.mrb[0].mxu0
        %v3045 = vadd.f32 %v2926, %v3044
        %v3046 = vpop.f32.mrb[0].mxu0
        %v3047 = vadd.f32 %v2930, %v3046
        %3048 = vdwg.mxu0
        %3049 = vmatprep.subr.bf16.mxu0 %v2908
        %3050 = vmatpush1.bf16.msra.mxu0 %v2907
        %3051 = vmatprep.subr.bf16.mxu0 %v2912
        %3052 = vmatpush1.bf16.msra.mxu0 %v2911
        %3053 = vmatprep.subr.bf16.mxu0 %v2916
        %3054 = vmatpush1.bf16.msra.mxu0 %v2915
        %3055 = vmatprep.subr.bf16.mxu0 %v2920
        %3056 = vmatpush1.bf16.msra.mxu0 %v2919
        %3057 = vmatprep.subr.bf16.mxu0 0
        %3058 = vmatpush1.bf16.msra.mxu0 0
        %3059 = vmatprep.subr.bf16.mxu0 0
        %3060 = vmatpush1.bf16.msra.mxu0 0
        %3061 = vmatprep.subr.bf16.mxu0 0
        %3062 = vmatpush1.bf16.msra.mxu0 0
        %3063 = vmatprep.subr.bf16.mxu0 0
        %3064 = vmatpush1.bf16.msra.mxu0 0
        %3065 = vmatprep.subr.bf16.mxu0 0
        %3066 = vmatpush1.bf16.msra.mxu0 0
        %3067 = vmatprep.subr.bf16.mxu0 0
        %3068 = vmatpush1.bf16.msra.mxu0 0
        %3069 = vmatprep.subr.bf16.mxu0 0
        %3070 = vmatpush1.bf16.msra.mxu0 0
        %3071 = vmatprep.subr.bf16.mxu0 0
        %3072 = vmatpush1.bf16.msra.mxu0 0
        %3073 = vmatprep.subr.bf16.mxu0 0
        %3074 = vmatpush1.bf16.msra.mxu0 0
        %3075 = vmatprep.subr.bf16.mxu0 0
        %3076 = vmatpush1.bf16.msra.mxu0 0
        %3077 = vmatprep.subr.bf16.mxu0 0
        %3078 = vmatpush1.bf16.msra.mxu0 0
        %3079 = vmatprep.subr.bf16.mxu0 0
        %3080 = vmatpush1.bf16.msra.mxu0 0
        %3081 = vmatprep.mubr.bf16.mxu0 0
        %3082 = vmatmul.mubr.bf16.gmra.mrb[0].mxu0 %v2965
        %v3083 = vpop.f32.mrb[0].mxu0
        %v3084 = vadd.f32 %v2934, %v3083
        %v3085 = vpop.f32.mrb[0].mxu0
        %v3086 = vadd.f32 %v2938, %v3085
        %v3087 = vpop.f32.mrb[0].mxu0
        %v3088 = vadd.f32 %v2934, %v3087
        %v3089 = vpop.f32.mrb[0].mxu0
        %v3090 = vadd.f32 %v2938, %v3089
        %3091 = vmatprep.mubr.bf16.mxu0 0
        %3092 = vmatmul.mubr.bf16.gmra.mrb[0].mxu0 %v2968
        %v3093 = vpop.f32.mrb[0].mxu0
        %v3094 = vadd.f32 %v2934, %v3093
        %v3095 = vpop.f32.mrb[0].mxu0
        %v3096 = vadd.f32 %v2938, %v3095
        %v3097 = vpop.f32.mrb[0].mxu0
        %v3098 = vadd.f32 %v2934, %v3097
        %v3099 = vpop.f32.mrb[0].mxu0
        %v3100 = vadd.f32 %v2938, %v3099
        %3101 = vmatprep.mubr.bf16.mxu0 0
        %3102 = vmatmul.mubr.bf16.gmra.mrb[0].mxu0 %v2971
        %v3103 = vpop.f32.mrb[0].mxu0
        %v3104 = vadd.f32 %v2934, %v3103
        %v3105 = vpop.f32.mrb[0].mxu0
        %v3106 = vadd.f32 %v2938, %v3105
        %v3107 = vpop.f32.mrb[0].mxu0
        %v3108 = vadd.f32 %v2934, %v3107
        %v3109 = vpop.f32.mrb[0].mxu0
        %v3110 = vadd.f32 %v2938, %v3109
        %3111 = vmatprep.mubr.bf16.mxu0 0
        %3112 = vmatmul.mubr.bf16.gmra.mrb[0].mxu0 %v2974
        %v3113 = vpop.f32.mrb[0].mxu0
        %v3114 = vadd.f32 %v2934, %v3113
        %v3115 = vpop.f32.mrb[0].mxu0
        %v3116 = vadd.f32 %v2938, %v3115
        %v3117 = vpop.f32.mrb[0].mxu0
        %v3118 = vadd.f32 %v2934, %v3117
        %v3119 = vpop.f32.mrb[0].mxu0
        %v3120 = vadd.f32 %v2938, %v3119
        %3121 = vdwg.mxu0
        %v3122 = vmax.f32 %v3011, 0.0
        %v3123 = vmax.f32 %v3013, 0.0
        %v3124 = vmax.f32 %v3084, 0.0
        %v3125 = vmax.f32 %v3086, 0.0
        %v3126 = vmax.f32 %v3015, 0.0
        %v3127 = vmax.f32 %v3017, 0.0
        %v3128 = vmax.f32 %v3088, 0.0
        %v3129 = vmax.f32 %v3090, 0.0
        %v3130 = vmax.f32 %v3021, 0.0
        %v3131 = vmax.f32 %v3023, 0.0
        %v3132 = vmax.f32 %v3094, 0.0
        %v3133 = vmax.f32 %v3096, 0.0
        %v3134 = vmax.f32 %v3025, 0.0
        %v3135 = vmax.f32 %v3027, 0.0
        %v3136 = vmax.f32 %v3098, 0.0
        %v3137 = vmax.f32 %v3100, 0.0
        %v3138 = vmax.f32 %v3031, 0.0
        %v3139 = vmax.f32 %v3033, 0.0
        %v3140 = vmax.f32 %v3104, 0.0
        %v3141 = vmax.f32 %v3106, 0.0
        %v3142 = vmax.f32 %v3035, 0.0
        %v3143 = vmax.f32 %v3037, 0.0
        %v3144 = vmax.f32 %v3108, 0.0
        %v3145 = vmax.f32 %v3110, 0.0
        %v3146 = vmax.f32 %v3041, 0.0
        %v3147 = vmax.f32 %v3043, 0.0
        %v3148 = vmax.f32 %v3114, 0.0
        %v3149 = vmax.f32 %v3116, 0.0
        %v3150 = vmax.f32 %v3045, 0.0
        %v3151 = vmax.f32 %v3047, 0.0
        %v3152 = vmax.f32 %v3118, 0.0
        %v3153 = vmax.f32 %v3120, 0.0
        %v3154 = vpack.c.bf16 %v3126, %v3122
        %v3155 = vpack.c.bf16 %v3127, %v3123
        %v3156 = vpack.c.bf16 %v3128, %v3124
        %v3157 = vpack.c.bf16 %v3129, %v3125
        %v3158 = vpack.c.bf16 %v3134, %v3130
        %v3159 = vpack.c.bf16 %v3135, %v3131
        %v3160 = vpack.c.bf16 %v3136, %v3132
        %v3161 = vpack.c.bf16 %v3137, %v3133
        %v3162 = vpack.c.bf16 %v3142, %v3138
        %v3163 = vpack.c.bf16 %v3143, %v3139
        %v3164 = vpack.c.bf16 %v3144, %v3140
        %v3165 = vpack.c.bf16 %v3145, %v3141
        %v3166 = vpack.c.bf16 %v3150, %v3146
        %v3167 = vpack.c.bf16 %v3151, %v3147
        %v3168 = vpack.c.bf16 %v3152, %v3148
        %v3169 = vpack.c.bf16 %v3153, %v3149
        %v3170 = vld [vmem:[#allocation8] sm:$0xff]
        %v3171 = vld [vmem:[#allocation8 + $0x8] sm:$0xff]
        %v3172 = vld [vmem:[#allocation8 + $0x10] sm:$0xff]
        %v3173 = vld [vmem:[#allocation8 + $0x18] sm:$0xff]
        %v3174 = vld [vmem:[#allocation8 + $0x20] sm:$0xff]
        %v3175 = vld [vmem:[#allocation8 + $0x28] sm:$0xff]
        %v3176 = vld [vmem:[#allocation8 + $0x30] sm:$0xff]
        %v3177 = vld [vmem:[#allocation8 + $0x38] sm:$0xff]
        %v3178 = vld [vmem:[#allocation8 + $0x40] sm:$0xff]
        %v3179 = vld [vmem:[#allocation8 + $0x48] sm:$0xff]
        %v3180 = vld [vmem:[#allocation8 + $0x50] sm:$0xff]
        %v3181 = vld [vmem:[#allocation8 + $0x58] sm:$0xff]
        %v3182 = vld [vmem:[#allocation8 + $0x60] sm:$0xff]
        %v3183 = vld [vmem:[#allocation8 + $0x68] sm:$0xff]
        %v3184 = vld [vmem:[#allocation8 + $0x70] sm:$0xff]
        %v3185 = vld [vmem:[#allocation8 + $0x78] sm:$0xff]
        %v3186 = vld [vmem:[#allocation8 + $0x80] sm:$0xff]
        %v3187 = vld [vmem:[#allocation8 + $0x88] sm:$0xff]
        %v3188 = vld [vmem:[#allocation8 + $0x90] sm:$0xff]
        %v3189 = vld [vmem:[#allocation8 + $0x98] sm:$0xff]
        %v3190 = vld [vmem:[#allocation8 + $0xa0] sm:$0xff]
        %v3191 = vld [vmem:[#allocation8 + $0xa8] sm:$0xff]
        %v3192 = vld [vmem:[#allocation8 + $0xb0] sm:$0xff]
        %v3193 = vld [vmem:[#allocation8 + $0xb8] sm:$0xff]
        %v3194 = vld [vmem:[#allocation8 + $0xc0] sm:$0xff]
        %v3195 = vld [vmem:[#allocation8 + $0xc8] sm:$0xff]
        %v3196 = vld [vmem:[#allocation8 + $0xd0] sm:$0xff]
        %v3197 = vld [vmem:[#allocation8 + $0xd8] sm:$0xff]
        %v3198 = vld [vmem:[#allocation8 + $0xe0] sm:$0xff]
        %v3199 = vld [vmem:[#allocation8 + $0xe8] sm:$0xff]
        %v3200 = vld [vmem:[#allocation8 + $0xf0] sm:$0xff]
        %v3201 = vld [vmem:[#allocation8 + $0xf8] sm:$0xff]
        %v3202 = vld [vmem:[#allocation8 + $0x100] sm:$0xff]
        %v3203 = vld [vmem:[#allocation8 + $0x108] sm:$0xff]
        %v3204 = vld [vmem:[#allocation8 + $0x110] sm:$0xff]
        %v3205 = vld [vmem:[#allocation8 + $0x118] sm:$0xff]
        %v3206 = vld [vmem:[#allocation8 + $0x120] sm:$0xff]
        %v3207 = vld [vmem:[#allocation8 + $0x128] sm:$0xff]
        %v3208 = vld [vmem:[#allocation8 + $0x130] sm:$0xff]
        %v3209 = vld [vmem:[#allocation8 + $0x138] sm:$0xff]
        %v3210 = vld [vmem:[#allocation8 + $0x140] sm:$0xff]
        %v3211 = vld [vmem:[#allocation8 + $0x148] sm:$0xff]
        %v3212 = vld [vmem:[#allocation8 + $0x150] sm:$0xff]
        %v3213 = vld [vmem:[#allocation8 + $0x158] sm:$0xff]
        %v3214 = vld [vmem:[#allocation8 + $0x160] sm:$0xff]
        %v3215 = vld [vmem:[#allocation8 + $0x168] sm:$0xff]
        %v3216 = vld [vmem:[#allocation8 + $0x170] sm:$0xff]
        %v3217 = vld [vmem:[#allocation8 + $0x178] sm:$0xff]
        %v3218 = vld [vmem:[#allocation8 + $0x180] sm:$0xff]
        %v3219 = vld [vmem:[#allocation8 + $0x188] sm:$0xff]
        %v3220 = vld [vmem:[#allocation8 + $0x190] sm:$0xff]
        %v3221 = vld [vmem:[#allocation8 + $0x198] sm:$0xff]
        %v3222 = vld [vmem:[#allocation8 + $0x1a0] sm:$0xff]
        %v3223 = vld [vmem:[#allocation8 + $0x1a8] sm:$0xff]
        %v3224 = vld [vmem:[#allocation8 + $0x1b0] sm:$0xff]
        %v3225 = vld [vmem:[#allocation8 + $0x1b8] sm:$0xff]
        %v3226 = vld [vmem:[#allocation8 + $0x1c0] sm:$0xff]
        %v3227 = vld [vmem:[#allocation8 + $0x1c8] sm:$0xff]
        %v3228 = vld [vmem:[#allocation8 + $0x1d0] sm:$0xff]
        %v3229 = vld [vmem:[#allocation8 + $0x1d8] sm:$0xff]
        %v3230 = vld [vmem:[#allocation8 + $0x1e0] sm:$0xff]
        %v3231 = vld [vmem:[#allocation8 + $0x1e8] sm:$0xff]
        %v3232 = vld [vmem:[#allocation8 + $0x1f0] sm:$0xff]
        %v3233 = vld [vmem:[#allocation8 + $0x1f8] sm:$0xff]
        %v3298 = vunpack.c.l.b16 %v3170
        %v3299 = vunpack.c.h.b16 %v3170
        %v3300 = vunpack.c.l.b16 %v3171
        %v3301 = vunpack.c.h.b16 %v3171
        %v3302 = vunpack.c.l.b16 %v3172
        %v3303 = vunpack.c.h.b16 %v3172
        %v3304 = vunpack.c.l.b16 %v3173
        %v3305 = vunpack.c.h.b16 %v3173
        %v3306 = vunpack.c.l.b16 %v3174
        %v3307 = vunpack.c.h.b16 %v3174
        %v3308 = vunpack.c.l.b16 %v3175
        %v3309 = vunpack.c.h.b16 %v3175
        %v3310 = vunpack.c.l.b16 %v3176
        %v3311 = vunpack.c.h.b16 %v3176
        %v3312 = vunpack.c.l.b16 %v3177
        %v3313 = vunpack.c.h.b16 %v3177
        %v3314 = vunpack.c.l.b16 %v3178
        %v3315 = vunpack.c.h.b16 %v3178
        %v3316 = vunpack.c.l.b16 %v3179
        %v3317 = vunpack.c.h.b16 %v3179
        %v3318 = vunpack.c.l.b16 %v3180
        %v3319 = vunpack.c.h.b16 %v3180
        %v3320 = vunpack.c.l.b16 %v3181
        %v3321 = vunpack.c.h.b16 %v3181
        %v3322 = vunpack.c.l.b16 %v3182
        %v3323 = vunpack.c.h.b16 %v3182
        %v3324 = vunpack.c.l.b16 %v3183
        %v3325 = vunpack.c.h.b16 %v3183
        %v3326 = vunpack.c.l.b16 %v3184
        %v3327 = vunpack.c.h.b16 %v3184
        %v3328 = vunpack.c.l.b16 %v3185
        %v3329 = vunpack.c.h.b16 %v3185
        %v3330 = vunpack.c.l.b16 %v3186
        %v3331 = vunpack.c.h.b16 %v3186
        %v3332 = vunpack.c.l.b16 %v3187
        %v3333 = vunpack.c.h.b16 %v3187
        %v3334 = vunpack.c.l.b16 %v3188
        %v3335 = vunpack.c.h.b16 %v3188
        %v3336 = vunpack.c.l.b16 %v3189
        %v3337 = vunpack.c.h.b16 %v3189
        %v3338 = vunpack.c.l.b16 %v3190
        %v3339 = vunpack.c.h.b16 %v3190
        %v3340 = vunpack.c.l.b16 %v3191
        %v3341 = vunpack.c.h.b16 %v3191
        %v3342 = vunpack.c.l.b16 %v3192
        %v3343 = vunpack.c.h.b16 %v3192
        %v3344 = vunpack.c.l.b16 %v3193
        %v3345 = vunpack.c.h.b16 %v3193
        %v3346 = vunpack.c.l.b16 %v3194
        %v3347 = vunpack.c.h.b16 %v3194
        %v3348 = vunpack.c.l.b16 %v3195
        %v3349 = vunpack.c.h.b16 %v3195
        %v3350 = vunpack.c.l.b16 %v3196
        %v3351 = vunpack.c.h.b16 %v3196
        %v3352 = vunpack.c.l.b16 %v3197
        %v3353 = vunpack.c.h.b16 %v3197
        %v3354 = vunpack.c.l.b16 %v3198
        %v3355 = vunpack.c.h.b16 %v3198
        %v3356 = vunpack.c.l.b16 %v3199
        %v3357 = vunpack.c.h.b16 %v3199
        %v3358 = vunpack.c.l.b16 %v3200
        %v3359 = vunpack.c.h.b16 %v3200
        %v3360 = vunpack.c.l.b16 %v3201
        %v3361 = vunpack.c.h.b16 %v3201
        %v3362 = vunpack.c.l.b16 %v3202
        %v3363 = vunpack.c.h.b16 %v3202
        %v3364 = vunpack.c.l.b16 %v3203
        %v3365 = vunpack.c.h.b16 %v3203
        %v3366 = vunpack.c.l.b16 %v3204
        %v3367 = vunpack.c.h.b16 %v3204
        %v3368 = vunpack.c.l.b16 %v3205
        %v3369 = vunpack.c.h.b16 %v3205
        %v3370 = vunpack.c.l.b16 %v3206
        %v3371 = vunpack.c.h.b16 %v3206
        %v3372 = vunpack.c.l.b16 %v3207
        %v3373 = vunpack.c.h.b16 %v3207
        %v3374 = vunpack.c.l.b16 %v3208
        %v3375 = vunpack.c.h.b16 %v3208
        %v3376 = vunpack.c.l.b16 %v3209
        %v3377 = vunpack.c.h.b16 %v3209
        %v3378 = vunpack.c.l.b16 %v3210
        %v3379 = vunpack.c.h.b16 %v3210
        %v3380 = vunpack.c.l.b16 %v3211
        %v3381 = vunpack.c.h.b16 %v3211
        %v3382 = vunpack.c.l.b16 %v3212
        %v3383 = vunpack.c.h.b16 %v3212
        %v3384 = vunpack.c.l.b16 %v3213
        %v3385 = vunpack.c.h.b16 %v3213
        %v3386 = vunpack.c.l.b16 %v3214
        %v3387 = vunpack.c.h.b16 %v3214
        %v3388 = vunpack.c.l.b16 %v3215
        %v3389 = vunpack.c.h.b16 %v3215
        %v3390 = vunpack.c.l.b16 %v3216
        %v3391 = vunpack.c.h.b16 %v3216
        %v3392 = vunpack.c.l.b16 %v3217
        %v3393 = vunpack.c.h.b16 %v3217
        %v3394 = vunpack.c.l.b16 %v3218
        %v3395 = vunpack.c.h.b16 %v3218
        %v3396 = vunpack.c.l.b16 %v3219
        %v3397 = vunpack.c.h.b16 %v3219
        %v3398 = vunpack.c.l.b16 %v3220
        %v3399 = vunpack.c.h.b16 %v3220
        %v3400 = vunpack.c.l.b16 %v3221
        %v3401 = vunpack.c.h.b16 %v3221
        %v3402 = vunpack.c.l.b16 %v3222
        %v3403 = vunpack.c.h.b16 %v3222
        %v3404 = vunpack.c.l.b16 %v3223
        %v3405 = vunpack.c.h.b16 %v3223
        %v3406 = vunpack.c.l.b16 %v3224
        %v3407 = vunpack.c.h.b16 %v3224
        %v3408 = vunpack.c.l.b16 %v3225
        %v3409 = vunpack.c.h.b16 %v3225
        %v3410 = vunpack.c.l.b16 %v3226
        %v3411 = vunpack.c.h.b16 %v3226
        %v3412 = vunpack.c.l.b16 %v3227
        %v3413 = vunpack.c.h.b16 %v3227
        %v3414 = vunpack.c.l.b16 %v3228
        %v3415 = vunpack.c.h.b16 %v3228
        %v3416 = vunpack.c.l.b16 %v3229
        %v3417 = vunpack.c.h.b16 %v3229
        %v3418 = vunpack.c.l.b16 %v3230
        %v3419 = vunpack.c.h.b16 %v3230
        %v3420 = vunpack.c.l.b16 %v3231
        %v3421 = vunpack.c.h.b16 %v3231
        %v3422 = vunpack.c.l.b16 %v3232
        %v3423 = vunpack.c.h.b16 %v3232
        %v3424 = vunpack.c.l.b16 %v3233
        %v3425 = vunpack.c.h.b16 %v3233
        %v3426 = vpack.c.b16 %v3300, %v3298
        %v3427 = vpack.c.b16 %v3301, %v3299
        %v3428 = vpack.c.b16 %v3304, %v3302
        %v3429 = vpack.c.b16 %v3305, %v3303
        %v3430 = vpack.c.b16 %v3308, %v3306
        %v3431 = vpack.c.b16 %v3309, %v3307
        %v3432 = vpack.c.b16 %v3312, %v3310
        %v3433 = vpack.c.b16 %v3313, %v3311
        %v3434 = vpack.c.b16 %v3316, %v3314
        %v3435 = vpack.c.b16 %v3317, %v3315
        %v3436 = vpack.c.b16 %v3320, %v3318
        %v3437 = vpack.c.b16 %v3321, %v3319
        %v3438 = vpack.c.b16 %v3324, %v3322
        %v3439 = vpack.c.b16 %v3325, %v3323
        %v3440 = vpack.c.b16 %v3328, %v3326
        %v3441 = vpack.c.b16 %v3329, %v3327
        %v3442 = vpack.c.b16 %v3332, %v3330
        %v3443 = vpack.c.b16 %v3333, %v3331
        %v3444 = vpack.c.b16 %v3336, %v3334
        %v3445 = vpack.c.b16 %v3337, %v3335
        %v3446 = vpack.c.b16 %v3340, %v3338
        %v3447 = vpack.c.b16 %v3341, %v3339
        %v3448 = vpack.c.b16 %v3344, %v3342
        %v3449 = vpack.c.b16 %v3345, %v3343
        %v3450 = vpack.c.b16 %v3348, %v3346
        %v3451 = vpack.c.b16 %v3349, %v3347
        %v3452 = vpack.c.b16 %v3352, %v3350
        %v3453 = vpack.c.b16 %v3353, %v3351
        %v3454 = vpack.c.b16 %v3356, %v3354
        %v3455 = vpack.c.b16 %v3357, %v3355
        %v3456 = vpack.c.b16 %v3360, %v3358
        %v3457 = vpack.c.b16 %v3361, %v3359
        %v3458 = vpack.c.b16 %v3364, %v3362
        %v3459 = vpack.c.b16 %v3365, %v3363
        %v3460 = vpack.c.b16 %v3368, %v3366
        %v3461 = vpack.c.b16 %v3369, %v3367
        %v3462 = vpack.c.b16 %v3372, %v3370
        %v3463 = vpack.c.b16 %v3373, %v3371
        %v3464 = vpack.c.b16 %v3376, %v3374
        %v3465 = vpack.c.b16 %v3377, %v3375
        %v3466 = vpack.c.b16 %v3380, %v3378
        %v3467 = vpack.c.b16 %v3381, %v3379
        %v3468 = vpack.c.b16 %v3384, %v3382
        %v3469 = vpack.c.b16 %v3385, %v3383
        %v3470 = vpack.c.b16 %v3388, %v3386
        %v3471 = vpack.c.b16 %v3389, %v3387
        %v3472 = vpack.c.b16 %v3392, %v3390
        %v3473 = vpack.c.b16 %v3393, %v3391
        %v3474 = vpack.c.b16 %v3396, %v3394
        %v3475 = vpack.c.b16 %v3397, %v3395
        %v3476 = vpack.c.b16 %v3400, %v3398
        %v3477 = vpack.c.b16 %v3401, %v3399
        %v3478 = vpack.c.b16 %v3404, %v3402
        %v3479 = vpack.c.b16 %v3405, %v3403
        %v3480 = vpack.c.b16 %v3408, %v3406
        %v3481 = vpack.c.b16 %v3409, %v3407
        %v3482 = vpack.c.b16 %v3412, %v3410
        %v3483 = vpack.c.b16 %v3413, %v3411
        %v3484 = vpack.c.b16 %v3416, %v3414
        %v3485 = vpack.c.b16 %v3417, %v3415
        %v3486 = vpack.c.b16 %v3420, %v3418
        %v3487 = vpack.c.b16 %v3421, %v3419
        %v3488 = vpack.c.b16 %v3424, %v3422
        %v3489 = vpack.c.b16 %v3425, %v3423
        %3554 = vmatprep.subr.bf16.mxu0 %v3427
        %3555 = vmatpush1.bf16.msra.mxu0 %v3426
        %3556 = vmatprep.subr.bf16.mxu0 %v3429
        %3557 = vmatpush1.bf16.msra.mxu0 %v3428
        %3558 = vmatprep.subr.bf16.mxu0 %v3431
        %3559 = vmatpush1.bf16.msra.mxu0 %v3430
        %3560 = vmatprep.subr.bf16.mxu0 %v3433
        %3561 = vmatpush1.bf16.msra.mxu0 %v3432
        %3562 = vmatprep.subr.bf16.mxu0 %v3435
        %3563 = vmatpush1.bf16.msra.mxu0 %v3434
        %3564 = vmatprep.subr.bf16.mxu0 %v3437
        %3565 = vmatpush1.bf16.msra.mxu0 %v3436
        %3566 = vmatprep.subr.bf16.mxu0 %v3439
        %3567 = vmatpush1.bf16.msra.mxu0 %v3438
        %3568 = vmatprep.subr.bf16.mxu0 %v3441
        %3569 = vmatpush1.bf16.msra.mxu0 %v3440
        %3570 = vmatprep.subr.bf16.mxu0 %v3443
        %3571 = vmatpush1.bf16.msra.mxu0 %v3442
        %3572 = vmatprep.subr.bf16.mxu0 %v3445
        %3573 = vmatpush1.bf16.msra.mxu0 %v3444
        %3574 = vmatprep.subr.bf16.mxu0 %v3447
        %3575 = vmatpush1.bf16.msra.mxu0 %v3446
        %3576 = vmatprep.subr.bf16.mxu0 %v3449
        %3577 = vmatpush1.bf16.msra.mxu0 %v3448
        %3578 = vmatprep.subr.bf16.mxu0 %v3451
        %3579 = vmatpush1.bf16.msra.mxu0 %v3450
        %3580 = vmatprep.subr.bf16.mxu0 %v3453
        %3581 = vmatpush1.bf16.msra.mxu0 %v3452
        %3582 = vmatprep.subr.bf16.mxu0 %v3455
        %3583 = vmatpush1.bf16.msra.mxu0 %v3454
        %3584 = vmatprep.subr.bf16.mxu0 %v3457
        %3585 = vmatpush1.bf16.msra.mxu0 %v3456
        %3586 = vmatprep.mubr.bf16.mxu0 %v3155
        %3587 = vmatmul.mubr.bf16.gmra.mrb[0].mxu0 %v3154
        %v3588 = vpop.f32.mrb[0].mxu0
        %v3589 = vadd.f32 0.0, %v3588
        %v3590 = vpop.f32.mrb[0].mxu0
        %v3591 = vadd.f32 0.0, %v3590
        %v3592 = vpop.f32.mrb[0].mxu0
        %v3593 = vadd.f32 0.0, %v3592
        %v3594 = vpop.f32.mrb[0].mxu0
        %v3595 = vadd.f32 0.0, %v3594
        %3596 = vmatprep.mubr.bf16.mxu0 %v3159
        %3597 = vmatmul.mubr.bf16.gmra.mrb[0].mxu0 %v3158
        %v3598 = vpop.f32.mrb[0].mxu0
        %v3599 = vadd.f32 0.0, %v3598
        %v3600 = vpop.f32.mrb[0].mxu0
        %v3601 = vadd.f32 0.0, %v3600
        %v3602 = vpop.f32.mrb[0].mxu0
        %v3603 = vadd.f32 0.0, %v3602
        %v3604 = vpop.f32.mrb[0].mxu0
        %v3605 = vadd.f32 0.0, %v3604
        %3606 = vmatprep.mubr.bf16.mxu0 %v3163
        %3607 = vmatmul.mubr.bf16.gmra.mrb[0].mxu0 %v3162
        %v3608 = vpop.f32.mrb[0].mxu0
        %v3609 = vadd.f32 0.0, %v3608
        %v3610 = vpop.f32.mrb[0].mxu0
        %v3611 = vadd.f32 0.0, %v3610
        %v3612 = vpop.f32.mrb[0].mxu0
        %v3613 = vadd.f32 0.0, %v3612
        %v3614 = vpop.f32.mrb[0].mxu0
        %v3615 = vadd.f32 0.0, %v3614
        %3616 = vmatprep.mubr.bf16.mxu0 %v3167
        %3617 = vmatmul.mubr.bf16.gmra.mrb[0].mxu0 %v3166
        %v3618 = vpop.f32.mrb[0].mxu0
        %v3619 = vadd.f32 0.0, %v3618
        %v3620 = vpop.f32.mrb[0].mxu0
        %v3621 = vadd.f32 0.0, %v3620
        %v3622 = vpop.f32.mrb[0].mxu0
        %v3623 = vadd.f32 0.0, %v3622
        %v3624 = vpop.f32.mrb[0].mxu0
        %v3625 = vadd.f32 0.0, %v3624
        %3626 = vdwg.mxu0
        %3627 = vmatprep.subr.bf16.mxu0 %v3459
        %3628 = vmatpush1.bf16.msra.mxu0 %v3458
        %3629 = vmatprep.subr.bf16.mxu0 %v3461
        %3630 = vmatpush1.bf16.msra.mxu0 %v3460
        %3631 = vmatprep.subr.bf16.mxu0 %v3463
        %3632 = vmatpush1.bf16.msra.mxu0 %v3462
        %3633 = vmatprep.subr.bf16.mxu0 %v3465
        %3634 = vmatpush1.bf16.msra.mxu0 %v3464
        %3635 = vmatprep.subr.bf16.mxu0 %v3467
        %3636 = vmatpush1.bf16.msra.mxu0 %v3466
        %3637 = vmatprep.subr.bf16.mxu0 %v3469
        %3638 = vmatpush1.bf16.msra.mxu0 %v3468
        %3639 = vmatprep.subr.bf16.mxu0 %v3471
        %3640 = vmatpush1.bf16.msra.mxu0 %v3470
        %3641 = vmatprep.subr.bf16.mxu0 %v3473
        %3642 = vmatpush1.bf16.msra.mxu0 %v3472
        %3643 = vmatprep.subr.bf16.mxu0 %v3475
        %3644 = vmatpush1.bf16.msra.mxu0 %v3474
        %3645 = vmatprep.subr.bf16.mxu0 %v3477
        %3646 = vmatpush1.bf16.msra.mxu0 %v3476
        %3647 = vmatprep.subr.bf16.mxu0 %v3479
        %3648 = vmatpush1.bf16.msra.mxu0 %v3478
        %3649 = vmatprep.subr.bf16.mxu0 %v3481
        %3650 = vmatpush1.bf16.msra.mxu0 %v3480
        %3651 = vmatprep.subr.bf16.mxu0 %v3483
        %3652 = vmatpush1.bf16.msra.mxu0 %v3482
        %3653 = vmatprep.subr.bf16.mxu0 %v3485
        %3654 = vmatpush1.bf16.msra.mxu0 %v3484
        %3655 = vmatprep.subr.bf16.mxu0 %v3487
        %3656 = vmatpush1.bf16.msra.mxu0 %v3486
        %3657 = vmatprep.subr.bf16.mxu0 %v3489
        %3658 = vmatpush1.bf16.msra.mxu0 %v3488
        %3659 = vmatprep.mubr.bf16.mxu0 %v3157
        %3660 = vmatmul.mubr.bf16.gmra.mrb[0].mxu0 %v3156
        %v3661 = vpop.f32.mrb[0].mxu0
        %v3662 = vadd.f32 %v3589, %v3661
        %v3663 = vpop.f32.mrb[0].mxu0
        %v3664 = vadd.f32 %v3591, %v3663
        %v3665 = vpop.f32.mrb[0].mxu0
        %v3666 = vadd.f32 %v3593, %v3665
        %v3667 = vpop.f32.mrb[0].mxu0
        %v3668 = vadd.f32 %v3595, %v3667
        %3669 = vmatprep.mubr.bf16.mxu0 %v3161
        %3670 = vmatmul.mubr.bf16.gmra.mrb[0].mxu0 %v3160
        %v3671 = vpop.f32.mrb[0].mxu0
        %v3672 = vadd.f32 %v3599, %v3671
        %v3673 = vpop.f32.mrb[0].mxu0
        %v3674 = vadd.f32 %v3601, %v3673
        %v3675 = vpop.f32.mrb[0].mxu0
        %v3676 = vadd.f32 %v3603, %v3675
        %v3677 = vpop.f32.mrb[0].mxu0
        %v3678 = vadd.f32 %v3605, %v3677
        %3679 = vmatprep.mubr.bf16.mxu0 %v3165
        %3680 = vmatmul.mubr.bf16.gmra.mrb[0].mxu0 %v3164
        %v3681 = vpop.f32.mrb[0].mxu0
        %v3682 = vadd.f32 %v3609, %v3681
        %v3683 = vpop.f32.mrb[0].mxu0
        %v3684 = vadd.f32 %v3611, %v3683
        %v3685 = vpop.f32.mrb[0].mxu0
        %v3686 = vadd.f32 %v3613, %v3685
        %v3687 = vpop.f32.mrb[0].mxu0
        %v3688 = vadd.f32 %v3615, %v3687
        %3689 = vmatprep.mubr.bf16.mxu0 %v3169
        %3690 = vmatmul.mubr.bf16.gmra.mrb[0].mxu0 %v3168
        %v3691 = vpop.f32.mrb[0].mxu0
        %v3692 = vadd.f32 %v3619, %v3691
        %v3693 = vpop.f32.mrb[0].mxu0
        %v3694 = vadd.f32 %v3621, %v3693
        %v3695 = vpop.f32.mrb[0].mxu0
        %v3696 = vadd.f32 %v3623, %v3695
        %v3697 = vpop.f32.mrb[0].mxu0
        %v3698 = vadd.f32 %v3625, %v3697
        %3699 = vdwg.mxu0
        %v3700 = vpack.c.bf16 %v3666, %v3662
        %v3701 = vpack.c.bf16 %v3668, %v3664
        %v3702 = vpack.c.bf16 %v3676, %v3672
        %v3703 = vpack.c.bf16 %v3678, %v3674
        %v3704 = vpack.c.bf16 %v3686, %v3682
        %v3705 = vpack.c.bf16 %v3688, %v3684
        %v3706 = vpack.c.bf16 %v3696, %v3692
        %v3707 = vpack.c.bf16 %v3698, %v3694
        %v3708 = vld [vmem:[%s5] sm:$0x3]
        %v3710 = vlaneseq
        %v3711 = vshrl.u32 %v3710, 7
        %v3712 = vsub.s32 0, %v3711
        %v3713 = vrot.slane %v3708, %v3712
        %v3714 = vlaneseq
        %v3715 = vshrl.u32 %v3714, 7
        %v3716 = vsub.s32 1, %v3715
        %v3717 = vrot.slane %v3708, %v3716
        %3720 = vmatprep.subr.bf16.mxu0 %v3701
        %3721 = vmatpush1.bf16.msra.mxu0 %v3700
        %3722 = vmatprep.subr.bf16.mxu0 %v3703
        %3723 = vmatpush1.bf16.msra.mxu0 %v3702
        %3724 = vmatprep.subr.bf16.mxu0 %v3705
        %3725 = vmatpush1.bf16.msra.mxu0 %v3704
        %3726 = vmatprep.subr.bf16.mxu0 %v3707
        %3727 = vmatpush1.bf16.msra.mxu0 %v3706
        %3728 = vmatprep.subr.bf16.mxu0 0
        %3729 = vmatpush1.bf16.msra.mxu0 0
        %3730 = vmatprep.subr.bf16.mxu0 0
        %3731 = vmatpush1.bf16.msra.mxu0 0
        %3732 = vmatprep.subr.bf16.mxu0 0
        %3733 = vmatpush1.bf16.msra.mxu0 0
        %3734 = vmatprep.subr.bf16.mxu0 0
        %3735 = vmatpush1.bf16.msra.mxu0 0
        %3736 = vmatprep.subr.bf16.mxu0 0
        %3737 = vmatpush1.bf16.msra.mxu0 0
        %3738 = vmatprep.subr.bf16.mxu0 0
        %3739 = vmatpush1.bf16.msra.mxu0 0
        %3740 = vmatprep.subr.bf16.mxu0 0
        %3741 = vmatpush1.bf16.msra.mxu0 0
        %3742 = vmatprep.subr.bf16.mxu0 0
        %3743 = vmatpush1.bf16.msra.mxu0 0
        %3744 = vmatprep.subr.bf16.mxu0 0
        %3745 = vmatpush1.bf16.msra.mxu0 0
        %3746 = vmatprep.subr.bf16.mxu0 0
        %3747 = vmatpush1.bf16.msra.mxu0 0
        %3748 = vmatprep.subr.bf16.mxu0 0
        %3749 = vmatpush1.bf16.msra.mxu0 0
        %3750 = vmatprep.subr.bf16.mxu0 0
        %3751 = vmatpush1.bf16.msra.mxu0 0
        %3752 = vmatprep.mubr.bf16.mxu0 0
        %3753 = vmatmul.mubr.bf16.gmra.mrb[0].mxu0 %v2965
        %v3754 = vpop.f32.mrb[0].mxu0
        %v3755 = vadd.f32 %v3713, %v3754
        %v3756 = vpop.f32.mrb[0].mxu0
        %v3757 = vadd.f32 %v3717, %v3756
        %v3758 = vpop.f32.mrb[0].mxu0
        %v3759 = vadd.f32 %v3713, %v3758
        %v3760 = vpop.f32.mrb[0].mxu0
        %v3761 = vadd.f32 %v3717, %v3760
        %3762 = vmatprep.mubr.bf16.mxu0 0
        %3763 = vmatmul.mubr.bf16.gmra.mrb[0].mxu0 %v2968
        %v3764 = vpop.f32.mrb[0].mxu0
        %v3765 = vadd.f32 %v3713, %v3764
        %v3766 = vpop.f32.mrb[0].mxu0
        %v3767 = vadd.f32 %v3717, %v3766
        %v3768 = vpop.f32.mrb[0].mxu0
        %v3769 = vadd.f32 %v3713, %v3768
        %v3770 = vpop.f32.mrb[0].mxu0
        %v3771 = vadd.f32 %v3717, %v3770
        %3772 = vmatprep.mubr.bf16.mxu0 0
        %3773 = vmatmul.mubr.bf16.gmra.mrb[0].mxu0 %v2971
        %v3774 = vpop.f32.mrb[0].mxu0
        %v3775 = vadd.f32 %v3713, %v3774
        %v3776 = vpop.f32.mrb[0].mxu0
        %v3777 = vadd.f32 %v3717, %v3776
        %v3778 = vpop.f32.mrb[0].mxu0
        %v3779 = vadd.f32 %v3713, %v3778
        %v3780 = vpop.f32.mrb[0].mxu0
        %v3781 = vadd.f32 %v3717, %v3780
        %3782 = vmatprep.mubr.bf16.mxu0 0
        %3783 = vmatmul.mubr.bf16.gmra.mrb[0].mxu0 %v2974
        %v3784 = vpop.f32.mrb[0].mxu0
        %v3785 = vadd.f32 %v3713, %v3784
        %v3786 = vpop.f32.mrb[0].mxu0
        %v3787 = vadd.f32 %v3717, %v3786
        %v3788 = vpop.f32.mrb[0].mxu0
        %v3789 = vadd.f32 %v3713, %v3788
        %v3790 = vpop.f32.mrb[0].mxu0
        %v3791 = vadd.f32 %v3717, %v3790
        %3792 = vdwg.mxu0
        %v3793 = vmax.f32 %v3755, 0.0
        %v3794 = vmax.f32 %v3757, 0.0
        %v3795 = vmax.f32 %v3759, 0.0
        %v3796 = vmax.f32 %v3761, 0.0
        %v3797 = vmax.f32 %v3765, 0.0
        %v3798 = vmax.f32 %v3767, 0.0
        %v3799 = vmax.f32 %v3769, 0.0
        %v3800 = vmax.f32 %v3771, 0.0
        %v3801 = vmax.f32 %v3775, 0.0
        %v3802 = vmax.f32 %v3777, 0.0
        %v3803 = vmax.f32 %v3779, 0.0
        %v3804 = vmax.f32 %v3781, 0.0
        %v3805 = vmax.f32 %v3785, 0.0
        %v3806 = vmax.f32 %v3787, 0.0
        %v3807 = vmax.f32 %v3789, 0.0
        %v3808 = vmax.f32 %v3791, 0.0
        %v3809 = vpack.c.bf16 %v3795, %v3793
        %v3810 = vpack.c.bf16 %v3796, %v3794
        %v3811 = vpack.c.bf16 %v3799, %v3797
        %v3812 = vpack.c.bf16 %v3800, %v3798
        %v3813 = vpack.c.bf16 %v3803, %v3801
        %v3814 = vpack.c.bf16 %v3804, %v3802
        %v3815 = vpack.c.bf16 %v3807, %v3805
        %v3816 = vpack.c.bf16 %v3808, %v3806
        %v3817 = vld [vmem:[#allocation10] sm:$0xf]
        %v3818 = vld [vmem:[#allocation10 + $0x4] sm:$0xf]
        %v3819 = vld [vmem:[#allocation10 + $0x8] sm:$0xf]
        %v3820 = vld [vmem:[#allocation10 + $0xc] sm:$0xf]
        %v3821 = vld [vmem:[#allocation10 + $0x10] sm:$0xf]
        %v3822 = vld [vmem:[#allocation10 + $0x14] sm:$0xf]
        %v3823 = vld [vmem:[#allocation10 + $0x18] sm:$0xf]
        %v3824 = vld [vmem:[#allocation10 + $0x1c] sm:$0xf]
        %v3825 = vld [vmem:[#allocation10 + $0x20] sm:$0xf]
        %v3826 = vld [vmem:[#allocation10 + $0x24] sm:$0xf]
        %v3827 = vld [vmem:[#allocation10 + $0x28] sm:$0xf]
        %v3828 = vld [vmem:[#allocation10 + $0x2c] sm:$0xf]
        %v3829 = vld [vmem:[#allocation10 + $0x30] sm:$0xf]
        %v3830 = vld [vmem:[#allocation10 + $0x34] sm:$0xf]
        %v3831 = vld [vmem:[#allocation10 + $0x38] sm:$0xf]
        %v3832 = vld [vmem:[#allocation10 + $0x3c] sm:$0xf]
        %v3833 = vld [vmem:[#allocation10 + $0x40] sm:$0xf]
        %v3834 = vld [vmem:[#allocation10 + $0x44] sm:$0xf]
        %v3835 = vld [vmem:[#allocation10 + $0x48] sm:$0xf]
        %v3836 = vld [vmem:[#allocation10 + $0x4c] sm:$0xf]
        %v3837 = vld [vmem:[#allocation10 + $0x50] sm:$0xf]
        %v3838 = vld [vmem:[#allocation10 + $0x54] sm:$0xf]
        %v3839 = vld [vmem:[#allocation10 + $0x58] sm:$0xf]
        %v3840 = vld [vmem:[#allocation10 + $0x5c] sm:$0xf]
        %v3841 = vld [vmem:[#allocation10 + $0x60] sm:$0xf]
        %v3842 = vld [vmem:[#allocation10 + $0x64] sm:$0xf]
        %v3843 = vld [vmem:[#allocation10 + $0x68] sm:$0xf]
        %v3844 = vld [vmem:[#allocation10 + $0x6c] sm:$0xf]
        %v3845 = vld [vmem:[#allocation10 + $0x70] sm:$0xf]
        %v3846 = vld [vmem:[#allocation10 + $0x74] sm:$0xf]
        %v3847 = vld [vmem:[#allocation10 + $0x78] sm:$0xf]
        %v3848 = vld [vmem:[#allocation10 + $0x7c] sm:$0xf]
        %v3881 = vunpack.c.l.b16 %v3817
        %v3882 = vunpack.c.l.b16 %v3818
        %v3883 = vunpack.c.l.b16 %v3819
        %v3884 = vunpack.c.l.b16 %v3820
        %v3885 = vunpack.c.l.b16 %v3821
        %v3886 = vunpack.c.l.b16 %v3822
        %v3887 = vunpack.c.l.b16 %v3823
        %v3888 = vunpack.c.l.b16 %v3824
        %v3889 = vunpack.c.l.b16 %v3825
        %v3890 = vunpack.c.l.b16 %v3826
        %v3891 = vunpack.c.l.b16 %v3827
        %v3892 = vunpack.c.l.b16 %v3828
        %v3893 = vunpack.c.l.b16 %v3829
        %v3894 = vunpack.c.l.b16 %v3830
        %v3895 = vunpack.c.l.b16 %v3831
        %v3896 = vunpack.c.l.b16 %v3832
        %v3897 = vunpack.c.l.b16 %v3833
        %v3898 = vunpack.c.l.b16 %v3834
        %v3899 = vunpack.c.l.b16 %v3835
        %v3900 = vunpack.c.l.b16 %v3836
        %v3901 = vunpack.c.l.b16 %v3837
        %v3902 = vunpack.c.l.b16 %v3838
        %v3903 = vunpack.c.l.b16 %v3839
        %v3904 = vunpack.c.l.b16 %v3840
        %v3905 = vunpack.c.l.b16 %v3841
        %v3906 = vunpack.c.l.b16 %v3842
        %v3907 = vunpack.c.l.b16 %v3843
        %v3908 = vunpack.c.l.b16 %v3844
        %v3909 = vunpack.c.l.b16 %v3845
        %v3910 = vunpack.c.l.b16 %v3846
        %v3911 = vunpack.c.l.b16 %v3847
        %v3912 = vunpack.c.l.b16 %v3848
        %v3913 = vpack.c.b16 %v3882, %v3881
        %v3914 = vpack.c.b16 %v3884, %v3883
        %v3915 = vpack.c.b16 %v3886, %v3885
        %v3916 = vpack.c.b16 %v3888, %v3887
        %v3917 = vpack.c.b16 %v3890, %v3889
        %v3918 = vpack.c.b16 %v3892, %v3891
        %v3919 = vpack.c.b16 %v3894, %v3893
        %v3920 = vpack.c.b16 %v3896, %v3895
        %v3921 = vpack.c.b16 %v3898, %v3897
        %v3922 = vpack.c.b16 %v3900, %v3899
        %v3923 = vpack.c.b16 %v3902, %v3901
        %v3924 = vpack.c.b16 %v3904, %v3903
        %v3925 = vpack.c.b16 %v3906, %v3905
        %v3926 = vpack.c.b16 %v3908, %v3907
        %v3927 = vpack.c.b16 %v3910, %v3909
        %v3928 = vpack.c.b16 %v3912, %v3911
        %3945 = vmatprep.subr.bf16.mxu0 0
        %3946 = vmatpush1.bf16.msra.mxu0 %v3913
        %3947 = vmatprep.subr.bf16.mxu0 0
        %3948 = vmatpush1.bf16.msra.mxu0 %v3914
        %3949 = vmatprep.subr.bf16.mxu0 0
        %3950 = vmatpush1.bf16.msra.mxu0 %v3915
        %3951 = vmatprep.subr.bf16.mxu0 0
        %3952 = vmatpush1.bf16.msra.mxu0 %v3916
        %3953 = vmatprep.subr.bf16.mxu0 0
        %3954 = vmatpush1.bf16.msra.mxu0 %v3917
        %3955 = vmatprep.subr.bf16.mxu0 0
        %3956 = vmatpush1.bf16.msra.mxu0 %v3918
        %3957 = vmatprep.subr.bf16.mxu0 0
        %3958 = vmatpush1.bf16.msra.mxu0 %v3919
        %3959 = vmatprep.subr.bf16.mxu0 0
        %3960 = vmatpush1.bf16.msra.mxu0 %v3920
        %3961 = vmatprep.subr.bf16.mxu0 0
        %3962 = vmatpush1.bf16.msra.mxu0 %v3921
        %3963 = vmatprep.subr.bf16.mxu0 0
        %3964 = vmatpush1.bf16.msra.mxu0 %v3922
        %3965 = vmatprep.subr.bf16.mxu0 0
        %3966 = vmatpush1.bf16.msra.mxu0 %v3923
        %3967 = vmatprep.subr.bf16.mxu0 0
        %3968 = vmatpush1.bf16.msra.mxu0 %v3924
        %3969 = vmatprep.subr.bf16.mxu0 0
        %3970 = vmatpush1.bf16.msra.mxu0 %v3925
        %3971 = vmatprep.subr.bf16.mxu0 0
        %3972 = vmatpush1.bf16.msra.mxu0 %v3926
        %3973 = vmatprep.subr.bf16.mxu0 0
        %3974 = vmatpush1.bf16.msra.mxu0 %v3927
        %3975 = vmatprep.subr.bf16.mxu0 0
        %3976 = vmatpush1.bf16.msra.mxu0 %v3928
        %3977 = vmatprep.mubr.bf16.mxu0 %v3810
        %3978 = vmatmul.mubr.bf16.gmra.mrb[0].mxu0 %v3809
        %v3979 = vpop.f32.mrb[0].mxu0
        %v3980 = vadd.f32 0.0, %v3979
        %v3981 = vpop.f32.mrb[0].mxu0
        %v3982 = vpop.f32.mrb[0].mxu0
        %v3983 = vadd.f32 0.0, %v3982
        %v3984 = vpop.f32.mrb[0].mxu0
        %3985 = vmatprep.mubr.bf16.mxu0 %v3812
        %3986 = vmatmul.mubr.bf16.gmra.mrb[0].mxu0 %v3811
        %v3987 = vpop.f32.mrb[0].mxu0
        %v3988 = vadd.f32 0.0, %v3987
        %v3989 = vpop.f32.mrb[0].mxu0
        %v3990 = vpop.f32.mrb[0].mxu0
        %v3991 = vadd.f32 0.0, %v3990
        %v3992 = vpop.f32.mrb[0].mxu0
        %3993 = vmatprep.mubr.bf16.mxu0 %v3814
        %3994 = vmatmul.mubr.bf16.gmra.mrb[0].mxu0 %v3813
        %v3995 = vpop.f32.mrb[0].mxu0
        %v3996 = vadd.f32 0.0, %v3995
        %v3997 = vpop.f32.mrb[0].mxu0
        %v3998 = vpop.f32.mrb[0].mxu0
        %v3999 = vadd.f32 0.0, %v3998
        %v4000 = vpop.f32.mrb[0].mxu0
        %4001 = vmatprep.mubr.bf16.mxu0 %v3816
        %4002 = vmatmul.mubr.bf16.gmra.mrb[0].mxu0 %v3815
        %v4003 = vpop.f32.mrb[0].mxu0
        %v4004 = vadd.f32 0.0, %v4003
        %v4005 = vpop.f32.mrb[0].mxu0
        %v4006 = vpop.f32.mrb[0].mxu0
        %v4007 = vadd.f32 0.0, %v4006
        %v4008 = vpop.f32.mrb[0].mxu0
        %4009 = vdwg.mxu0
        %v4010 = vpack.c.bf16 %v3983, %v3980
        %v4011 = vpack.c.bf16 %v3991, %v3988
        %v4012 = vpack.c.bf16 %v3999, %v3996
        %v4013 = vpack.c.bf16 %v4007, %v4004
        %v4014 = vld [vmem:[%s7] sm:$0x1]
        %v4016 = vlaneseq
        %v4017 = vshrl.u32 %v4016, 7
        %v4018 = vsub.s32 0, %v4017
        %v4019 = vrot.slane %v4014, %v4018
        %4021 = vmatprep.subr.bf16.mxu0 0
        %4022 = vmatpush1.bf16.msra.mxu0 %v4010
        %4023 = vmatprep.subr.bf16.mxu0 0
        %4024 = vmatpush1.bf16.msra.mxu0 %v4011
        %4025 = vmatprep.subr.bf16.mxu0 0
        %4026 = vmatpush1.bf16.msra.mxu0 %v4012
        %4027 = vmatprep.subr.bf16.mxu0 0
        %4028 = vmatpush1.bf16.msra.mxu0 %v4013
        %4029 = vmatprep.subr.bf16.mxu0 0
        %4030 = vmatpush1.bf16.msra.mxu0 0
        %4031 = vmatprep.subr.bf16.mxu0 0
        %4032 = vmatpush1.bf16.msra.mxu0 0
        %4033 = vmatprep.subr.bf16.mxu0 0
        %4034 = vmatpush1.bf16.msra.mxu0 0
        %4035 = vmatprep.subr.bf16.mxu0 0
        %4036 = vmatpush1.bf16.msra.mxu0 0
        %4037 = vmatprep.subr.bf16.mxu0 0
        %4038 = vmatpush1.bf16.msra.mxu0 0
        %4039 = vmatprep.subr.bf16.mxu0 0
        %4040 = vmatpush1.bf16.msra.mxu0 0
        %4041 = vmatprep.subr.bf16.mxu0 0
        %4042 = vmatpush1.bf16.msra.mxu0 0
        %4043 = vmatprep.subr.bf16.mxu0 0
        %4044 = vmatpush1.bf16.msra.mxu0 0
        %4045 = vmatprep.subr.bf16.mxu0 0
        %4046 = vmatpush1.bf16.msra.mxu0 0
        %4047 = vmatprep.subr.bf16.mxu0 0
        %4048 = vmatpush1.bf16.msra.mxu0 0
        %4049 = vmatprep.subr.bf16.mxu0 0
        %4050 = vmatpush1.bf16.msra.mxu0 0
        %4051 = vmatprep.subr.bf16.mxu0 0
        %4052 = vmatpush1.bf16.msra.mxu0 0
        %4053 = vmatprep.mubr.bf16.mxu0 0
        %4054 = vmatmul.mubr.bf16.gmra.mrb[0].mxu0 %v2965
        %v4055 = vpop.f32.mrb[0].mxu0
        %v4056 = vadd.f32 %v4019, %v4055
        %v4057 = vpop.f32.mrb[0].mxu0
        %v4058 = vpop.f32.mrb[0].mxu0
        %v4059 = vadd.f32 %v4019, %v4058
        %v4060 = vpop.f32.mrb[0].mxu0
        %4061 = vmatprep.mubr.bf16.mxu0 0
        %4062 = vmatmul.mubr.bf16.gmra.mrb[0].mxu0 %v2968
        %v4063 = vpop.f32.mrb[0].mxu0
        %v4064 = vadd.f32 %v4019, %v4063
        %v4065 = vpop.f32.mrb[0].mxu0
        %v4066 = vpop.f32.mrb[0].mxu0
        %v4067 = vadd.f32 %v4019, %v4066
        %v4068 = vpop.f32.mrb[0].mxu0
        %4069 = vmatprep.mubr.bf16.mxu0 0
        %4070 = vmatmul.mubr.bf16.gmra.mrb[0].mxu0 %v2971
        %v4071 = vpop.f32.mrb[0].mxu0
        %v4072 = vadd.f32 %v4019, %v4071
        %v4073 = vpop.f32.mrb[0].mxu0
        %v4074 = vpop.f32.mrb[0].mxu0
        %v4075 = vadd.f32 %v4019, %v4074
        %v4076 = vpop.f32.mrb[0].mxu0
        %4077 = vmatprep.mubr.bf16.mxu0 0
        %4078 = vmatmul.mubr.bf16.gmra.mrb[0].mxu0 %v2974
        %v4079 = vpop.f32.mrb[0].mxu0
        %v4080 = vadd.f32 %v4019, %v4079
        %v4081 = vpop.f32.mrb[0].mxu0
        %v4082 = vpop.f32.mrb[0].mxu0
        %v4083 = vadd.f32 %v4019, %v4082
        %v4084 = vpop.f32.mrb[0].mxu0
        %4085 = vdwg.mxu0
        %v4086 = vmax.f32 %v4056, 0.0
        %v4087 = vmax.f32 %v4059, 0.0
        %v4088 = vmax.f32 %v4064, 0.0
        %v4089 = vmax.f32 %v4067, 0.0
        %v4090 = vmax.f32 %v4072, 0.0
        %v4091 = vmax.f32 %v4075, 0.0
        %v4092 = vmax.f32 %v4080, 0.0
        %v4093 = vmax.f32 %v4083, 0.0
        %v4094 = vpack.c.bf16 %v4087, %v4086
        %v4095 = vpack.c.bf16 %v4089, %v4088
        %v4096 = vpack.c.bf16 %v4091, %v4090
        %v4097 = vpack.c.bf16 %v4093, %v4092
        %v4098 = vld [vmem:[#allocation11] sm:$0xf]
        %v4099 = vld [vmem:[#allocation11 + $0x4] sm:$0xf]
        %v4100 = vld [vmem:[#allocation11 + $0x8] sm:$0xf]
        %v4101 = vld [vmem:[#allocation11 + $0xc] sm:$0xf]
        %v4102 = vld [vmem:[#allocation11 + $0x10] sm:$0xf]
        %v4103 = vld [vmem:[#allocation11 + $0x14] sm:$0xf]
        %v4104 = vld [vmem:[#allocation11 + $0x18] sm:$0xf]
        %v4105 = vld [vmem:[#allocation11 + $0x1c] sm:$0xf]
        %v4106 = vld [vmem:[#allocation11 + $0x20] sm:$0xf]
        %v4107 = vld [vmem:[#allocation11 + $0x24] sm:$0xf]
        %v4108 = vld [vmem:[#allocation11 + $0x28] sm:$0xf]
        %v4109 = vld [vmem:[#allocation11 + $0x2c] sm:$0xf]
        %v4110 = vld [vmem:[#allocation11 + $0x30] sm:$0xf]
        %v4111 = vld [vmem:[#allocation11 + $0x34] sm:$0xf]
        %v4112 = vld [vmem:[#allocation11 + $0x38] sm:$0xf]
        %v4113 = vld [vmem:[#allocation11 + $0x3c] sm:$0xf]
        %v4130 = vunpack.c.l.b16 %v4098
        %v4131 = vunpack.c.l.b16 %v4099
        %v4132 = vunpack.c.l.b16 %v4100
        %v4133 = vunpack.c.l.b16 %v4101
        %v4134 = vunpack.c.l.b16 %v4102
        %v4135 = vunpack.c.l.b16 %v4103
        %v4136 = vunpack.c.l.b16 %v4104
        %v4137 = vunpack.c.l.b16 %v4105
        %v4138 = vunpack.c.l.b16 %v4106
        %v4139 = vunpack.c.l.b16 %v4107
        %v4140 = vunpack.c.l.b16 %v4108
        %v4141 = vunpack.c.l.b16 %v4109
        %v4142 = vunpack.c.l.b16 %v4110
        %v4143 = vunpack.c.l.b16 %v4111
        %v4144 = vunpack.c.l.b16 %v4112
        %v4145 = vunpack.c.l.b16 %v4113
        %v4146 = vpack.c.b16 %v4131, %v4130
        %v4147 = vpack.c.b16 %v4133, %v4132
        %v4148 = vpack.c.b16 %v4135, %v4134
        %v4149 = vpack.c.b16 %v4137, %v4136
        %v4150 = vpack.c.b16 %v4139, %v4138
        %v4151 = vpack.c.b16 %v4141, %v4140
        %v4152 = vpack.c.b16 %v4143, %v4142
        %v4153 = vpack.c.b16 %v4145, %v4144
        %4162 = vmatprep.subr.bf16.mxu0 0
        %4163 = vmatpush1.bf16.msra.mxu0 %v4146
        %4164 = vmatprep.subr.bf16.mxu0 0
        %4165 = vmatpush1.bf16.msra.mxu0 %v4147
        %4166 = vmatprep.subr.bf16.mxu0 0
        %4167 = vmatpush1.bf16.msra.mxu0 %v4148
        %4168 = vmatprep.subr.bf16.mxu0 0
        %4169 = vmatpush1.bf16.msra.mxu0 %v4149
        %4170 = vmatprep.subr.bf16.mxu0 0
        %4171 = vmatpush1.bf16.msra.mxu0 %v4150
        %4172 = vmatprep.subr.bf16.mxu0 0
        %4173 = vmatpush1.bf16.msra.mxu0 %v4151
        %4174 = vmatprep.subr.bf16.mxu0 0
        %4175 = vmatpush1.bf16.msra.mxu0 %v4152
        %4176 = vmatprep.subr.bf16.mxu0 0
        %4177 = vmatpush1.bf16.msra.mxu0 %v4153
        %4178 = vmatprep.subr.bf16.mxu0 0
        %4179 = vmatpush1.bf16.msra.mxu0 0
        %4180 = vmatprep.subr.bf16.mxu0 0
        %4181 = vmatpush1.bf16.msra.mxu0 0
        %4182 = vmatprep.subr.bf16.mxu0 0
        %4183 = vmatpush1.bf16.msra.mxu0 0
        %4184 = vmatprep.subr.bf16.mxu0 0
        %4185 = vmatpush1.bf16.msra.mxu0 0
        %4186 = vmatprep.subr.bf16.mxu0 0
        %4187 = vmatpush1.bf16.msra.mxu0 0
        %4188 = vmatprep.subr.bf16.mxu0 0
        %4189 = vmatpush1.bf16.msra.mxu0 0
        %4190 = vmatprep.subr.bf16.mxu0 0
        %4191 = vmatpush1.bf16.msra.mxu0 0
        %4192 = vmatprep.subr.bf16.mxu0 0
        %4193 = vmatpush1.bf16.msra.mxu0 0
        %4194 = vmatprep.mubr.bf16.mxu0 0
        %4195 = vmatmul.mubr.bf16.gmra.mrb[0].mxu0 %v4094
        %v4196 = vpop.f32.mrb[0].mxu0
        %v4197 = vadd.f32 0.0, %v4196
        %v4198 = vpop.f32.mrb[0].mxu0
        %v4199 = vpop.f32.mrb[0].mxu0
        %v4200 = vadd.f32 0.0, %v4199
        %v4201 = vpop.f32.mrb[0].mxu0
        %4202 = vmatprep.mubr.bf16.mxu0 0
        %4203 = vmatmul.mubr.bf16.gmra.mrb[0].mxu0 %v4095
        %v4204 = vpop.f32.mrb[0].mxu0
        %v4205 = vadd.f32 0.0, %v4204
        %v4206 = vpop.f32.mrb[0].mxu0
        %v4207 = vpop.f32.mrb[0].mxu0
        %v4208 = vadd.f32 0.0, %v4207
        %v4209 = vpop.f32.mrb[0].mxu0
        %4210 = vmatprep.mubr.bf16.mxu0 0
        %4211 = vmatmul.mubr.bf16.gmra.mrb[0].mxu0 %v4096
        %v4212 = vpop.f32.mrb[0].mxu0
        %v4213 = vadd.f32 0.0, %v4212
        %v4214 = vpop.f32.mrb[0].mxu0
        %v4215 = vpop.f32.mrb[0].mxu0
        %v4216 = vadd.f32 0.0, %v4215
        %v4217 = vpop.f32.mrb[0].mxu0
        %4218 = vmatprep.mubr.bf16.mxu0 0
        %4219 = vmatmul.mubr.bf16.gmra.mrb[0].mxu0 %v4097
        %v4220 = vpop.f32.mrb[0].mxu0
        %v4221 = vadd.f32 0.0, %v4220
        %v4222 = vpop.f32.mrb[0].mxu0
        %v4223 = vpop.f32.mrb[0].mxu0
        %v4224 = vadd.f32 0.0, %v4223
        %v4225 = vpop.f32.mrb[0].mxu0
        %4226 = vdwg.mxu0
        %v4227 = vpack.c.bf16 %v4200, %v4197
        %v4228 = vpack.c.bf16 %v4208, %v4205
        %v4229 = vpack.c.bf16 %v4216, %v4213
        %v4230 = vpack.c.bf16 %v4224, %v4221
        %v4231 = vld [vmem:[%s9] sm:$0x1]
        %v4233 = vlaneseq
        %v4234 = vshrl.u32 %v4233, 7
        %v4235 = vsub.s32 0, %v4234
        %v4236 = vrot.slane %v4231, %v4235
        %4238 = vmatprep.subr.bf16.mxu0 0
        %4239 = vmatpush1.bf16.msra.mxu0 %v4227
        %4240 = vmatprep.subr.bf16.mxu0 0
        %4241 = vmatpush1.bf16.msra.mxu0 %v4228
        %4242 = vmatprep.subr.bf16.mxu0 0
        %4243 = vmatpush1.bf16.msra.mxu0 %v4229
        %4244 = vmatprep.subr.bf16.mxu0 0
        %4245 = vmatpush1.bf16.msra.mxu0 %v4230
        %4246 = vmatprep.subr.bf16.mxu0 0
        %4247 = vmatpush1.bf16.msra.mxu0 0
        %4248 = vmatprep.subr.bf16.mxu0 0
        %4249 = vmatpush1.bf16.msra.mxu0 0
        %4250 = vmatprep.subr.bf16.mxu0 0
        %4251 = vmatpush1.bf16.msra.mxu0 0
        %4252 = vmatprep.subr.bf16.mxu0 0
        %4253 = vmatpush1.bf16.msra.mxu0 0
        %4254 = vmatprep.subr.bf16.mxu0 0
        %4255 = vmatpush1.bf16.msra.mxu0 0
        %4256 = vmatprep.subr.bf16.mxu0 0
        %4257 = vmatpush1.bf16.msra.mxu0 0
        %4258 = vmatprep.subr.bf16.mxu0 0
        %4259 = vmatpush1.bf16.msra.mxu0 0
        %4260 = vmatprep.subr.bf16.mxu0 0
        %4261 = vmatpush1.bf16.msra.mxu0 0
        %4262 = vmatprep.subr.bf16.mxu0 0
        %4263 = vmatpush1.bf16.msra.mxu0 0
        %4264 = vmatprep.subr.bf16.mxu0 0
        %4265 = vmatpush1.bf16.msra.mxu0 0
        %4266 = vmatprep.subr.bf16.mxu0 0
        %4267 = vmatpush1.bf16.msra.mxu0 0
        %4268 = vmatprep.subr.bf16.mxu0 0
        %4269 = vmatpush1.bf16.msra.mxu0 0
        %4270 = vmatprep.mubr.bf16.mxu0 0
        %4271 = vmatmul.mubr.bf16.gmra.mrb[0].mxu0 %v2965
        %v4272 = vpop.f32.mrb[0].mxu0
        %v4273 = vadd.f32 %v4236, %v4272
        %v4274 = vpop.f32.mrb[0].mxu0
        %v4275 = vpop.f32.mrb[0].mxu0
        %v4276 = vadd.f32 %v4236, %v4275
        %v4277 = vpop.f32.mrb[0].mxu0
        %4278 = vmatprep.mubr.bf16.mxu0 0
        %4279 = vmatmul.mubr.bf16.gmra.mrb[0].mxu0 %v2968
        %v4280 = vpop.f32.mrb[0].mxu0
        %v4281 = vadd.f32 %v4236, %v4280
        %v4282 = vpop.f32.mrb[0].mxu0
        %v4283 = vpop.f32.mrb[0].mxu0
        %v4284 = vadd.f32 %v4236, %v4283
        %v4285 = vpop.f32.mrb[0].mxu0
        %4286 = vmatprep.mubr.bf16.mxu0 0
        %4287 = vmatmul.mubr.bf16.gmra.mrb[0].mxu0 %v2971
        %v4288 = vpop.f32.mrb[0].mxu0
        %v4289 = vadd.f32 %v4236, %v4288
        %v4290 = vpop.f32.mrb[0].mxu0
        %v4291 = vpop.f32.mrb[0].mxu0
        %v4292 = vadd.f32 %v4236, %v4291
        %v4293 = vpop.f32.mrb[0].mxu0
        %4294 = vmatprep.mubr.bf16.mxu0 0
        %4295 = vmatmul.mubr.bf16.gmra.mrb[0].mxu0 %v2974
        %v4296 = vpop.f32.mrb[0].mxu0
        %v4297 = vadd.f32 %v4236, %v4296
        %v4298 = vpop.f32.mrb[0].mxu0
        %v4299 = vpop.f32.mrb[0].mxu0
        %v4300 = vadd.f32 %v4236, %v4299
        %v4301 = vpop.f32.mrb[0].mxu0
        %4302 = vdwg.mxu0
        %v4303 = vmax.f32 %v4273, 0.0
        %v4304 = vmax.f32 %v4276, 0.0
        %v4305 = vmax.f32 %v4281, 0.0
        %v4306 = vmax.f32 %v4284, 0.0
        %v4307 = vmax.f32 %v4289, 0.0
        %v4308 = vmax.f32 %v4292, 0.0
        %v4309 = vmax.f32 %v4297, 0.0
        %v4310 = vmax.f32 %v4300, 0.0
        %v4311 = vpack.c.bf16 %v4304, %v4303
        %v4312 = vpack.c.bf16 %v4306, %v4305
        %v4313 = vpack.c.bf16 %v4308, %v4307
        %v4314 = vpack.c.bf16 %v4310, %v4309
        %v4315 = vld [vmem:[#allocation13] sm:$0xf]
        %v4316 = vld [vmem:[#allocation13 + $0x4] sm:$0xf]
        %v4317 = vld [vmem:[#allocation13 + $0x8] sm:$0xf]
        %v4318 = vld [vmem:[#allocation13 + $0xc] sm:$0xf]
        %v4319 = vld [vmem:[#allocation13 + $0x10] sm:$0xf]
        %v4320 = vld [vmem:[#allocation13 + $0x14] sm:$0xf]
        %v4321 = vld [vmem:[#allocation13 + $0x18] sm:$0xf]
        %v4322 = vld [vmem:[#allocation13 + $0x1c] sm:$0xf]
        %v4323 = vld [vmem:[#allocation13 + $0x20] sm:$0xf]
        %v4324 = vld [vmem:[#allocation13 + $0x24] sm:$0xf]
        %v4325 = vld [vmem:[#allocation13 + $0x28] sm:$0xf]
        %v4326 = vld [vmem:[#allocation13 + $0x2c] sm:$0xf]
        %v4327 = vld [vmem:[#allocation13 + $0x30] sm:$0xf]
        %v4328 = vld [vmem:[#allocation13 + $0x34] sm:$0xf]
        %v4329 = vld [vmem:[#allocation13 + $0x38] sm:$0xf]
        %v4330 = vld [vmem:[#allocation13 + $0x3c] sm:$0xf]
        %v4347 = vunpack.c.l.b16 %v4315
        %v4348 = vunpack.c.l.b16 %v4316
        %v4349 = vunpack.c.l.b16 %v4317
        %v4350 = vunpack.c.l.b16 %v4318
        %v4351 = vunpack.c.l.b16 %v4319
        %v4352 = vunpack.c.l.b16 %v4320
        %v4353 = vunpack.c.l.b16 %v4321
        %v4354 = vunpack.c.l.b16 %v4322
        %v4355 = vunpack.c.l.b16 %v4323
        %v4356 = vunpack.c.l.b16 %v4324
        %v4357 = vunpack.c.l.b16 %v4325
        %v4358 = vunpack.c.l.b16 %v4326
        %v4359 = vunpack.c.l.b16 %v4327
        %v4360 = vunpack.c.l.b16 %v4328
        %v4361 = vunpack.c.l.b16 %v4329
        %v4362 = vunpack.c.l.b16 %v4330
        %v4363 = vpack.c.b16 %v4348, %v4347
        %v4364 = vpack.c.b16 %v4350, %v4349
        %v4365 = vpack.c.b16 %v4352, %v4351
        %v4366 = vpack.c.b16 %v4354, %v4353
        %v4367 = vpack.c.b16 %v4356, %v4355
        %v4368 = vpack.c.b16 %v4358, %v4357
        %v4369 = vpack.c.b16 %v4360, %v4359
        %v4370 = vpack.c.b16 %v4362, %v4361
        %4379 = vmatprep.subr.bf16.mxu0 0
        %4380 = vmatpush1.bf16.msra.mxu0 %v4363
        %4381 = vmatprep.subr.bf16.mxu0 0
        %4382 = vmatpush1.bf16.msra.mxu0 %v4364
        %4383 = vmatprep.subr.bf16.mxu0 0
        %4384 = vmatpush1.bf16.msra.mxu0 %v4365
        %4385 = vmatprep.subr.bf16.mxu0 0
        %4386 = vmatpush1.bf16.msra.mxu0 %v4366
        %4387 = vmatprep.subr.bf16.mxu0 0
        %4388 = vmatpush1.bf16.msra.mxu0 %v4367
        %4389 = vmatprep.subr.bf16.mxu0 0
        %4390 = vmatpush1.bf16.msra.mxu0 %v4368
        %4391 = vmatprep.subr.bf16.mxu0 0
        %4392 = vmatpush1.bf16.msra.mxu0 %v4369
        %4393 = vmatprep.subr.bf16.mxu0 0
        %4394 = vmatpush1.bf16.msra.mxu0 %v4370
        %4395 = vmatprep.subr.bf16.mxu0 0
        %4396 = vmatpush1.bf16.msra.mxu0 0
        %4397 = vmatprep.subr.bf16.mxu0 0
        %4398 = vmatpush1.bf16.msra.mxu0 0
        %4399 = vmatprep.subr.bf16.mxu0 0
        %4400 = vmatpush1.bf16.msra.mxu0 0
        %4401 = vmatprep.subr.bf16.mxu0 0
        %4402 = vmatpush1.bf16.msra.mxu0 0
        %4403 = vmatprep.subr.bf16.mxu0 0
        %4404 = vmatpush1.bf16.msra.mxu0 0
        %4405 = vmatprep.subr.bf16.mxu0 0
        %4406 = vmatpush1.bf16.msra.mxu0 0
        %4407 = vmatprep.subr.bf16.mxu0 0
        %4408 = vmatpush1.bf16.msra.mxu0 0
        %4409 = vmatprep.subr.bf16.mxu0 0
        %4410 = vmatpush1.bf16.msra.mxu0 0
        %4411 = vmatprep.mubr.bf16.mxu0 0
        %4412 = vmatmul.mubr.bf16.gmra.mrb[0].mxu0 %v4311
        %v4413 = vpop.f32.mrb[0].mxu0
        %v4414 = vadd.f32 0.0, %v4413
        %v4415 = vpop.f32.mrb[0].mxu0
        %v4416 = vpop.f32.mrb[0].mxu0
        %v4417 = vadd.f32 0.0, %v4416
        %v4418 = vpop.f32.mrb[0].mxu0
        %4419 = vmatprep.mubr.bf16.mxu0 0
        %4420 = vmatmul.mubr.bf16.gmra.mrb[0].mxu0 %v4312
        %v4421 = vpop.f32.mrb[0].mxu0
        %v4422 = vadd.f32 0.0, %v4421
        %v4423 = vpop.f32.mrb[0].mxu0
        %v4424 = vpop.f32.mrb[0].mxu0
        %v4425 = vadd.f32 0.0, %v4424
        %v4426 = vpop.f32.mrb[0].mxu0
        %4427 = vmatprep.mubr.bf16.mxu0 0
        %4428 = vmatmul.mubr.bf16.gmra.mrb[0].mxu0 %v4313
        %v4429 = vpop.f32.mrb[0].mxu0
        %v4430 = vadd.f32 0.0, %v4429
        %v4431 = vpop.f32.mrb[0].mxu0
        %v4432 = vpop.f32.mrb[0].mxu0
        %v4433 = vadd.f32 0.0, %v4432
        %v4434 = vpop.f32.mrb[0].mxu0
        %4435 = vmatprep.mubr.bf16.mxu0 0
        %4436 = vmatmul.mubr.bf16.gmra.mrb[0].mxu0 %v4314
        %v4437 = vpop.f32.mrb[0].mxu0
        %v4438 = vadd.f32 0.0, %v4437
        %v4439 = vpop.f32.mrb[0].mxu0
        %v4440 = vpop.f32.mrb[0].mxu0
        %v4441 = vadd.f32 0.0, %v4440
        %v4442 = vpop.f32.mrb[0].mxu0
        %4443 = vdwg.mxu0
        %v4444 = vpack.c.bf16 %v4417, %v4414
        %v4445 = vpack.c.bf16 %v4425, %v4422
        %v4446 = vpack.c.bf16 %v4433, %v4430
        %v4447 = vpack.c.bf16 %v4441, %v4438
        %v4448 = vld [vmem:[%s11] sm:$0x1]
        %v4450 = vlaneseq
        %v4451 = vshrl.u32 %v4450, 7
        %v4452 = vsub.s32 0, %v4451
        %v4453 = vrot.slane %v4448, %v4452
        %4455 = vmatprep.subr.bf16.mxu0 0
        %4456 = vmatpush1.bf16.msra.mxu0 %v4444
        %4457 = vmatprep.subr.bf16.mxu0 0
        %4458 = vmatpush1.bf16.msra.mxu0 %v4445
        %4459 = vmatprep.subr.bf16.mxu0 0
        %4460 = vmatpush1.bf16.msra.mxu0 %v4446
        %4461 = vmatprep.subr.bf16.mxu0 0
        %4462 = vmatpush1.bf16.msra.mxu0 %v4447
        %4463 = vmatprep.subr.bf16.mxu0 0
        %4464 = vmatpush1.bf16.msra.mxu0 0
        %4465 = vmatprep.subr.bf16.mxu0 0
        %4466 = vmatpush1.bf16.msra.mxu0 0
        %4467 = vmatprep.subr.bf16.mxu0 0
        %4468 = vmatpush1.bf16.msra.mxu0 0
        %4469 = vmatprep.subr.bf16.mxu0 0
        %4470 = vmatpush1.bf16.msra.mxu0 0
        %4471 = vmatprep.subr.bf16.mxu0 0
        %4472 = vmatpush1.bf16.msra.mxu0 0
        %4473 = vmatprep.subr.bf16.mxu0 0
        %4474 = vmatpush1.bf16.msra.mxu0 0
        %4475 = vmatprep.subr.bf16.mxu0 0
        %4476 = vmatpush1.bf16.msra.mxu0 0
        %4477 = vmatprep.subr.bf16.mxu0 0
        %4478 = vmatpush1.bf16.msra.mxu0 0
        %4479 = vmatprep.subr.bf16.mxu0 0
        %4480 = vmatpush1.bf16.msra.mxu0 0
        %4481 = vmatprep.subr.bf16.mxu0 0
        %4482 = vmatpush1.bf16.msra.mxu0 0
        %4483 = vmatprep.subr.bf16.mxu0 0
        %4484 = vmatpush1.bf16.msra.mxu0 0
        %4485 = vmatprep.subr.bf16.mxu0 0
        %4486 = vmatpush1.bf16.msra.mxu0 0
        %4487 = vmatprep.mubr.bf16.mxu0 0
        %4488 = vmatmul.mubr.bf16.gmra.mrb[0].mxu0 %v2965
        %v4489 = vpop.f32.mrb[0].mxu0
        %v4490 = vadd.f32 %v4453, %v4489
        %v4491 = vpop.f32.mrb[0].mxu0
        %v4492 = vpop.f32.mrb[0].mxu0
        %v4493 = vadd.f32 %v4453, %v4492
        %v4494 = vpop.f32.mrb[0].mxu0
        %4495 = vmatprep.mubr.bf16.mxu0 0
        %4496 = vmatmul.mubr.bf16.gmra.mrb[0].mxu0 %v2968
        %v4497 = vpop.f32.mrb[0].mxu0
        %v4498 = vadd.f32 %v4453, %v4497
        %v4499 = vpop.f32.mrb[0].mxu0
        %v4500 = vpop.f32.mrb[0].mxu0
        %v4501 = vadd.f32 %v4453, %v4500
        %v4502 = vpop.f32.mrb[0].mxu0
        %4503 = vmatprep.mubr.bf16.mxu0 0
        %4504 = vmatmul.mubr.bf16.gmra.mrb[0].mxu0 %v2971
        %v4505 = vpop.f32.mrb[0].mxu0
        %v4506 = vadd.f32 %v4453, %v4505
        %v4507 = vpop.f32.mrb[0].mxu0
        %v4508 = vpop.f32.mrb[0].mxu0
        %v4509 = vadd.f32 %v4453, %v4508
        %v4510 = vpop.f32.mrb[0].mxu0
        %4511 = vmatprep.mubr.bf16.mxu0 0
        %4512 = vmatmul.mubr.bf16.gmra.mrb[0].mxu0 %v2974
        %v4513 = vpop.f32.mrb[0].mxu0
        %v4514 = vadd.f32 %v4453, %v4513
        %v4515 = vpop.f32.mrb[0].mxu0
        %v4516 = vpop.f32.mrb[0].mxu0
        %v4517 = vadd.f32 %v4453, %v4516
        %v4518 = vpop.f32.mrb[0].mxu0
        %4519 = vdwg.mxu0
        %v4520 = vmax.f32 %v4490, 0.0
        %v4521 = vmax.f32 %v4493, 0.0
        %v4522 = vmax.f32 %v4498, 0.0
        %v4523 = vmax.f32 %v4501, 0.0
        %v4524 = vmax.f32 %v4506, 0.0
        %v4525 = vmax.f32 %v4509, 0.0
        %v4526 = vmax.f32 %v4514, 0.0
        %v4527 = vmax.f32 %v4517, 0.0
        %v4528 = vpack.c.bf16 %v4521, %v4520
        %v4529 = vpack.c.bf16 %v4523, %v4522
        %v4530 = vpack.c.bf16 %v4525, %v4524
        %v4531 = vpack.c.bf16 %v4527, %v4526
        %v4532 = vld [vmem:[#allocation14] sm:$0xf]
        %v4533 = vld [vmem:[#allocation14 + $0x4] sm:$0xf]
        %v4534 = vld [vmem:[#allocation14 + $0x8] sm:$0xf]
        %v4535 = vld [vmem:[#allocation14 + $0xc] sm:$0xf]
        %v4536 = vld [vmem:[#allocation14 + $0x10] sm:$0xf]
        %v4537 = vld [vmem:[#allocation14 + $0x14] sm:$0xf]
        %v4538 = vld [vmem:[#allocation14 + $0x18] sm:$0xf]
        %v4539 = vld [vmem:[#allocation14 + $0x1c] sm:$0xf]
        %v4540 = vld [vmem:[#allocation14 + $0x20] sm:$0xf]
        %v4541 = vld [vmem:[#allocation14 + $0x24] sm:$0xf]
        %v4542 = vld [vmem:[#allocation14 + $0x28] sm:$0xf]
        %v4543 = vld [vmem:[#allocation14 + $0x2c] sm:$0xf]
        %v4544 = vld [vmem:[#allocation14 + $0x30] sm:$0xf]
        %v4545 = vld [vmem:[#allocation14 + $0x34] sm:$0xf]
        %v4546 = vld [vmem:[#allocation14 + $0x38] sm:$0xf]
        %v4547 = vld [vmem:[#allocation14 + $0x3c] sm:$0xf]
        %v4564 = vunpack.c.l.b16 %v4532
        %v4565 = vunpack.c.l.b16 %v4533
        %v4566 = vunpack.c.l.b16 %v4534
        %v4567 = vunpack.c.l.b16 %v4535
        %v4568 = vunpack.c.l.b16 %v4536
        %v4569 = vunpack.c.l.b16 %v4537
        %v4570 = vunpack.c.l.b16 %v4538
        %v4571 = vunpack.c.l.b16 %v4539
        %v4572 = vunpack.c.l.b16 %v4540
        %v4573 = vunpack.c.l.b16 %v4541
        %v4574 = vunpack.c.l.b16 %v4542
        %v4575 = vunpack.c.l.b16 %v4543
        %v4576 = vunpack.c.l.b16 %v4544
        %v4577 = vunpack.c.l.b16 %v4545
        %v4578 = vunpack.c.l.b16 %v4546
        %v4579 = vunpack.c.l.b16 %v4547
        %v4580 = vpack.c.b16 %v4565, %v4564
        %v4581 = vpack.c.b16 %v4567, %v4566
        %v4582 = vpack.c.b16 %v4569, %v4568
        %v4583 = vpack.c.b16 %v4571, %v4570
        %v4584 = vpack.c.b16 %v4573, %v4572
        %v4585 = vpack.c.b16 %v4575, %v4574
        %v4586 = vpack.c.b16 %v4577, %v4576
        %v4587 = vpack.c.b16 %v4579, %v4578
        %4596 = vmatprep.subr.bf16.mxu0 0
        %4597 = vmatpush1.bf16.msra.mxu0 %v4580
        %4598 = vmatprep.subr.bf16.mxu0 0
        %4599 = vmatpush1.bf16.msra.mxu0 %v4581
        %4600 = vmatprep.subr.bf16.mxu0 0
        %4601 = vmatpush1.bf16.msra.mxu0 %v4582
        %4602 = vmatprep.subr.bf16.mxu0 0
        %4603 = vmatpush1.bf16.msra.mxu0 %v4583
        %4604 = vmatprep.subr.bf16.mxu0 0
        %4605 = vmatpush1.bf16.msra.mxu0 %v4584
        %4606 = vmatprep.subr.bf16.mxu0 0
        %4607 = vmatpush1.bf16.msra.mxu0 %v4585
        %4608 = vmatprep.subr.bf16.mxu0 0
        %4609 = vmatpush1.bf16.msra.mxu0 %v4586
        %4610 = vmatprep.subr.bf16.mxu0 0
        %4611 = vmatpush1.bf16.msra.mxu0 %v4587
        %4612 = vmatprep.subr.bf16.mxu0 0
        %4613 = vmatpush1.bf16.msra.mxu0 0
        %4614 = vmatprep.subr.bf16.mxu0 0
        %4615 = vmatpush1.bf16.msra.mxu0 0
        %4616 = vmatprep.subr.bf16.mxu0 0
        %4617 = vmatpush1.bf16.msra.mxu0 0
        %4618 = vmatprep.subr.bf16.mxu0 0
        %4619 = vmatpush1.bf16.msra.mxu0 0
        %4620 = vmatprep.subr.bf16.mxu0 0
        %4621 = vmatpush1.bf16.msra.mxu0 0
        %4622 = vmatprep.subr.bf16.mxu0 0
        %4623 = vmatpush1.bf16.msra.mxu0 0
        %4624 = vmatprep.subr.bf16.mxu0 0
        %4625 = vmatpush1.bf16.msra.mxu0 0
        %4626 = vmatprep.subr.bf16.mxu0 0
        %4627 = vmatpush1.bf16.msra.mxu0 0
        %4628 = vmatprep.mubr.bf16.mxu0 0
        %4629 = vmatmul.mubr.bf16.gmra.mrb[0].mxu0 %v4528
        %v4630 = vpop.f32.mrb[0].mxu0
        %v4631 = vadd.f32 0.0, %v4630
        %v4632 = vpop.f32.mrb[0].mxu0
        %v4633 = vpop.f32.mrb[0].mxu0
        %v4634 = vadd.f32 0.0, %v4633
        %v4635 = vpop.f32.mrb[0].mxu0
        %4636 = vmatprep.mubr.bf16.mxu0 0
        %4637 = vmatmul.mubr.bf16.gmra.mrb[0].mxu0 %v4529
        %v4638 = vpop.f32.mrb[0].mxu0
        %v4639 = vadd.f32 0.0, %v4638
        %v4640 = vpop.f32.mrb[0].mxu0
        %v4641 = vpop.f32.mrb[0].mxu0
        %v4642 = vadd.f32 0.0, %v4641
        %v4643 = vpop.f32.mrb[0].mxu0
        %4644 = vmatprep.mubr.bf16.mxu0 0
        %4645 = vmatmul.mubr.bf16.gmra.mrb[0].mxu0 %v4530
        %v4646 = vpop.f32.mrb[0].mxu0
        %v4647 = vadd.f32 0.0, %v4646
        %v4648 = vpop.f32.mrb[0].mxu0
        %v4649 = vpop.f32.mrb[0].mxu0
        %v4650 = vadd.f32 0.0, %v4649
        %v4651 = vpop.f32.mrb[0].mxu0
        %4652 = vmatprep.mubr.bf16.mxu0 0
        %4653 = vmatmul.mubr.bf16.gmra.mrb[0].mxu0 %v4531
        %v4654 = vpop.f32.mrb[0].mxu0
        %v4655 = vadd.f32 0.0, %v4654
        %v4656 = vpop.f32.mrb[0].mxu0
        %v4657 = vpop.f32.mrb[0].mxu0
        %v4658 = vadd.f32 0.0, %v4657
        %v4659 = vpop.f32.mrb[0].mxu0
        %4660 = vdwg.mxu0
        %v4661 = vpack.c.bf16 %v4634, %v4631
        %v4662 = vpack.c.bf16 %v4642, %v4639
        %v4663 = vpack.c.bf16 %v4650, %v4647
        %v4664 = vpack.c.bf16 %v4658, %v4655
        %v4665 = vld [vmem:[%s13] sm:$0x1]
        %v4667 = vlaneseq
        %v4668 = vshrl.u32 %v4667, 7
        %v4669 = vsub.s32 0, %v4668
        %v4670 = vrot.slane %v4665, %v4669
        %4672 = vmatprep.subr.bf16.mxu0 0
        %4673 = vmatpush1.bf16.msra.mxu0 %v4661
        %4674 = vmatprep.subr.bf16.mxu0 0
        %4675 = vmatpush1.bf16.msra.mxu0 %v4662
        %4676 = vmatprep.subr.bf16.mxu0 0
        %4677 = vmatpush1.bf16.msra.mxu0 %v4663
        %4678 = vmatprep.subr.bf16.mxu0 0
        %4679 = vmatpush1.bf16.msra.mxu0 %v4664
        %4680 = vmatprep.subr.bf16.mxu0 0
        %4681 = vmatpush1.bf16.msra.mxu0 0
        %4682 = vmatprep.subr.bf16.mxu0 0
        %4683 = vmatpush1.bf16.msra.mxu0 0
        %4684 = vmatprep.subr.bf16.mxu0 0
        %4685 = vmatpush1.bf16.msra.mxu0 0
        %4686 = vmatprep.subr.bf16.mxu0 0
        %4687 = vmatpush1.bf16.msra.mxu0 0
        %4688 = vmatprep.subr.bf16.mxu0 0
        %4689 = vmatpush1.bf16.msra.mxu0 0
        %4690 = vmatprep.subr.bf16.mxu0 0
        %4691 = vmatpush1.bf16.msra.mxu0 0
        %4692 = vmatprep.subr.bf16.mxu0 0
        %4693 = vmatpush1.bf16.msra.mxu0 0
        %4694 = vmatprep.subr.bf16.mxu0 0
        %4695 = vmatpush1.bf16.msra.mxu0 0
        %4696 = vmatprep.subr.bf16.mxu0 0
        %4697 = vmatpush1.bf16.msra.mxu0 0
        %4698 = vmatprep.subr.bf16.mxu0 0
        %4699 = vmatpush1.bf16.msra.mxu0 0
        %4700 = vmatprep.subr.bf16.mxu0 0
        %4701 = vmatpush1.bf16.msra.mxu0 0
        %4702 = vmatprep.subr.bf16.mxu0 0
        %4703 = vmatpush1.bf16.msra.mxu0 0
        %4704 = vmatprep.mubr.bf16.mxu0 0
        %4705 = vmatmul.mubr.bf16.gmra.mrb[0].mxu0 %v2965
        %v4706 = vpop.f32.mrb[0].mxu0
        %v4707 = vadd.f32 %v4670, %v4706
        %v4708 = vpop.f32.mrb[0].mxu0
        %v4709 = vpop.f32.mrb[0].mxu0
        %v4710 = vadd.f32 %v4670, %v4709
        %v4711 = vpop.f32.mrb[0].mxu0
        %4712 = vmatprep.mubr.bf16.mxu0 0
        %4713 = vmatmul.mubr.bf16.gmra.mrb[0].mxu0 %v2968
        %v4714 = vpop.f32.mrb[0].mxu0
        %v4715 = vadd.f32 %v4670, %v4714
        %v4716 = vpop.f32.mrb[0].mxu0
        %v4717 = vpop.f32.mrb[0].mxu0
        %v4718 = vadd.f32 %v4670, %v4717
        %v4719 = vpop.f32.mrb[0].mxu0
        %4720 = vmatprep.mubr.bf16.mxu0 0
        %4721 = vmatmul.mubr.bf16.gmra.mrb[0].mxu0 %v2971
        %v4722 = vpop.f32.mrb[0].mxu0
        %v4723 = vadd.f32 %v4670, %v4722
        %v4724 = vpop.f32.mrb[0].mxu0
        %v4725 = vpop.f32.mrb[0].mxu0
        %v4726 = vadd.f32 %v4670, %v4725
        %v4727 = vpop.f32.mrb[0].mxu0
        %4728 = vmatprep.mubr.bf16.mxu0 0
        %4729 = vmatmul.mubr.bf16.gmra.mrb[0].mxu0 %v2974
        %v4730 = vpop.f32.mrb[0].mxu0
        %v4731 = vadd.f32 %v4670, %v4730
        %v4732 = vpop.f32.mrb[0].mxu0
        %v4733 = vpop.f32.mrb[0].mxu0
        %v4734 = vadd.f32 %v4670, %v4733
        %v4735 = vpop.f32.mrb[0].mxu0
        %4736 = vdwg.mxu0
        %v4737 = vadd.f32 %v4707, %v4710
        %v4738 = vadd.f32 %v4737, %v4715
        %v4739 = vadd.f32 %v4738, %v4718
        %v4740 = vadd.f32 %v4739, %v4723
        %v4741 = vadd.f32 %v4740, %v4726
        %v4742 = vadd.f32 %v4741, %v4731
        %v4743 = vadd.f32 %v4742, %v4734
        %v4744 = vrot.slane %v4743, 4
        %v4745 = vadd.f32 %v4743, %v4744
        %v4746 = vrot.slane %v4745, 2
        %v4747 = vadd.f32 %v4745, %v4746
        %v4748 = vrot.slane %v4747, 1
        %v4749 = vadd.f32 %v4747, %v4748
        %v4750 = vpack.c.bf16 %v4749, %v4749
        %v4751 = vld [vmem:[#allocation16] sm:$0xf]
        %v4752 = vld [vmem:[#allocation16 + $0x4] sm:$0xf]
        %v4753 = vld [vmem:[#allocation16 + $0x8] sm:$0xf]
        %v4754 = vld [vmem:[#allocation16 + $0xc] sm:$0xf]
        %v4755 = vld [vmem:[#allocation16 + $0x10] sm:$0xf]
        %v4756 = vld [vmem:[#allocation16 + $0x14] sm:$0xf]
        %v4757 = vld [vmem:[#allocation16 + $0x18] sm:$0xf]
        %v4758 = vld [vmem:[#allocation16 + $0x1c] sm:$0xf]
        %v4759 = vld [vmem:[#allocation16 + $0x20] sm:$0xf]
        %v4760 = vld [vmem:[#allocation16 + $0x24] sm:$0xf]
        %v4761 = vld [vmem:[#allocation16 + $0x28] sm:$0xf]
        %v4762 = vld [vmem:[#allocation16 + $0x2c] sm:$0xf]
        %v4763 = vld [vmem:[#allocation16 + $0x30] sm:$0xf]
        %v4764 = vld [vmem:[#allocation16 + $0x34] sm:$0xf]
        %v4765 = vld [vmem:[#allocation16 + $0x38] sm:$0xf]
        %v4766 = vld [vmem:[#allocation16 + $0x3c] sm:$0xf]
        %v4767 = vld [vmem:[%s15] sm:$0x1]
        %v4784 = vunpack.c.l.b16 %v4751
        %v4785 = vunpack.c.l.b16 %v4752
        %v4786 = vunpack.c.l.b16 %v4753
        %v4787 = vunpack.c.l.b16 %v4754
        %v4788 = vunpack.c.l.b16 %v4755
        %v4789 = vunpack.c.l.b16 %v4756
        %v4790 = vunpack.c.l.b16 %v4757
        %v4791 = vunpack.c.l.b16 %v4758
        %v4792 = vunpack.c.l.b16 %v4759
        %v4793 = vunpack.c.l.b16 %v4760
        %v4794 = vunpack.c.l.b16 %v4761
        %v4795 = vunpack.c.l.b16 %v4762
        %v4796 = vunpack.c.l.b16 %v4763
        %v4797 = vunpack.c.l.b16 %v4764
        %v4798 = vunpack.c.l.b16 %v4765
        %v4799 = vunpack.c.l.b16 %v4766
        %v4800 = vpack.c.b16 %v4785, %v4784
        %v4801 = vpack.c.b16 %v4787, %v4786
        %v4802 = vpack.c.b16 %v4789, %v4788
        %v4803 = vpack.c.b16 %v4791, %v4790
        %v4804 = vpack.c.b16 %v4793, %v4792
        %v4805 = vpack.c.b16 %v4795, %v4794
        %v4806 = vpack.c.b16 %v4797, %v4796
        %v4807 = vpack.c.b16 %v4799, %v4798
        %4816 = vmatprep.subr.bf16.mxu0 0
        %4817 = vmatpush1.bf16.msra.mxu0 %v4800
        %4818 = vmatprep.subr.bf16.mxu0 0
        %4819 = vmatpush1.bf16.msra.mxu0 %v4801
        %4820 = vmatprep.subr.bf16.mxu0 0
        %4821 = vmatpush1.bf16.msra.mxu0 %v4802
        %4822 = vmatprep.subr.bf16.mxu0 0
        %4823 = vmatpush1.bf16.msra.mxu0 %v4803
        %4824 = vmatprep.subr.bf16.mxu0 0
        %4825 = vmatpush1.bf16.msra.mxu0 %v4804
        %4826 = vmatprep.subr.bf16.mxu0 0
        %4827 = vmatpush1.bf16.msra.mxu0 %v4805
        %4828 = vmatprep.subr.bf16.mxu0 0
        %4829 = vmatpush1.bf16.msra.mxu0 %v4806
        %4830 = vmatprep.subr.bf16.mxu0 0
        %4831 = vmatpush1.bf16.msra.mxu0 %v4807
        %4832 = vmatprep.subr.bf16.mxu0 0
        %4833 = vmatpush1.bf16.msra.mxu0 0
        %4834 = vmatprep.subr.bf16.mxu0 0
        %4835 = vmatpush1.bf16.msra.mxu0 0
        %4836 = vmatprep.subr.bf16.mxu0 0
        %4837 = vmatpush1.bf16.msra.mxu0 0
        %4838 = vmatprep.subr.bf16.mxu0 0
        %4839 = vmatpush1.bf16.msra.mxu0 0
        %4840 = vmatprep.subr.bf16.mxu0 0
        %4841 = vmatpush1.bf16.msra.mxu0 0
        %4842 = vmatprep.subr.bf16.mxu0 0
        %4843 = vmatpush1.bf16.msra.mxu0 0
        %4844 = vmatprep.subr.bf16.mxu0 0
        %4845 = vmatpush1.bf16.msra.mxu0 0
        %4846 = vmatprep.subr.bf16.mxu0 0
        %4847 = vmatpush1.bf16.msra.mxu0 0
        %4848 = vmatprep.mubr.bf16.mxu0 0
        %4849 = vmatmul.mubr.bf16.gmra.mrb[0].mxu0 %v4750
        %v4850 = vpop.f32.mrb[0].mxu0
        %v4851 = vadd.f32 %v4767, %v4850
        %v4852 = vpop.f32.mrb[0].mxu0
        %v4853 = vpop.f32.mrb[0].mxu0
        %v4854 = vpop.f32.mrb[0].mxu0
        %4855 = vdwg.mxu0
        %4856 = vst [vmem:[%s679] sm:$0x1] %v4851
        %s4857 = sand.u32 %s393, 1
        %s4858 = scalar_lea.sflag [#allocation4], %s4857
        %s4859 = sand.u32 %s393, 1
        %s4860 = scalar_lea.vmem [#allocation17], %s4859
        // Predicated region
        $region121: #{gcn_forward_fused.1} parent=83 // pred_check
          %p4861 = pneg %p403
        $region122: #{gcn_forward_fused.1} parent=83 // pred_check_branch
          %4863 = sbr.rel (%p4861) target = $region124
        $region123: #{gcn_forward_fused.1} parent=83 // pred_region
          %s4865 = ssub.s32 16, 16
          %4866 = vsyncadd %s4858, %s4865
          %s4867 = smul.addr %s39, 16
          %s4868 = scalar_lea.hbm %s16, %s4867
          %s4870 = sshll.u32 %s4860, 4
          %s4871 = int_to_ptr.vmem [resolvable:$true] %s4870
          %4873 = dma.vmem_to_hbm [thread:$0]  %s4871, 16, %s4868, %s4858
        $region124: #{gcn_forward_fused.1} parent=83 // pred_fallthru
          _
      $region84: #{gcn_forward_fused.1} parent=5 // pred_fallthru
        _
      %p4874 = scmp.le.s32.totalorder 2, %s34
      // Predicated region
      $region125: #{gcn_forward_fused.1} parent=5 // pred_check
        %p4875 = pneg %p4874
      $region126: #{gcn_forward_fused.1} parent=5 // pred_check_branch
        %4877 = sbr.rel (%p4875) target = $region128
      $region127: #{gcn_forward_fused.1} parent=5 // pred_region
        %s4878 = ssub.s32 %s34, 2
        // Predicated region
        $region129: #{gcn_forward_fused.1} parent=127 // pred_check
          %p4879 = pneg %p409
        $region130: #{gcn_forward_fused.1} parent=127 // pred_check_branch
          %4881 = sbr.rel (%p4879) target = $region132
        $region131: #{gcn_forward_fused.1} parent=127 // pred_region
          %s4882 = sand.u32 %s394, 1
          %s4883 = scalar_lea.sflag [#allocation4], %s4882
          %s4884 = sand.u32 %s394, 1
          %s4885 = scalar_lea.vmem [#allocation17], %s4884
          %4886 = dma.done %s4883, 16
        $region132: #{gcn_forward_fused.1} parent=127 // pred_fallthru
          _
      $region128: #{gcn_forward_fused.1} parent=5 // pred_fallthru
        _
    $region6: #{gcn_forward_fused.1} parent=1 // loop_footer
      %s38 = sadd.s32 1, %s34
    $region7: #{gcn_forward_fused.1} parent=1 // loop_footer_branch
      %33 = sbr.rel target = $region3
    $region8: #{gcn_forward_fused.1} parent=1 // loop_exit
      _
    %4887 = vsyncpa [#allocation3], 1
    %s4888 = scalar_lea.sflag [#allocation3], 1
    %4889 = vsyncpa %s4888, 1
    %4890 = vsyncpa [#allocation6], 1
    %s4891 = scalar_lea.sflag [#allocation6], 1
    %4892 = vsyncpa %s4891, 1
    %4893 = vsyncpa [#allocation9], 1
    %4894 = vsyncpa [#allocation12], 1
    %4895 = vsyncpa [#allocation15], 1
    %4896 = vsyncpa [#allocation4], 1
    %s4897 = scalar_lea.sflag [#allocation4], 1
    %4898 = vsyncpa %s4897, 1

</llo_original>
